<compile_context>
chip_gen: v7x
topology: tpu7x:2x2x1
jax: 0.10.0
libtpu: 0.0.40
codegen_flags: <defaults>
</compile_context>

<pallas_src>
import functools
import jax
import jax.numpy as jnp
from jax.experimental import pallas as pl
from jax.experimental.pallas import tpu as pltpu

# --------------------------- model config (BERT-tiny style) ---------------------------
VOCAB = 100          # synthetic vocab
TYPE_VOCAB = 2
MAX_POS = 16
HIDDEN = 128         # hidden size (lane-dense)
N_HEADS = 2
HEAD_DIM = HIDDEN // N_HEADS          # 64
INTERMEDIATE = 512   # FFN inner dim (lane-dense)
N_LAYERS = 2
N_LABELS = 3         # args.lebel_dim
LN_EPS = 1e-12


# ------------------------------ in-kernel helpers --------------------------------

def _mm(x, w):
    """MXU matmul: bf16 operands, f32 accumulation."""
    return jnp.dot(x.astype(jnp.bfloat16), w.astype(jnp.bfloat16),
                   preferred_element_type=jnp.float32)


def _mm_nt(a, b):
    """a @ b.T on the MXU without materializing the transpose."""
    return jax.lax.dot_general(
        a.astype(jnp.bfloat16), b.astype(jnp.bfloat16),
        (((1,), (1,)), ((), ())), preferred_element_type=jnp.float32)


def _layernorm(x, g, b):
    mean = jnp.mean(x, axis=-1, keepdims=True)
    var = jnp.mean((x - mean) * (x - mean), axis=-1, keepdims=True)
    return (x - mean) * jax.lax.rsqrt(var + jnp.float32(LN_EPS)) * g + b


def _gelu(x):
    # tanh-approx GELU (EUP-friendly on TPU)
    # TODO(synk): HF BERT defaults to exact erf GELU; tanh approximation used here.
    c = jnp.float32(0.7978845608028654)  # sqrt(2/pi)
    return 0.5 * x * (1.0 + jnp.tanh(c * (x + 0.044715 * x * x * x)))


# ------------------------------ fused forward kernel ------------------------------

def _bert_fused_kernel(h_ref, bias_ref, emb_g_ref, emb_b_ref,
                       wqkv_ref, bqkv_ref, wo_ref, bo_ref,
                       ln1_g_ref, ln1_b_ref, w1_ref, b1_ref,
                       w2_ref, b2_ref, ln2_g_ref, ln2_b_ref,
                       pool_w_ref, pool_b_ref, cls_w_ref, cls_b_ref,
                       o_ref, *, batch, seq):
    scale = jnp.float32(1.0 / (HEAD_DIM ** 0.5))

    # Embedding layernorm.
    x = _layernorm(h_ref[...].astype(jnp.float32), emb_g_ref[...], emb_b_ref[...])
    # Additive attention bias for the stacked-(batch,head) layout:
    # block-diagonal (-1e9 off-block) + HF key-padding mask (-10000) on-block.
    bias = bias_ref[...]                                   # [B*NH*S, B*NH*S]

    for l in range(N_LAYERS):                              # static unroll; weights stay in VMEM
        # Fused QKV projection: one MXU pass with N = 3*H.
        qkv = _mm(x, wqkv_ref[l]) + bqkv_ref[l]            # [B*S, 3H]

        # Stack every (batch, head) pair along rows -> [B*NH*S, HEAD_DIM].
        def stack(col0):
            return jnp.concatenate(
                [qkv[b * seq:(b + 1) * seq,
                     col0 + h * HEAD_DIM:col0 + (h + 1) * HEAD_DIM]
                 for b in range(batch) for h in range(N_HEADS)], axis=0)

        q_s = stack(0)
        k_s = stack(HIDDEN)
        v_s = stack(2 * HIDDEN)

        # Whole attention = 2 MXU matmuls; block-diagonal bias keeps heads independent.
        s = _mm_nt(q_s, k_s) * scale + bias                # [B*NH*S, B*NH*S]
        s = s - jnp.max(s, axis=-1, keepdims=True)
        p = jnp.exp(s)
        p = p * pl.reciprocal(jnp.sum(p, axis=-1, keepdims=True), approx=True)
        ctx = _mm(p, v_s)                                  # [B*NH*S, HEAD_DIM]

        # Merge heads back to [B*S, HIDDEN] with static slices (no scratch round trip).
        attn = jnp.concatenate(
            [jnp.concatenate(
                [ctx[(b * N_HEADS + h) * seq:(b * N_HEADS + h + 1) * seq, :]
                 for h in range(N_HEADS)], axis=1)
             for b in range(batch)], axis=0)               # [B*S, HIDDEN]

        # Output projection + residual + LN1.
        attn_out = _mm(attn, wo_ref[l]) + bo_ref[l]
        h1 = _layernorm(attn_out + x, ln1_g_ref[l], ln1_b_ref[l])

        # FFN + residual + LN2.
        ff = _gelu(_mm(h1, w1_ref[l]) + b1_ref[l])
        ff = _mm(ff, w2_ref[l]) + b2_ref[l]
        x = _layernorm(ff + h1, ln2_g_ref[l], ln2_b_ref[l])

    # Pooler (tanh on [CLS] token of each sequence) + classification head.
    cls_rows = jnp.concatenate([x[b * seq:b * seq + 1, :] for b in range(batch)], axis=0)
    pooled = jnp.tanh(_mm(cls_rows, pool_w_ref[...]) + pool_b_ref[...])
    o_ref[...] = (_mm(pooled, cls_w_ref[...]) + cls_b_ref[...]).astype(o_ref.dtype)


# ----------------------------------- wrapper ---------------------------------------

def _full_spec(shape):
    zeros = (0,) * len(shape)
    return pl.BlockSpec(shape, lambda *_: zeros)


def bert_asc_forward(params, input_ids, token_type_ids, attention_mask):
    """Returns classification logits [B, N_LABELS] (the module's forward output)."""
    B, S = input_ids.shape

    # Embeddings (gathers are glue JAX; everything else runs in one fused Pallas kernel).
    word = jnp.take(params["word_emb"], input_ids, axis=0)          # [B,S,H]
    pos = params["pos_emb"][:S][None, :, :]                         # [1,S,H]
    tok = jnp.take(params["type_emb"], token_type_ids, axis=0)      # [B,S,H]
    h0 = (word + pos + tok).reshape(B * S, HIDDEN)

    # Additive attention bias for the stacked-(batch,head) attention layout:
    #   on-block  : (1 - mask) * -10000 on the key index (HF BERT semantics)
    #   off-block : -1e9 (kills cross-batch / cross-head interaction exactly after softmax)
    key_pad = (1.0 - attention_mask.astype(jnp.float32)) * jnp.float32(-10000.0)   # [B,S]
    key_pad_stacked = jnp.broadcast_to(
        key_pad[:, None, :], (B, N_HEADS, S)).reshape(B * N_HEADS * S)
    block_id = jnp.arange(B * N_HEADS * S, dtype=jnp.int32) // S
    same_block = block_id[:, None] == block_id[None, :]
    attn_bias = jnp.where(same_block, key_pad_stacked[None, :], jnp.float32(-1e9))

    inputs = (
        h0, attn_bias,
        params["emb_ln_g"].reshape(1, HIDDEN), params["emb_ln_b"].reshape(1, HIDDEN),
        params["wqkv"], params["bqkv"], params["wo"], params["bo"],
        params["ln1_g"], params["ln1_b"], params["w1"], params["b1"],
        params["w2"], params["b2"], params["ln2_g"], params["ln2_b"],
        params["pool_w"], params["pool_b"].reshape(1, HIDDEN),
        params["cls_w"], params["cls_b"].reshape(1, N_LABELS),
    )

    kernel = functools.partial(_bert_fused_kernel, batch=B, seq=S)
    return pl.pallas_call(
        kernel,
        out_shape=jax.ShapeDtypeStruct((B, N_LABELS), jnp.float32),
        grid=(1,),
        in_specs=[_full_spec(a.shape) for a in inputs],
        out_specs=pl.BlockSpec((B, N_LABELS), lambda *_: (0, 0)),
        compiler_params=pltpu.CompilerParams(dimension_semantics=("arbitrary",)),
    )(*inputs)


# ------------------------------ parameter init (synthetic) -----------------------

def init_params(key):
    ks = iter(jax.random.split(key, 16))

    def nrm(shape, scale=0.02):
        return scale * jax.random.normal(next(ks), shape, dtype=jnp.float32)

    return {
        "word_emb": nrm((VOCAB, HIDDEN)),
        "pos_emb":  nrm((MAX_POS, HIDDEN)),
        "type_emb": nrm((TYPE_VOCAB, HIDDEN)),
        "emb_ln_g": jnp.ones((HIDDEN,), jnp.float32),
        "emb_ln_b": jnp.zeros((HIDDEN,), jnp.float32),
        # Per-layer weights stacked along a leading layer axis; QKV fused to [H, 3H].
        "wqkv": nrm((N_LAYERS, HIDDEN, 3 * HIDDEN)),
        "bqkv": jnp.zeros((N_LAYERS, 1, 3 * HIDDEN), jnp.float32),
        "wo":   nrm((N_LAYERS, HIDDEN, HIDDEN)),
        "bo":   jnp.zeros((N_LAYERS, 1, HIDDEN), jnp.float32),
        "ln1_g": jnp.ones((N_LAYERS, 1, HIDDEN), jnp.float32),
        "ln1_b": jnp.zeros((N_LAYERS, 1, HIDDEN), jnp.float32),
        "w1":   nrm((N_LAYERS, HIDDEN, INTERMEDIATE)),
        "b1":   jnp.zeros((N_LAYERS, 1, INTERMEDIATE), jnp.float32),
        "w2":   nrm((N_LAYERS, INTERMEDIATE, HIDDEN)),
        "b2":   jnp.zeros((N_LAYERS, 1, HIDDEN), jnp.float32),
        "ln2_g": jnp.ones((N_LAYERS, 1, HIDDEN), jnp.float32),
        "ln2_b": jnp.zeros((N_LAYERS, 1, HIDDEN), jnp.float32),
        "pool_w": nrm((HIDDEN, HIDDEN)),
        "pool_b": jnp.zeros((HIDDEN,), jnp.float32),
        "cls_w":  nrm((HIDDEN, N_LABELS)),
        "cls_b":  jnp.zeros((N_LABELS,), jnp.float32),
    }


# ------------------------------------- main ---------------------------------------

if __name__ == "__main__":
    key = jax.random.PRNGKey(0)
    k_param, k_ids = jax.random.split(key, 2)

    B, S = 2, 8
    params = init_params(k_param)
    input_ids = jax.random.randint(k_ids, (B, S), 0, VOCAB, dtype=jnp.int32)
    token_type_ids = jnp.zeros((B, S), jnp.int32)
    # Batch 1 has two padded positions at the end.
    attention_mask = jnp.array([[1, 1, 1, 1, 1, 1, 1, 1],
                                [1, 1, 1, 1, 1, 1, 0, 0]], dtype=jnp.int32)

    fwd = jax.jit(bert_asc_forward)
    logits = fwd(params, input_ids, token_type_ids, attention_mask)
    jax.block_until_ready(logits)
    assert logits.shape == (B, N_LABELS) and logits.dtype == jnp.float32
    print("KERNEL_OK")
</pallas_src>

<mosaic_0001>
module attributes {stable_mosaic.version = 11 : i64} {
  func.func @_bert_fused_kernel(%arg0: i32, %arg1: memref<16x128xf32, #tpu.memory_space<vmem>>, %arg2: memref<32x32xf32, #tpu.memory_space<vmem>>, %arg3: memref<1x128xf32, #tpu.memory_space<vmem>>, %arg4: memref<1x128xf32, #tpu.memory_space<vmem>>, %arg5: memref<2x128x384xf32, #tpu.memory_space<vmem>>, %arg6: memref<2x1x384xf32, #tpu.memory_space<vmem>>, %arg7: memref<2x128x128xf32, #tpu.memory_space<vmem>>, %arg8: memref<2x1x128xf32, #tpu.memory_space<vmem>>, %arg9: memref<2x1x128xf32, #tpu.memory_space<vmem>>, %arg10: memref<2x1x128xf32, #tpu.memory_space<vmem>>, %arg11: memref<2x128x512xf32, #tpu.memory_space<vmem>>, %arg12: memref<2x1x512xf32, #tpu.memory_space<vmem>>, %arg13: memref<2x512x128xf32, #tpu.memory_space<vmem>>, %arg14: memref<2x1x128xf32, #tpu.memory_space<vmem>>, %arg15: memref<2x1x128xf32, #tpu.memory_space<vmem>>, %arg16: memref<2x1x128xf32, #tpu.memory_space<vmem>>, %arg17: memref<128x128xf32, #tpu.memory_space<vmem>>, %arg18: memref<1x128xf32, #tpu.memory_space<vmem>>, %arg19: memref<128x3xf32, #tpu.memory_space<vmem>>, %arg20: memref<1x3xf32, #tpu.memory_space<vmem>>, %arg21: memref<2x3xf32, #tpu.memory_space<vmem>>) attributes {dimension_semantics = [#tpu.dimension_semantics<arbitrary>], iteration_bounds = array<i64: 1>, scalar_prefetch = 0 : i64, scratch_operands = 0 : i64, tpu.core_type = #tpu.core_type<tc>, window_params = [{pipeline_mode = #tpu.pipeline_mode<synchronous>, transform_indices = @transform_0, window_bounds = array<i64: 16, 128>}, {pipeline_mode = #tpu.pipeline_mode<synchronous>, transform_indices = @transform_1, window_bounds = array<i64: 32, 32>}, {pipeline_mode = #tpu.pipeline_mode<synchronous>, transform_indices = @transform_2, window_bounds = array<i64: 1, 128>}, {pipeline_mode = #tpu.pipeline_mode<synchronous>, transform_indices = @transform_3, window_bounds = array<i64: 1, 128>}, {pipeline_mode = #tpu.pipeline_mode<synchronous>, transform_indices = @transform_4, window_bounds = array<i64: 2, 128, 384>}, {pipeline_mode = #tpu.pipeline_mode<synchronous>, transform_indices = @transform_5, window_bounds = array<i64: 2, 1, 384>}, {pipeline_mode = #tpu.pipeline_mode<synchronous>, transform_indices = @transform_6, window_bounds = array<i64: 2, 128, 128>}, {pipeline_mode = #tpu.pipeline_mode<synchronous>, transform_indices = @transform_7, window_bounds = array<i64: 2, 1, 128>}, {pipeline_mode = #tpu.pipeline_mode<synchronous>, transform_indices = @transform_8, window_bounds = array<i64: 2, 1, 128>}, {pipeline_mode = #tpu.pipeline_mode<synchronous>, transform_indices = @transform_9, window_bounds = array<i64: 2, 1, 128>}, {pipeline_mode = #tpu.pipeline_mode<synchronous>, transform_indices = @transform_10, window_bounds = array<i64: 2, 128, 512>}, {pipeline_mode = #tpu.pipeline_mode<synchronous>, transform_indices = @transform_11, window_bounds = array<i64: 2, 1, 512>}, {pipeline_mode = #tpu.pipeline_mode<synchronous>, transform_indices = @transform_12, window_bounds = array<i64: 2, 512, 128>}, {pipeline_mode = #tpu.pipeline_mode<synchronous>, transform_indices = @transform_13, window_bounds = array<i64: 2, 1, 128>}, {pipeline_mode = #tpu.pipeline_mode<synchronous>, transform_indices = @transform_14, window_bounds = array<i64: 2, 1, 128>}, {pipeline_mode = #tpu.pipeline_mode<synchronous>, transform_indices = @transform_15, window_bounds = array<i64: 2, 1, 128>}, {pipeline_mode = #tpu.pipeline_mode<synchronous>, transform_indices = @transform_16, window_bounds = array<i64: 128, 128>}, {pipeline_mode = #tpu.pipeline_mode<synchronous>, transform_indices = @transform_17, window_bounds = array<i64: 1, 128>}, {pipeline_mode = #tpu.pipeline_mode<synchronous>, transform_indices = @transform_18, window_bounds = array<i64: 128, 3>}, {pipeline_mode = #tpu.pipeline_mode<synchronous>, transform_indices = @transform_19, window_bounds = array<i64: 1, 3>}, {pipeline_mode = #tpu.pipeline_mode<synchronous>, transform_indices = @transform_20, window_bounds = array<i64: 2, 3>}]} {
    %c0 = arith.constant 0 : index
    %c0_0 = arith.constant 0 : index
    %0 = vector.load %arg1[%c0, %c0_0] : memref<16x128xf32, #tpu.memory_space<vmem>>, vector<16x128xf32>
    %c0_1 = arith.constant 0 : index
    %c0_2 = arith.constant 0 : index
    %1 = vector.load %arg3[%c0_1, %c0_2] : memref<1x128xf32, #tpu.memory_space<vmem>>, vector<1x128xf32>
    %c0_3 = arith.constant 0 : index
    %c0_4 = arith.constant 0 : index
    %2 = vector.load %arg4[%c0_3, %c0_4] : memref<1x128xf32, #tpu.memory_space<vmem>>, vector<1x128xf32>
    %cst = arith.constant dense<0.000000e+00> : vector<16xf32>
    %3 = vector.multi_reduction <add>, %0, %cst [1] : vector<16x128xf32> to vector<16xf32>
    %4 = vector.shape_cast %3 : vector<16xf32> to vector<16x1xf32>
    %cst_5 = arith.constant 1.280000e+02 : f32
    %5 = vector.broadcast %cst_5 : f32 to vector<16x1xf32>
    %6 = arith.divf %4, %5 : vector<16x1xf32>
    %7 = vector.broadcast %6 : vector<16x1xf32> to vector<16x128xf32>
    %8 = arith.subf %0, %7 : vector<16x128xf32>
    %9 = vector.broadcast %6 : vector<16x1xf32> to vector<16x128xf32>
    %10 = arith.subf %0, %9 : vector<16x128xf32>
    %11 = arith.mulf %8, %10 : vector<16x128xf32>
    %cst_6 = arith.constant dense<0.000000e+00> : vector<16xf32>
    %12 = vector.multi_reduction <add>, %11, %cst_6 [1] : vector<16x128xf32> to vector<16xf32>
    %13 = vector.shape_cast %12 : vector<16xf32> to vector<16x1xf32>
    %cst_7 = arith.constant 1.280000e+02 : f32
    %14 = vector.broadcast %cst_7 : f32 to vector<16x1xf32>
    %15 = arith.divf %13, %14 : vector<16x1xf32>
    %16 = vector.broadcast %6 : vector<16x1xf32> to vector<16x128xf32>
    %17 = arith.subf %0, %16 : vector<16x128xf32>
    %cst_8 = arith.constant 9.99999996E-13 : f32
    %18 = vector.broadcast %cst_8 : f32 to vector<16x1xf32>
    %19 = arith.addf %15, %18 : vector<16x1xf32>
    %20 = math.rsqrt %19 : vector<16x1xf32>
    %21 = vector.broadcast %20 : vector<16x1xf32> to vector<16x128xf32>
    %22 = arith.mulf %17, %21 : vector<16x128xf32>
    %23 = vector.broadcast %1 : vector<1x128xf32> to vector<16x128xf32>
    %24 = arith.mulf %22, %23 : vector<16x128xf32>
    %25 = vector.broadcast %2 : vector<1x128xf32> to vector<16x128xf32>
    %26 = arith.addf %24, %25 : vector<16x128xf32>
    %c0_9 = arith.constant 0 : index
    %c0_10 = arith.constant 0 : index
    %27 = vector.load %arg2[%c0_9, %c0_10] : memref<32x32xf32, #tpu.memory_space<vmem>>, vector<32x32xf32>
    %c0_11 = arith.constant 0 : index
    %c0_12 = arith.constant 0 : index
    %c0_13 = arith.constant 0 : index
    %28 = vector.load %arg5[%c0_11, %c0_12, %c0_13] : memref<2x128x384xf32, #tpu.memory_space<vmem>>, vector<1x128x384xf32>
    %29 = vector.shape_cast %28 : vector<1x128x384xf32> to vector<128x384xf32>
    %30 = arith.truncf %26 : vector<16x128xf32> to vector<16x128xbf16>
    %31 = arith.truncf %29 : vector<128x384xf32> to vector<128x384xbf16>
    %cst_14 = arith.constant dense<0.000000e+00> : vector<16x384xf32>
    %32 = tpu.matmul %30, %31, %cst_14 {dimension_numbers = #tpu.dot_dimension_numbers<[1], [0], [0], [1], [0, 0, 1, 1], [], []>} : vector<16x128xbf16>, vector<128x384xbf16>, vector<16x384xf32> -> vector<16x384xf32>
    %c0_15 = arith.constant 0 : index
    %c0_16 = arith.constant 0 : index
    %c0_17 = arith.constant 0 : index
    %33 = vector.load %arg6[%c0_15, %c0_16, %c0_17] : memref<2x1x384xf32, #tpu.memory_space<vmem>>, vector<1x1x384xf32>
    %34 = vector.shape_cast %33 : vector<1x1x384xf32> to vector<1x384xf32>
    %35 = vector.broadcast %34 : vector<1x384xf32> to vector<16x384xf32>
    %36 = arith.addf %32, %35 : vector<16x384xf32>
    %37 = vector.extract_strided_slice %36 {offsets = [0, 0], sizes = [8, 64], strides = [1, 1]} : vector<16x384xf32> to vector<8x64xf32>
    %38 = vector.extract_strided_slice %36 {offsets = [0, 64], sizes = [8, 64], strides = [1, 1]} : vector<16x384xf32> to vector<8x64xf32>
    %39 = vector.extract_strided_slice %36 {offsets = [8, 0], sizes = [8, 64], strides = [1, 1]} : vector<16x384xf32> to vector<8x64xf32>
    %40 = vector.extract_strided_slice %36 {offsets = [8, 64], sizes = [8, 64], strides = [1, 1]} : vector<16x384xf32> to vector<8x64xf32>
    %41 = tpu.concatenate %37, %38, %39, %40 in 0 : vector<8x64xf32>, vector<8x64xf32>, vector<8x64xf32>, vector<8x64xf32> -> vector<32x64xf32>
    %42 = vector.extract_strided_slice %36 {offsets = [0, 128], sizes = [8, 64], strides = [1, 1]} : vector<16x384xf32> to vector<8x64xf32>
    %43 = vector.extract_strided_slice %36 {offsets = [0, 192], sizes = [8, 64], strides = [1, 1]} : vector<16x384xf32> to vector<8x64xf32>
    %44 = vector.extract_strided_slice %36 {offsets = [8, 128], sizes = [8, 64], strides = [1, 1]} : vector<16x384xf32> to vector<8x64xf32>
    %45 = vector.extract_strided_slice %36 {offsets = [8, 192], sizes = [8, 64], strides = [1, 1]} : vector<16x384xf32> to vector<8x64xf32>
    %46 = tpu.concatenate %42, %43, %44, %45 in 0 : vector<8x64xf32>, vector<8x64xf32>, vector<8x64xf32>, vector<8x64xf32> -> vector<32x64xf32>
    %47 = vector.extract_strided_slice %36 {offsets = [0, 256], sizes = [8, 64], strides = [1, 1]} : vector<16x384xf32> to vector<8x64xf32>
    %48 = vector.extract_strided_slice %36 {offsets = [0, 320], sizes = [8, 64], strides = [1, 1]} : vector<16x384xf32> to vector<8x64xf32>
    %49 = vector.extract_strided_slice %36 {offsets = [8, 256], sizes = [8, 64], strides = [1, 1]} : vector<16x384xf32> to vector<8x64xf32>
    %50 = vector.extract_strided_slice %36 {offsets = [8, 320], sizes = [8, 64], strides = [1, 1]} : vector<16x384xf32> to vector<8x64xf32>
    %51 = tpu.concatenate %47, %48, %49, %50 in 0 : vector<8x64xf32>, vector<8x64xf32>, vector<8x64xf32>, vector<8x64xf32> -> vector<32x64xf32>
    %52 = arith.truncf %41 : vector<32x64xf32> to vector<32x64xbf16>
    %53 = arith.truncf %46 : vector<32x64xf32> to vector<32x64xbf16>
    %cst_18 = arith.constant dense<0.000000e+00> : vector<32x32xf32>
    %54 = tpu.matmul %52, %53, %cst_18 {dimension_numbers = #tpu.dot_dimension_numbers<[1], [1], [0], [0], [0, 0, 1, 0], [], []>} : vector<32x64xbf16>, vector<32x64xbf16>, vector<32x32xf32> -> vector<32x32xf32>
    %cst_19 = arith.constant 1.250000e-01 : f32
    %55 = vector.broadcast %cst_19 : f32 to vector<32x32xf32>
    %56 = arith.mulf %54, %55 : vector<32x32xf32>
    %57 = arith.addf %56, %27 : vector<32x32xf32>
    %cst_20 = arith.constant dense<0xFF800000> : vector<32xf32>
    %58 = vector.multi_reduction <maximumf>, %57, %cst_20 [1] : vector<32x32xf32> to vector<32xf32>
    %59 = vector.shape_cast %58 : vector<32xf32> to vector<32x1xf32>
    %60 = vector.broadcast %59 : vector<32x1xf32> to vector<32x32xf32>
    %61 = arith.subf %57, %60 : vector<32x32xf32>
    %62 = math.exp %61 : vector<32x32xf32>
    %cst_21 = arith.constant dense<0.000000e+00> : vector<32xf32>
    %63 = vector.multi_reduction <add>, %62, %cst_21 [1] : vector<32x32xf32> to vector<32xf32>
    %64 = vector.shape_cast %63 : vector<32xf32> to vector<32x1xf32>
    %65 = tpu.reciprocal %64 {approx = true} : vector<32x1xf32> -> vector<32x1xf32>
    %66 = vector.broadcast %65 : vector<32x1xf32> to vector<32x32xf32>
    %67 = arith.mulf %62, %66 : vector<32x32xf32>
    %68 = arith.truncf %67 : vector<32x32xf32> to vector<32x32xbf16>
    %69 = arith.truncf %51 : vector<32x64xf32> to vector<32x64xbf16>
    %cst_22 = arith.constant dense<0.000000e+00> : vector<32x64xf32>
    %70 = tpu.matmul %68, %69, %cst_22 {dimension_numbers = #tpu.dot_dimension_numbers<[1], [0], [0], [1], [0, 0, 1, 1], [], []>} : vector<32x32xbf16>, vector<32x64xbf16>, vector<32x64xf32> -> vector<32x64xf32>
    %71 = vector.extract_strided_slice %70 {offsets = [0, 0], sizes = [8, 64], strides = [1, 1]} : vector<32x64xf32> to vector<8x64xf32>
    %72 = vector.extract_strided_slice %70 {offsets = [8, 0], sizes = [8, 64], strides = [1, 1]} : vector<32x64xf32> to vector<8x64xf32>
    %73 = tpu.concatenate %71, %72 in 1 : vector<8x64xf32>, vector<8x64xf32> -> vector<8x128xf32>
    %74 = vector.extract_strided_slice %70 {offsets = [16, 0], sizes = [8, 64], strides = [1, 1]} : vector<32x64xf32> to vector<8x64xf32>
    %75 = vector.extract_strided_slice %70 {offsets = [24, 0], sizes = [8, 64], strides = [1, 1]} : vector<32x64xf32> to vector<8x64xf32>
    %76 = tpu.concatenate %74, %75 in 1 : vector<8x64xf32>, vector<8x64xf32> -> vector<8x128xf32>
    %77 = tpu.concatenate %73, %76 in 0 : vector<8x128xf32>, vector<8x128xf32> -> vector<16x128xf32>
    %c0_23 = arith.constant 0 : index
    %c0_24 = arith.constant 0 : index
    %c0_25 = arith.constant 0 : index
    %78 = vector.load %arg7[%c0_23, %c0_24, %c0_25] : memref<2x128x128xf32, #tpu.memory_space<vmem>>, vector<1x128x128xf32>
    %79 = vector.shape_cast %78 : vector<1x128x128xf32> to vector<128x128xf32>
    %80 = arith.truncf %77 : vector<16x128xf32> to vector<16x128xbf16>
    %81 = arith.truncf %79 : vector<128x128xf32> to vector<128x128xbf16>
    %cst_26 = arith.constant dense<0.000000e+00> : vector<16x128xf32>
    %82 = tpu.matmul %80, %81, %cst_26 {dimension_numbers = #tpu.dot_dimension_numbers<[1], [0], [0], [1], [0, 0, 1, 1], [], []>} : vector<16x128xbf16>, vector<128x128xbf16>, vector<16x128xf32> -> vector<16x128xf32>
    %c0_27 = arith.constant 0 : index
    %c0_28 = arith.constant 0 : index
    %c0_29 = arith.constant 0 : index
    %83 = vector.load %arg8[%c0_27, %c0_28, %c0_29] : memref<2x1x128xf32, #tpu.memory_space<vmem>>, vector<1x1x128xf32>
    %84 = vector.shape_cast %83 : vector<1x1x128xf32> to vector<1x128xf32>
    %85 = vector.broadcast %84 : vector<1x128xf32> to vector<16x128xf32>
    %86 = arith.addf %82, %85 : vector<16x128xf32>
    %87 = arith.addf %86, %26 : vector<16x128xf32>
    %c0_30 = arith.constant 0 : index
    %c0_31 = arith.constant 0 : index
    %c0_32 = arith.constant 0 : index
    %88 = vector.load %arg9[%c0_30, %c0_31, %c0_32] : memref<2x1x128xf32, #tpu.memory_space<vmem>>, vector<1x1x128xf32>
    %89 = vector.shape_cast %88 : vector<1x1x128xf32> to vector<1x128xf32>
    %c0_33 = arith.constant 0 : index
    %c0_34 = arith.constant 0 : index
    %c0_35 = arith.constant 0 : index
    %90 = vector.load %arg10[%c0_33, %c0_34, %c0_35] : memref<2x1x128xf32, #tpu.memory_space<vmem>>, vector<1x1x128xf32>
    %91 = vector.shape_cast %90 : vector<1x1x128xf32> to vector<1x128xf32>
    %cst_36 = arith.constant dense<0.000000e+00> : vector<16xf32>
    %92 = vector.multi_reduction <add>, %87, %cst_36 [1] : vector<16x128xf32> to vector<16xf32>
    %93 = vector.shape_cast %92 : vector<16xf32> to vector<16x1xf32>
    %cst_37 = arith.constant 1.280000e+02 : f32
    %94 = vector.broadcast %cst_37 : f32 to vector<16x1xf32>
    %95 = arith.divf %93, %94 : vector<16x1xf32>
    %96 = vector.broadcast %95 : vector<16x1xf32> to vector<16x128xf32>
    %97 = arith.subf %87, %96 : vector<16x128xf32>
    %98 = vector.broadcast %95 : vector<16x1xf32> to vector<16x128xf32>
    %99 = arith.subf %87, %98 : vector<16x128xf32>
    %100 = arith.mulf %97, %99 : vector<16x128xf32>
    %cst_38 = arith.constant dense<0.000000e+00> : vector<16xf32>
    %101 = vector.multi_reduction <add>, %100, %cst_38 [1] : vector<16x128xf32> to vector<16xf32>
    %102 = vector.shape_cast %101 : vector<16xf32> to vector<16x1xf32>
    %cst_39 = arith.constant 1.280000e+02 : f32
    %103 = vector.broadcast %cst_39 : f32 to vector<16x1xf32>
    %104 = arith.divf %102, %103 : vector<16x1xf32>
    %105 = vector.broadcast %95 : vector<16x1xf32> to vector<16x128xf32>
    %106 = arith.subf %87, %105 : vector<16x128xf32>
    %cst_40 = arith.constant 9.99999996E-13 : f32
    %107 = vector.broadcast %cst_40 : f32 to vector<16x1xf32>
    %108 = arith.addf %104, %107 : vector<16x1xf32>
    %109 = math.rsqrt %108 : vector<16x1xf32>
    %110 = vector.broadcast %109 : vector<16x1xf32> to vector<16x128xf32>
    %111 = arith.mulf %106, %110 : vector<16x128xf32>
    %112 = vector.broadcast %89 : vector<1x128xf32> to vector<16x128xf32>
    %113 = arith.mulf %111, %112 : vector<16x128xf32>
    %114 = vector.broadcast %91 : vector<1x128xf32> to vector<16x128xf32>
    %115 = arith.addf %113, %114 : vector<16x128xf32>
    %c0_41 = arith.constant 0 : index
    %c0_42 = arith.constant 0 : index
    %c0_43 = arith.constant 0 : index
    %116 = vector.load %arg11[%c0_41, %c0_42, %c0_43] : memref<2x128x512xf32, #tpu.memory_space<vmem>>, vector<1x128x512xf32>
    %117 = vector.shape_cast %116 : vector<1x128x512xf32> to vector<128x512xf32>
    %118 = arith.truncf %115 : vector<16x128xf32> to vector<16x128xbf16>
    %119 = arith.truncf %117 : vector<128x512xf32> to vector<128x512xbf16>
    %cst_44 = arith.constant dense<0.000000e+00> : vector<16x512xf32>
    %120 = tpu.matmul %118, %119, %cst_44 {dimension_numbers = #tpu.dot_dimension_numbers<[1], [0], [0], [1], [0, 0, 1, 1], [], []>} : vector<16x128xbf16>, vector<128x512xbf16>, vector<16x512xf32> -> vector<16x512xf32>
    %c0_45 = arith.constant 0 : index
    %c0_46 = arith.constant 0 : index
    %c0_47 = arith.constant 0 : index
    %121 = vector.load %arg12[%c0_45, %c0_46, %c0_47] : memref<2x1x512xf32, #tpu.memory_space<vmem>>, vector<1x1x512xf32>
    %122 = vector.shape_cast %121 : vector<1x1x512xf32> to vector<1x512xf32>
    %123 = vector.broadcast %122 : vector<1x512xf32> to vector<16x512xf32>
    %124 = arith.addf %120, %123 : vector<16x512xf32>
    %cst_48 = arith.constant 5.000000e-01 : f32
    %125 = vector.broadcast %cst_48 : f32 to vector<16x512xf32>
    %126 = arith.mulf %125, %124 : vector<16x512xf32>
    %cst_49 = arith.constant 4.471500e-02 : f32
    %127 = vector.broadcast %cst_49 : f32 to vector<16x512xf32>
    %128 = arith.mulf %127, %124 : vector<16x512xf32>
    %129 = arith.mulf %128, %124 : vector<16x512xf32>
    %130 = arith.mulf %129, %124 : vector<16x512xf32>
    %131 = arith.addf %124, %130 : vector<16x512xf32>
    %cst_50 = arith.constant 0.797884583 : f32
    %132 = vector.broadcast %cst_50 : f32 to vector<16x512xf32>
    %133 = arith.mulf %132, %131 : vector<16x512xf32>
    %134 = math.tanh %133 : vector<16x512xf32>
    %cst_51 = arith.constant 1.000000e+00 : f32
    %135 = vector.broadcast %cst_51 : f32 to vector<16x512xf32>
    %136 = arith.addf %135, %134 : vector<16x512xf32>
    %137 = arith.mulf %126, %136 : vector<16x512xf32>
    %c0_52 = arith.constant 0 : index
    %c0_53 = arith.constant 0 : index
    %c0_54 = arith.constant 0 : index
    %138 = vector.load %arg13[%c0_52, %c0_53, %c0_54] : memref<2x512x128xf32, #tpu.memory_space<vmem>>, vector<1x512x128xf32>
    %139 = vector.shape_cast %138 : vector<1x512x128xf32> to vector<512x128xf32>
    %140 = arith.truncf %137 : vector<16x512xf32> to vector<16x512xbf16>
    %141 = arith.truncf %139 : vector<512x128xf32> to vector<512x128xbf16>
    %cst_55 = arith.constant dense<0.000000e+00> : vector<16x128xf32>
    %142 = tpu.matmul %140, %141, %cst_55 {dimension_numbers = #tpu.dot_dimension_numbers<[1], [0], [0], [1], [0, 0, 1, 1], [], []>} : vector<16x512xbf16>, vector<512x128xbf16>, vector<16x128xf32> -> vector<16x128xf32>
    %c0_56 = arith.constant 0 : index
    %c0_57 = arith.constant 0 : index
    %c0_58 = arith.constant 0 : index
    %143 = vector.load %arg14[%c0_56, %c0_57, %c0_58] : memref<2x1x128xf32, #tpu.memory_space<vmem>>, vector<1x1x128xf32>
    %144 = vector.shape_cast %143 : vector<1x1x128xf32> to vector<1x128xf32>
    %145 = vector.broadcast %144 : vector<1x128xf32> to vector<16x128xf32>
    %146 = arith.addf %142, %145 : vector<16x128xf32>
    %147 = arith.addf %146, %115 : vector<16x128xf32>
    %c0_59 = arith.constant 0 : index
    %c0_60 = arith.constant 0 : index
    %c0_61 = arith.constant 0 : index
    %148 = vector.load %arg15[%c0_59, %c0_60, %c0_61] : memref<2x1x128xf32, #tpu.memory_space<vmem>>, vector<1x1x128xf32>
    %149 = vector.shape_cast %148 : vector<1x1x128xf32> to vector<1x128xf32>
    %c0_62 = arith.constant 0 : index
    %c0_63 = arith.constant 0 : index
    %c0_64 = arith.constant 0 : index
    %150 = vector.load %arg16[%c0_62, %c0_63, %c0_64] : memref<2x1x128xf32, #tpu.memory_space<vmem>>, vector<1x1x128xf32>
    %151 = vector.shape_cast %150 : vector<1x1x128xf32> to vector<1x128xf32>
    %cst_65 = arith.constant dense<0.000000e+00> : vector<16xf32>
    %152 = vector.multi_reduction <add>, %147, %cst_65 [1] : vector<16x128xf32> to vector<16xf32>
    %153 = vector.shape_cast %152 : vector<16xf32> to vector<16x1xf32>
    %cst_66 = arith.constant 1.280000e+02 : f32
    %154 = vector.broadcast %cst_66 : f32 to vector<16x1xf32>
    %155 = arith.divf %153, %154 : vector<16x1xf32>
    %156 = vector.broadcast %155 : vector<16x1xf32> to vector<16x128xf32>
    %157 = arith.subf %147, %156 : vector<16x128xf32>
    %158 = vector.broadcast %155 : vector<16x1xf32> to vector<16x128xf32>
    %159 = arith.subf %147, %158 : vector<16x128xf32>
    %160 = arith.mulf %157, %159 : vector<16x128xf32>
    %cst_67 = arith.constant dense<0.000000e+00> : vector<16xf32>
    %161 = vector.multi_reduction <add>, %160, %cst_67 [1] : vector<16x128xf32> to vector<16xf32>
    %162 = vector.shape_cast %161 : vector<16xf32> to vector<16x1xf32>
    %cst_68 = arith.constant 1.280000e+02 : f32
    %163 = vector.broadcast %cst_68 : f32 to vector<16x1xf32>
    %164 = arith.divf %162, %163 : vector<16x1xf32>
    %165 = vector.broadcast %155 : vector<16x1xf32> to vector<16x128xf32>
    %166 = arith.subf %147, %165 : vector<16x128xf32>
    %cst_69 = arith.constant 9.99999996E-13 : f32
    %167 = vector.broadcast %cst_69 : f32 to vector<16x1xf32>
    %168 = arith.addf %164, %167 : vector<16x1xf32>
    %169 = math.rsqrt %168 : vector<16x1xf32>
    %170 = vector.broadcast %169 : vector<16x1xf32> to vector<16x128xf32>
    %171 = arith.mulf %166, %170 : vector<16x128xf32>
    %172 = vector.broadcast %149 : vector<1x128xf32> to vector<16x128xf32>
    %173 = arith.mulf %171, %172 : vector<16x128xf32>
    %174 = vector.broadcast %151 : vector<1x128xf32> to vector<16x128xf32>
    %175 = arith.addf %173, %174 : vector<16x128xf32>
    %c1 = arith.constant 1 : index
    %c0_70 = arith.constant 0 : index
    %c0_71 = arith.constant 0 : index
    %176 = vector.load %arg5[%c1, %c0_70, %c0_71] : memref<2x128x384xf32, #tpu.memory_space<vmem>>, vector<1x128x384xf32>
    %177 = vector.shape_cast %176 : vector<1x128x384xf32> to vector<128x384xf32>
    %178 = arith.truncf %175 : vector<16x128xf32> to vector<16x128xbf16>
    %179 = arith.truncf %177 : vector<128x384xf32> to vector<128x384xbf16>
    %cst_72 = arith.constant dense<0.000000e+00> : vector<16x384xf32>
    %180 = tpu.matmul %178, %179, %cst_72 {dimension_numbers = #tpu.dot_dimension_numbers<[1], [0], [0], [1], [0, 0, 1, 1], [], []>} : vector<16x128xbf16>, vector<128x384xbf16>, vector<16x384xf32> -> vector<16x384xf32>
    %c1_73 = arith.constant 1 : index
    %c0_74 = arith.constant 0 : index
    %c0_75 = arith.constant 0 : index
    %181 = vector.load %arg6[%c1_73, %c0_74, %c0_75] : memref<2x1x384xf32, #tpu.memory_space<vmem>>, vector<1x1x384xf32>
    %182 = vector.shape_cast %181 : vector<1x1x384xf32> to vector<1x384xf32>
    %183 = vector.broadcast %182 : vector<1x384xf32> to vector<16x384xf32>
    %184 = arith.addf %180, %183 : vector<16x384xf32>
    %185 = vector.extract_strided_slice %184 {offsets = [0, 0], sizes = [8, 64], strides = [1, 1]} : vector<16x384xf32> to vector<8x64xf32>
    %186 = vector.extract_strided_slice %184 {offsets = [0, 64], sizes = [8, 64], strides = [1, 1]} : vector<16x384xf32> to vector<8x64xf32>
    %187 = vector.extract_strided_slice %184 {offsets = [8, 0], sizes = [8, 64], strides = [1, 1]} : vector<16x384xf32> to vector<8x64xf32>
    %188 = vector.extract_strided_slice %184 {offsets = [8, 64], sizes = [8, 64], strides = [1, 1]} : vector<16x384xf32> to vector<8x64xf32>
    %189 = tpu.concatenate %185, %186, %187, %188 in 0 : vector<8x64xf32>, vector<8x64xf32>, vector<8x64xf32>, vector<8x64xf32> -> vector<32x64xf32>
    %190 = vector.extract_strided_slice %184 {offsets = [0, 128], sizes = [8, 64], strides = [1, 1]} : vector<16x384xf32> to vector<8x64xf32>
    %191 = vector.extract_strided_slice %184 {offsets = [0, 192], sizes = [8, 64], strides = [1, 1]} : vector<16x384xf32> to vector<8x64xf32>
    %192 = vector.extract_strided_slice %184 {offsets = [8, 128], sizes = [8, 64], strides = [1, 1]} : vector<16x384xf32> to vector<8x64xf32>
    %193 = vector.extract_strided_slice %184 {offsets = [8, 192], sizes = [8, 64], strides = [1, 1]} : vector<16x384xf32> to vector<8x64xf32>
    %194 = tpu.concatenate %190, %191, %192, %193 in 0 : vector<8x64xf32>, vector<8x64xf32>, vector<8x64xf32>, vector<8x64xf32> -> vector<32x64xf32>
    %195 = vector.extract_strided_slice %184 {offsets = [0, 256], sizes = [8, 64], strides = [1, 1]} : vector<16x384xf32> to vector<8x64xf32>
    %196 = vector.extract_strided_slice %184 {offsets = [0, 320], sizes = [8, 64], strides = [1, 1]} : vector<16x384xf32> to vector<8x64xf32>
    %197 = vector.extract_strided_slice %184 {offsets = [8, 256], sizes = [8, 64], strides = [1, 1]} : vector<16x384xf32> to vector<8x64xf32>
    %198 = vector.extract_strided_slice %184 {offsets = [8, 320], sizes = [8, 64], strides = [1, 1]} : vector<16x384xf32> to vector<8x64xf32>
    %199 = tpu.concatenate %195, %196, %197, %198 in 0 : vector<8x64xf32>, vector<8x64xf32>, vector<8x64xf32>, vector<8x64xf32> -> vector<32x64xf32>
    %200 = arith.truncf %189 : vector<32x64xf32> to vector<32x64xbf16>
    %201 = arith.truncf %194 : vector<32x64xf32> to vector<32x64xbf16>
    %cst_76 = arith.constant dense<0.000000e+00> : vector<32x32xf32>
    %202 = tpu.matmul %200, %201, %cst_76 {dimension_numbers = #tpu.dot_dimension_numbers<[1], [1], [0], [0], [0, 0, 1, 0], [], []>} : vector<32x64xbf16>, vector<32x64xbf16>, vector<32x32xf32> -> vector<32x32xf32>
    %cst_77 = arith.constant 1.250000e-01 : f32
    %203 = vector.broadcast %cst_77 : f32 to vector<32x32xf32>
    %204 = arith.mulf %202, %203 : vector<32x32xf32>
    %205 = arith.addf %204, %27 : vector<32x32xf32>
    %cst_78 = arith.constant dense<0xFF800000> : vector<32xf32>
    %206 = vector.multi_reduction <maximumf>, %205, %cst_78 [1] : vector<32x32xf32> to vector<32xf32>
    %207 = vector.shape_cast %206 : vector<32xf32> to vector<32x1xf32>
    %208 = vector.broadcast %207 : vector<32x1xf32> to vector<32x32xf32>
    %209 = arith.subf %205, %208 : vector<32x32xf32>
    %210 = math.exp %209 : vector<32x32xf32>
    %cst_79 = arith.constant dense<0.000000e+00> : vector<32xf32>
    %211 = vector.multi_reduction <add>, %210, %cst_79 [1] : vector<32x32xf32> to vector<32xf32>
    %212 = vector.shape_cast %211 : vector<32xf32> to vector<32x1xf32>
    %213 = tpu.reciprocal %212 {approx = true} : vector<32x1xf32> -> vector<32x1xf32>
    %214 = vector.broadcast %213 : vector<32x1xf32> to vector<32x32xf32>
    %215 = arith.mulf %210, %214 : vector<32x32xf32>
    %216 = arith.truncf %215 : vector<32x32xf32> to vector<32x32xbf16>
    %217 = arith.truncf %199 : vector<32x64xf32> to vector<32x64xbf16>
    %cst_80 = arith.constant dense<0.000000e+00> : vector<32x64xf32>
    %218 = tpu.matmul %216, %217, %cst_80 {dimension_numbers = #tpu.dot_dimension_numbers<[1], [0], [0], [1], [0, 0, 1, 1], [], []>} : vector<32x32xbf16>, vector<32x64xbf16>, vector<32x64xf32> -> vector<32x64xf32>
    %219 = vector.extract_strided_slice %218 {offsets = [0, 0], sizes = [8, 64], strides = [1, 1]} : vector<32x64xf32> to vector<8x64xf32>
    %220 = vector.extract_strided_slice %218 {offsets = [8, 0], sizes = [8, 64], strides = [1, 1]} : vector<32x64xf32> to vector<8x64xf32>
    %221 = tpu.concatenate %219, %220 in 1 : vector<8x64xf32>, vector<8x64xf32> -> vector<8x128xf32>
    %222 = vector.extract_strided_slice %218 {offsets = [16, 0], sizes = [8, 64], strides = [1, 1]} : vector<32x64xf32> to vector<8x64xf32>
    %223 = vector.extract_strided_slice %218 {offsets = [24, 0], sizes = [8, 64], strides = [1, 1]} : vector<32x64xf32> to vector<8x64xf32>
    %224 = tpu.concatenate %222, %223 in 1 : vector<8x64xf32>, vector<8x64xf32> -> vector<8x128xf32>
    %225 = tpu.concatenate %221, %224 in 0 : vector<8x128xf32>, vector<8x128xf32> -> vector<16x128xf32>
    %c1_81 = arith.constant 1 : index
    %c0_82 = arith.constant 0 : index
    %c0_83 = arith.constant 0 : index
    %226 = vector.load %arg7[%c1_81, %c0_82, %c0_83] : memref<2x128x128xf32, #tpu.memory_space<vmem>>, vector<1x128x128xf32>
    %227 = vector.shape_cast %226 : vector<1x128x128xf32> to vector<128x128xf32>
    %228 = arith.truncf %225 : vector<16x128xf32> to vector<16x128xbf16>
    %229 = arith.truncf %227 : vector<128x128xf32> to vector<128x128xbf16>
    %cst_84 = arith.constant dense<0.000000e+00> : vector<16x128xf32>
    %230 = tpu.matmul %228, %229, %cst_84 {dimension_numbers = #tpu.dot_dimension_numbers<[1], [0], [0], [1], [0, 0, 1, 1], [], []>} : vector<16x128xbf16>, vector<128x128xbf16>, vector<16x128xf32> -> vector<16x128xf32>
    %c1_85 = arith.constant 1 : index
    %c0_86 = arith.constant 0 : index
    %c0_87 = arith.constant 0 : index
    %231 = vector.load %arg8[%c1_85, %c0_86, %c0_87] : memref<2x1x128xf32, #tpu.memory_space<vmem>>, vector<1x1x128xf32>
    %232 = vector.shape_cast %231 : vector<1x1x128xf32> to vector<1x128xf32>
    %233 = vector.broadcast %232 : vector<1x128xf32> to vector<16x128xf32>
    %234 = arith.addf %230, %233 : vector<16x128xf32>
    %235 = arith.addf %234, %175 : vector<16x128xf32>
    %c1_88 = arith.constant 1 : index
    %c0_89 = arith.constant 0 : index
    %c0_90 = arith.constant 0 : index
    %236 = vector.load %arg9[%c1_88, %c0_89, %c0_90] : memref<2x1x128xf32, #tpu.memory_space<vmem>>, vector<1x1x128xf32>
    %237 = vector.shape_cast %236 : vector<1x1x128xf32> to vector<1x128xf32>
    %c1_91 = arith.constant 1 : index
    %c0_92 = arith.constant 0 : index
    %c0_93 = arith.constant 0 : index
    %238 = vector.load %arg10[%c1_91, %c0_92, %c0_93] : memref<2x1x128xf32, #tpu.memory_space<vmem>>, vector<1x1x128xf32>
    %239 = vector.shape_cast %238 : vector<1x1x128xf32> to vector<1x128xf32>
    %cst_94 = arith.constant dense<0.000000e+00> : vector<16xf32>
    %240 = vector.multi_reduction <add>, %235, %cst_94 [1] : vector<16x128xf32> to vector<16xf32>
    %241 = vector.shape_cast %240 : vector<16xf32> to vector<16x1xf32>
    %cst_95 = arith.constant 1.280000e+02 : f32
    %242 = vector.broadcast %cst_95 : f32 to vector<16x1xf32>
    %243 = arith.divf %241, %242 : vector<16x1xf32>
    %244 = vector.broadcast %243 : vector<16x1xf32> to vector<16x128xf32>
    %245 = arith.subf %235, %244 : vector<16x128xf32>
    %246 = vector.broadcast %243 : vector<16x1xf32> to vector<16x128xf32>
    %247 = arith.subf %235, %246 : vector<16x128xf32>
    %248 = arith.mulf %245, %247 : vector<16x128xf32>
    %cst_96 = arith.constant dense<0.000000e+00> : vector<16xf32>
    %249 = vector.multi_reduction <add>, %248, %cst_96 [1] : vector<16x128xf32> to vector<16xf32>
    %250 = vector.shape_cast %249 : vector<16xf32> to vector<16x1xf32>
    %cst_97 = arith.constant 1.280000e+02 : f32
    %251 = vector.broadcast %cst_97 : f32 to vector<16x1xf32>
    %252 = arith.divf %250, %251 : vector<16x1xf32>
    %253 = vector.broadcast %243 : vector<16x1xf32> to vector<16x128xf32>
    %254 = arith.subf %235, %253 : vector<16x128xf32>
    %cst_98 = arith.constant 9.99999996E-13 : f32
    %255 = vector.broadcast %cst_98 : f32 to vector<16x1xf32>
    %256 = arith.addf %252, %255 : vector<16x1xf32>
    %257 = math.rsqrt %256 : vector<16x1xf32>
    %258 = vector.broadcast %257 : vector<16x1xf32> to vector<16x128xf32>
    %259 = arith.mulf %254, %258 : vector<16x128xf32>
    %260 = vector.broadcast %237 : vector<1x128xf32> to vector<16x128xf32>
    %261 = arith.mulf %259, %260 : vector<16x128xf32>
    %262 = vector.broadcast %239 : vector<1x128xf32> to vector<16x128xf32>
    %263 = arith.addf %261, %262 : vector<16x128xf32>
    %c1_99 = arith.constant 1 : index
    %c0_100 = arith.constant 0 : index
    %c0_101 = arith.constant 0 : index
    %264 = vector.load %arg11[%c1_99, %c0_100, %c0_101] : memref<2x128x512xf32, #tpu.memory_space<vmem>>, vector<1x128x512xf32>
    %265 = vector.shape_cast %264 : vector<1x128x512xf32> to vector<128x512xf32>
    %266 = arith.truncf %263 : vector<16x128xf32> to vector<16x128xbf16>
    %267 = arith.truncf %265 : vector<128x512xf32> to vector<128x512xbf16>
    %cst_102 = arith.constant dense<0.000000e+00> : vector<16x512xf32>
    %268 = tpu.matmul %266, %267, %cst_102 {dimension_numbers = #tpu.dot_dimension_numbers<[1], [0], [0], [1], [0, 0, 1, 1], [], []>} : vector<16x128xbf16>, vector<128x512xbf16>, vector<16x512xf32> -> vector<16x512xf32>
    %c1_103 = arith.constant 1 : index
    %c0_104 = arith.constant 0 : index
    %c0_105 = arith.constant 0 : index
    %269 = vector.load %arg12[%c1_103, %c0_104, %c0_105] : memref<2x1x512xf32, #tpu.memory_space<vmem>>, vector<1x1x512xf32>
    %270 = vector.shape_cast %269 : vector<1x1x512xf32> to vector<1x512xf32>
    %271 = vector.broadcast %270 : vector<1x512xf32> to vector<16x512xf32>
    %272 = arith.addf %268, %271 : vector<16x512xf32>
    %cst_106 = arith.constant 5.000000e-01 : f32
    %273 = vector.broadcast %cst_106 : f32 to vector<16x512xf32>
    %274 = arith.mulf %273, %272 : vector<16x512xf32>
    %cst_107 = arith.constant 4.471500e-02 : f32
    %275 = vector.broadcast %cst_107 : f32 to vector<16x512xf32>
    %276 = arith.mulf %275, %272 : vector<16x512xf32>
    %277 = arith.mulf %276, %272 : vector<16x512xf32>
    %278 = arith.mulf %277, %272 : vector<16x512xf32>
    %279 = arith.addf %272, %278 : vector<16x512xf32>
    %cst_108 = arith.constant 0.797884583 : f32
    %280 = vector.broadcast %cst_108 : f32 to vector<16x512xf32>
    %281 = arith.mulf %280, %279 : vector<16x512xf32>
    %282 = math.tanh %281 : vector<16x512xf32>
    %cst_109 = arith.constant 1.000000e+00 : f32
    %283 = vector.broadcast %cst_109 : f32 to vector<16x512xf32>
    %284 = arith.addf %283, %282 : vector<16x512xf32>
    %285 = arith.mulf %274, %284 : vector<16x512xf32>
    %c1_110 = arith.constant 1 : index
    %c0_111 = arith.constant 0 : index
    %c0_112 = arith.constant 0 : index
    %286 = vector.load %arg13[%c1_110, %c0_111, %c0_112] : memref<2x512x128xf32, #tpu.memory_space<vmem>>, vector<1x512x128xf32>
    %287 = vector.shape_cast %286 : vector<1x512x128xf32> to vector<512x128xf32>
    %288 = arith.truncf %285 : vector<16x512xf32> to vector<16x512xbf16>
    %289 = arith.truncf %287 : vector<512x128xf32> to vector<512x128xbf16>
    %cst_113 = arith.constant dense<0.000000e+00> : vector<16x128xf32>
    %290 = tpu.matmul %288, %289, %cst_113 {dimension_numbers = #tpu.dot_dimension_numbers<[1], [0], [0], [1], [0, 0, 1, 1], [], []>} : vector<16x512xbf16>, vector<512x128xbf16>, vector<16x128xf32> -> vector<16x128xf32>
    %c1_114 = arith.constant 1 : index
    %c0_115 = arith.constant 0 : index
    %c0_116 = arith.constant 0 : index
    %291 = vector.load %arg14[%c1_114, %c0_115, %c0_116] : memref<2x1x128xf32, #tpu.memory_space<vmem>>, vector<1x1x128xf32>
    %292 = vector.shape_cast %291 : vector<1x1x128xf32> to vector<1x128xf32>
    %293 = vector.broadcast %292 : vector<1x128xf32> to vector<16x128xf32>
    %294 = arith.addf %290, %293 : vector<16x128xf32>
    %295 = arith.addf %294, %263 : vector<16x128xf32>
    %c1_117 = arith.constant 1 : index
    %c0_118 = arith.constant 0 : index
    %c0_119 = arith.constant 0 : index
    %296 = vector.load %arg15[%c1_117, %c0_118, %c0_119] : memref<2x1x128xf32, #tpu.memory_space<vmem>>, vector<1x1x128xf32>
    %297 = vector.shape_cast %296 : vector<1x1x128xf32> to vector<1x128xf32>
    %c1_120 = arith.constant 1 : index
    %c0_121 = arith.constant 0 : index
    %c0_122 = arith.constant 0 : index
    %298 = vector.load %arg16[%c1_120, %c0_121, %c0_122] : memref<2x1x128xf32, #tpu.memory_space<vmem>>, vector<1x1x128xf32>
    %299 = vector.shape_cast %298 : vector<1x1x128xf32> to vector<1x128xf32>
    %cst_123 = arith.constant dense<0.000000e+00> : vector<16xf32>
    %300 = vector.multi_reduction <add>, %295, %cst_123 [1] : vector<16x128xf32> to vector<16xf32>
    %301 = vector.shape_cast %300 : vector<16xf32> to vector<16x1xf32>
    %cst_124 = arith.constant 1.280000e+02 : f32
    %302 = vector.broadcast %cst_124 : f32 to vector<16x1xf32>
    %303 = arith.divf %301, %302 : vector<16x1xf32>
    %304 = vector.broadcast %303 : vector<16x1xf32> to vector<16x128xf32>
    %305 = arith.subf %295, %304 : vector<16x128xf32>
    %306 = vector.broadcast %303 : vector<16x1xf32> to vector<16x128xf32>
    %307 = arith.subf %295, %306 : vector<16x128xf32>
    %308 = arith.mulf %305, %307 : vector<16x128xf32>
    %cst_125 = arith.constant dense<0.000000e+00> : vector<16xf32>
    %309 = vector.multi_reduction <add>, %308, %cst_125 [1] : vector<16x128xf32> to vector<16xf32>
    %310 = vector.shape_cast %309 : vector<16xf32> to vector<16x1xf32>
    %cst_126 = arith.constant 1.280000e+02 : f32
    %311 = vector.broadcast %cst_126 : f32 to vector<16x1xf32>
    %312 = arith.divf %310, %311 : vector<16x1xf32>
    %313 = vector.broadcast %303 : vector<16x1xf32> to vector<16x128xf32>
    %314 = arith.subf %295, %313 : vector<16x128xf32>
    %cst_127 = arith.constant 9.99999996E-13 : f32
    %315 = vector.broadcast %cst_127 : f32 to vector<16x1xf32>
    %316 = arith.addf %312, %315 : vector<16x1xf32>
    %317 = math.rsqrt %316 : vector<16x1xf32>
    %318 = vector.broadcast %317 : vector<16x1xf32> to vector<16x128xf32>
    %319 = arith.mulf %314, %318 : vector<16x128xf32>
    %320 = vector.broadcast %297 : vector<1x128xf32> to vector<16x128xf32>
    %321 = arith.mulf %319, %320 : vector<16x128xf32>
    %322 = vector.broadcast %299 : vector<1x128xf32> to vector<16x128xf32>
    %323 = arith.addf %321, %322 : vector<16x128xf32>
    %324 = vector.extract_strided_slice %323 {offsets = [0, 0], sizes = [1, 128], strides = [1, 1]} : vector<16x128xf32> to vector<1x128xf32>
    %325 = vector.extract_strided_slice %323 {offsets = [8, 0], sizes = [1, 128], strides = [1, 1]} : vector<16x128xf32> to vector<1x128xf32>
    %326 = tpu.concatenate %324, %325 in 0 : vector<1x128xf32>, vector<1x128xf32> -> vector<2x128xf32>
    %c0_128 = arith.constant 0 : index
    %c0_129 = arith.constant 0 : index
    %327 = vector.load %arg17[%c0_128, %c0_129] : memref<128x128xf32, #tpu.memory_space<vmem>>, vector<128x128xf32>
    %328 = arith.truncf %326 : vector<2x128xf32> to vector<2x128xbf16>
    %329 = arith.truncf %327 : vector<128x128xf32> to vector<128x128xbf16>
    %cst_130 = arith.constant dense<0.000000e+00> : vector<2x128xf32>
    %330 = tpu.matmul %328, %329, %cst_130 {dimension_numbers = #tpu.dot_dimension_numbers<[1], [0], [0], [1], [0, 0, 1, 1], [], []>} : vector<2x128xbf16>, vector<128x128xbf16>, vector<2x128xf32> -> vector<2x128xf32>
    %c0_131 = arith.constant 0 : index
    %c0_132 = arith.constant 0 : index
    %331 = vector.load %arg18[%c0_131, %c0_132] : memref<1x128xf32, #tpu.memory_space<vmem>>, vector<1x128xf32>
    %332 = vector.broadcast %331 : vector<1x128xf32> to vector<2x128xf32>
    %333 = arith.addf %330, %332 : vector<2x128xf32>
    %334 = math.tanh %333 : vector<2x128xf32>
    %c0_133 = arith.constant 0 : index
    %c0_134 = arith.constant 0 : index
    %335 = vector.load %arg19[%c0_133, %c0_134] : memref<128x3xf32, #tpu.memory_space<vmem>>, vector<128x3xf32>
    %336 = arith.truncf %334 : vector<2x128xf32> to vector<2x128xbf16>
    %337 = arith.truncf %335 : vector<128x3xf32> to vector<128x3xbf16>
    %cst_135 = arith.constant dense<0.000000e+00> : vector<2x3xf32>
    %338 = tpu.matmul %336, %337, %cst_135 {dimension_numbers = #tpu.dot_dimension_numbers<[1], [0], [0], [1], [0, 0, 1, 1], [], []>} : vector<2x128xbf16>, vector<128x3xbf16>, vector<2x3xf32> -> vector<2x3xf32>
    %c0_136 = arith.constant 0 : index
    %c0_137 = arith.constant 0 : index
    %339 = vector.load %arg20[%c0_136, %c0_137] : memref<1x3xf32, #tpu.memory_space<vmem>>, vector<1x3xf32>
    %340 = vector.broadcast %339 : vector<1x3xf32> to vector<2x3xf32>
    %341 = arith.addf %338, %340 : vector<2x3xf32>
    %c0_138 = arith.constant 0 : index
    %c0_139 = arith.constant 0 : index
    %342 = vector.load %arg21[%c0_138, %c0_139] : memref<2x3xf32, #tpu.memory_space<vmem>>, vector<2x3xf32>
    tpu.vector_store %arg21[%c0_138, %c0_139], %341 {strides = array<i32>} : memref<2x3xf32, #tpu.memory_space<vmem>>, vector<2x3xf32>,
    return
  }
  func.func @transform_0(%arg0: i32) -> (i32, i32) {
    %c0_i32 = arith.constant 0 : i32
    %c0_i32_0 = arith.constant 0 : i32
    %c0_i32_1 = arith.constant 0 : i32
    return %c0_i32, %c0_i32_0 : i32, i32
  }
  func.func @transform_1(%arg0: i32) -> (i32, i32) {
    %c0_i32 = arith.constant 0 : i32
    %c0_i32_0 = arith.constant 0 : i32
    %c0_i32_1 = arith.constant 0 : i32
    return %c0_i32, %c0_i32_0 : i32, i32
  }
  func.func @transform_2(%arg0: i32) -> (i32, i32) {
    %c0_i32 = arith.constant 0 : i32
    %c0_i32_0 = arith.constant 0 : i32
    %c0_i32_1 = arith.constant 0 : i32
    return %c0_i32, %c0_i32_0 : i32, i32
  }
  func.func @transform_3(%arg0: i32) -> (i32, i32) {
    %c0_i32 = arith.constant 0 : i32
    %c0_i32_0 = arith.constant 0 : i32
    %c0_i32_1 = arith.constant 0 : i32
    return %c0_i32, %c0_i32_0 : i32, i32
  }
  func.func @transform_4(%arg0: i32) -> (i32, i32, i32) {
    %c0_i32 = arith.constant 0 : i32
    %c0_i32_0 = arith.constant 0 : i32
    %c0_i32_1 = arith.constant 0 : i32
    %c0_i32_2 = arith.constant 0 : i32
    return %c0_i32, %c0_i32_0, %c0_i32_1 : i32, i32, i32
  }
  func.func @transform_5(%arg0: i32) -> (i32, i32, i32) {
    %c0_i32 = arith.constant 0 : i32
    %c0_i32_0 = arith.constant 0 : i32
    %c0_i32_1 = arith.constant 0 : i32
    %c0_i32_2 = arith.constant 0 : i32
    return %c0_i32, %c0_i32_0, %c0_i32_1 : i32, i32, i32
  }
  func.func @transform_6(%arg0: i32) -> (i32, i32, i32) {
    %c0_i32 = arith.constant 0 : i32
    %c0_i32_0 = arith.constant 0 : i32
    %c0_i32_1 = arith.constant 0 : i32
    %c0_i32_2 = arith.constant 0 : i32
    return %c0_i32, %c0_i32_0, %c0_i32_1 : i32, i32, i32
  }
  func.func @transform_7(%arg0: i32) -> (i32, i32, i32) {
    %c0_i32 = arith.constant 0 : i32
    %c0_i32_0 = arith.constant 0 : i32
    %c0_i32_1 = arith.constant 0 : i32
    %c0_i32_2 = arith.constant 0 : i32
    return %c0_i32, %c0_i32_0, %c0_i32_1 : i32, i32, i32
  }
  func.func @transform_8(%arg0: i32) -> (i32, i32, i32) {
    %c0_i32 = arith.constant 0 : i32
    %c0_i32_0 = arith.constant 0 : i32
    %c0_i32_1 = arith.constant 0 : i32
    %c0_i32_2 = arith.constant 0 : i32
    return %c0_i32, %c0_i32_0, %c0_i32_1 : i32, i32, i32
  }
  func.func @transform_9(%arg0: i32) -> (i32, i32, i32) {
    %c0_i32 = arith.constant 0 : i32
    %c0_i32_0 = arith.constant 0 : i32
    %c0_i32_1 = arith.constant 0 : i32
    %c0_i32_2 = arith.constant 0 : i32
    return %c0_i32, %c0_i32_0, %c0_i32_1 : i32, i32, i32
  }
  func.func @transform_10(%arg0: i32) -> (i32, i32, i32) {
    %c0_i32 = arith.constant 0 : i32
    %c0_i32_0 = arith.constant 0 : i32
    %c0_i32_1 = arith.constant 0 : i32
    %c0_i32_2 = arith.constant 0 : i32
    return %c0_i32, %c0_i32_0, %c0_i32_1 : i32, i32, i32
  }
  func.func @transform_11(%arg0: i32) -> (i32, i32, i32) {
    %c0_i32 = arith.constant 0 : i32
    %c0_i32_0 = arith.constant 0 : i32
    %c0_i32_1 = arith.constant 0 : i32
    %c0_i32_2 = arith.constant 0 : i32
    return %c0_i32, %c0_i32_0, %c0_i32_1 : i32, i32, i32
  }
  func.func @transform_12(%arg0: i32) -> (i32, i32, i32) {
    %c0_i32 = arith.constant 0 : i32
    %c0_i32_0 = arith.constant 0 : i32
    %c0_i32_1 = arith.constant 0 : i32
    %c0_i32_2 = arith.constant 0 : i32
    return %c0_i32, %c0_i32_0, %c0_i32_1 : i32, i32, i32
  }
  func.func @transform_13(%arg0: i32) -> (i32, i32, i32) {
    %c0_i32 = arith.constant 0 : i32
    %c0_i32_0 = arith.constant 0 : i32
    %c0_i32_1 = arith.constant 0 : i32
    %c0_i32_2 = arith.constant 0 : i32
    return %c0_i32, %c0_i32_0, %c0_i32_1 : i32, i32, i32
  }
  func.func @transform_14(%arg0: i32) -> (i32, i32, i32) {
    %c0_i32 = arith.constant 0 : i32
    %c0_i32_0 = arith.constant 0 : i32
    %c0_i32_1 = arith.constant 0 : i32
    %c0_i32_2 = arith.constant 0 : i32
    return %c0_i32, %c0_i32_0, %c0_i32_1 : i32, i32, i32
  }
  func.func @transform_15(%arg0: i32) -> (i32, i32, i32) {
    %c0_i32 = arith.constant 0 : i32
    %c0_i32_0 = arith.constant 0 : i32
    %c0_i32_1 = arith.constant 0 : i32
    %c0_i32_2 = arith.constant 0 : i32
    return %c0_i32, %c0_i32_0, %c0_i32_1 : i32, i32, i32
  }
  func.func @transform_16(%arg0: i32) -> (i32, i32) {
    %c0_i32 = arith.constant 0 : i32
    %c0_i32_0 = arith.constant 0 : i32
    %c0_i32_1 = arith.constant 0 : i32
    return %c0_i32, %c0_i32_0 : i32, i32
  }
  func.func @transform_17(%arg0: i32) -> (i32, i32) {
    %c0_i32 = arith.constant 0 : i32
    %c0_i32_0 = arith.constant 0 : i32
    %c0_i32_1 = arith.constant 0 : i32
    return %c0_i32, %c0_i32_0 : i32, i32
  }
  func.func @transform_18(%arg0: i32) -> (i32, i32) {
    %c0_i32 = arith.constant 0 : i32
    %c0_i32_0 = arith.constant 0 : i32
    %c0_i32_1 = arith.constant 0 : i32
    return %c0_i32, %c0_i32_0 : i32, i32
  }
  func.func @transform_19(%arg0: i32) -> (i32, i32) {
    %c0_i32 = arith.constant 0 : i32
    %c0_i32_0 = arith.constant 0 : i32
    %c0_i32_1 = arith.constant 0 : i32
    return %c0_i32, %c0_i32_0 : i32, i32
  }
  func.func @transform_20(%arg0: i32) -> (i32, i32) {
    %c0_i32 = arith.constant 0 : i32
    %c0_i32_0 = arith.constant 0 : i32
    %c0_i32_1 = arith.constant 0 : i32
    return %c0_i32, %c0_i32_0 : i32, i32
  }
}

</mosaic_0001>

<llo_original>
// kernel: bert_asc_forward.1
$region0: #{bert_asc_forward.1}
  #allocation0 [shape = 'u32[]', space=smem, size = 0x4, offset = 0x4, fixed_abs, tag = 'smem constant byte address 0x4 - core index']
  #allocation1 [shape = 'u32[144,128]{1,0:T(1,128)}', space=vmem, size = 0x12000, scoped, tag = 'internal scratch']
  %s0 = inlined_call_operand.vmem [shape: f32[16,128], index: 0, kind: input, shape index: {}]
  %s1 = inlined_call_operand.vmem [shape: f32[32,32], index: 1, kind: input, shape index: {}]
  %s2 = inlined_call_operand.vmem [shape: f32[1,128], index: 2, kind: input, shape index: {}]
  %s3 = inlined_call_operand.vmem [shape: f32[1,128], index: 3, kind: input, shape index: {}]
  %s4 = inlined_call_operand.hbm [shape: f32[2,128,384], index: 4, kind: input, shape index: {}]
  %s5 = inlined_call_operand.vmem [shape: f32[2,1,384], index: 5, kind: input, shape index: {}]
  %s6 = inlined_call_operand.vmem [shape: f32[2,128,128], index: 6, kind: input, shape index: {}]
  %s7 = inlined_call_operand.vmem [shape: f32[2,1,128], index: 7, kind: input, shape index: {}]
  %s8 = inlined_call_operand.vmem [shape: f32[2,1,128], index: 8, kind: input, shape index: {}]
  %s9 = inlined_call_operand.vmem [shape: f32[2,1,128], index: 9, kind: input, shape index: {}]
  %s10 = inlined_call_operand.hbm [shape: f32[2,128,512], index: 10, kind: input, shape index: {}]
  %s11 = inlined_call_operand.vmem [shape: f32[2,1,512], index: 11, kind: input, shape index: {}]
  %s12 = inlined_call_operand.hbm [shape: f32[2,512,128], index: 12, kind: input, shape index: {}]
  %s13 = inlined_call_operand.vmem [shape: f32[2,1,128], index: 13, kind: input, shape index: {}]
  %s14 = inlined_call_operand.vmem [shape: f32[2,1,128], index: 14, kind: input, shape index: {}]
  %s15 = inlined_call_operand.vmem [shape: f32[2,1,128], index: 15, kind: input, shape index: {}]
  %s16 = inlined_call_operand.vmem [shape: f32[128,128], index: 16, kind: input, shape index: {}]
  %s17 = inlined_call_operand.vmem [shape: f32[1,128], index: 17, kind: input, shape index: {}]
  %s18 = inlined_call_operand.vmem [shape: f32[128,3], index: 18, kind: input, shape index: {}]
  %s19 = inlined_call_operand.vmem [shape: f32[1,3], index: 19, kind: input, shape index: {}]
  %s20 = inlined_call_operand.hbm [shape: f32[2,3], index: 20, kind: output, shape index: {}]
  %s21 = sld [smem:[#allocation0]]
  $region102: #{bert_asc_forward.1} parent=0
    _
  %s23 = ssub.s32 1, %s21
  %s24 = scalar_select 0, %s23, %s21
  $region1: #{bert_asc_forward.1} parent=0
    #allocation2 [shape = 'u8[393216]{0}', space=vmem, size = 0x60000, scoped, tag = 'input window, operand 4, single buffered']
    #allocation3 [shape = 's32[1]{0}', space=sflag, size = 0x4, scoped, tag = 'scoped memory for bert_asc_forward.1']
    #allocation4 [shape = 's32[1]{0}', space=sflag, size = 0x4, scoped, tag = 'scoped memory for bert_asc_forward.1']
    #allocation5 [shape = 'u8[524288]{0}', space=vmem, size = 0x80000, scoped, tag = 'input window, operand 10, single buffered']
    #allocation6 [shape = 's32[1]{0}', space=sflag, size = 0x4, scoped, tag = 'scoped memory for bert_asc_forward.1']
    #allocation7 [shape = 'u8[524288]{0}', space=vmem, size = 0x80000, scoped, tag = 'input window, operand 12, single buffered']
    #allocation8 [shape = 'u8[1024]{0}', space=vmem, size = 0x400, scoped, tag = 'output window, operand 0, single buffered']
    %25 = vsyncpa [#allocation3], 0
    %26 = vsyncpa [#allocation6], 0
    %27 = vsyncpa [#allocation4], 0
    // Predicated region
    $region2: #{bert_asc_forward.1} parent=1 // pred_check
      _
    $region3: #{bert_asc_forward.1} parent=1 // pred_check_branch
      %29 = sbr.rel (0) target = $region5
    $region4: #{bert_asc_forward.1} parent=1 // pred_region
      _
    $region5: #{bert_asc_forward.1} parent=1 // pred_fallthru
      _
    // Predicated region
    $region6: #{bert_asc_forward.1} parent=1 // pred_check
      _
    $region7: #{bert_asc_forward.1} parent=1 // pred_check_branch
      %31 = sbr.rel (0) target = $region9
    $region8: #{bert_asc_forward.1} parent=1 // pred_region
      _
    $region9: #{bert_asc_forward.1} parent=1 // pred_fallthru
      _
    // Predicated region
    $region10: #{bert_asc_forward.1} parent=1 // pred_check
      _
    $region11: #{bert_asc_forward.1} parent=1 // pred_check_branch
      %33 = sbr.rel (0) target = $region13
    $region12: #{bert_asc_forward.1} parent=1 // pred_region
      _
    $region13: #{bert_asc_forward.1} parent=1 // pred_fallthru
      _
    // Predicated region
    $region14: #{bert_asc_forward.1} parent=1 // pred_check
      _
    $region15: #{bert_asc_forward.1} parent=1 // pred_check_branch
      %35 = sbr.rel (0) target = $region17
    $region16: #{bert_asc_forward.1} parent=1 // pred_region
      _
    $region17: #{bert_asc_forward.1} parent=1 // pred_fallthru
      _
    // Predicated region
    $region18: #{bert_asc_forward.1} parent=1 // pred_check
      _
    $region19: #{bert_asc_forward.1} parent=1 // pred_check_branch
      %37 = sbr.rel (0) target = $region21
    $region20: #{bert_asc_forward.1} parent=1 // pred_region
      %s39 = ssub.s32 12288, 12288
      %40 = vsyncadd [#allocation3], %s39
      %s41 = sshll.u32 [#allocation2], 4
      %s42 = int_to_ptr.vmem [resolvable:$true] %s41
      %47 = dma.hbm_to_vmem [thread:$0]  %s4, 12288, %s42, [#allocation3], 384, 384, 24
    $region21: #{bert_asc_forward.1} parent=1 // pred_fallthru
      _
    // Predicated region
    $region22: #{bert_asc_forward.1} parent=1 // pred_check
      _
    $region23: #{bert_asc_forward.1} parent=1 // pred_check_branch
      %49 = sbr.rel (0) target = $region25
    $region24: #{bert_asc_forward.1} parent=1 // pred_region
      _
    $region25: #{bert_asc_forward.1} parent=1 // pred_fallthru
      _
    // Predicated region
    $region26: #{bert_asc_forward.1} parent=1 // pred_check
      _
    $region27: #{bert_asc_forward.1} parent=1 // pred_check_branch
      %51 = sbr.rel (0) target = $region29
    $region28: #{bert_asc_forward.1} parent=1 // pred_region
      _
    $region29: #{bert_asc_forward.1} parent=1 // pred_fallthru
      _
    // Predicated region
    $region30: #{bert_asc_forward.1} parent=1 // pred_check
      _
    $region31: #{bert_asc_forward.1} parent=1 // pred_check_branch
      %53 = sbr.rel (0) target = $region33
    $region32: #{bert_asc_forward.1} parent=1 // pred_region
      _
    $region33: #{bert_asc_forward.1} parent=1 // pred_fallthru
      _
    // Predicated region
    $region34: #{bert_asc_forward.1} parent=1 // pred_check
      _
    $region35: #{bert_asc_forward.1} parent=1 // pred_check_branch
      %55 = sbr.rel (0) target = $region37
    $region36: #{bert_asc_forward.1} parent=1 // pred_region
      _
    $region37: #{bert_asc_forward.1} parent=1 // pred_fallthru
      _
    // Predicated region
    $region38: #{bert_asc_forward.1} parent=1 // pred_check
      _
    $region39: #{bert_asc_forward.1} parent=1 // pred_check_branch
      %57 = sbr.rel (0) target = $region41
    $region40: #{bert_asc_forward.1} parent=1 // pred_region
      _
    $region41: #{bert_asc_forward.1} parent=1 // pred_fallthru
      _
    // Predicated region
    $region42: #{bert_asc_forward.1} parent=1 // pred_check
      _
    $region43: #{bert_asc_forward.1} parent=1 // pred_check_branch
      %59 = sbr.rel (0) target = $region45
    $region44: #{bert_asc_forward.1} parent=1 // pred_region
      %s61 = ssub.s32 16384, 16384
      %62 = vsyncadd [#allocation6], %s61
      %s63 = sshll.u32 [#allocation5], 4
      %s64 = int_to_ptr.vmem [resolvable:$true] %s63
      %69 = dma.hbm_to_vmem [thread:$0]  %s10, 16384, %s64, [#allocation6], 512, 512, 32
    $region45: #{bert_asc_forward.1} parent=1 // pred_fallthru
      _
    // Predicated region
    $region46: #{bert_asc_forward.1} parent=1 // pred_check
      _
    $region47: #{bert_asc_forward.1} parent=1 // pred_check_branch
      %71 = sbr.rel (0) target = $region49
    $region48: #{bert_asc_forward.1} parent=1 // pred_region
      _
    $region49: #{bert_asc_forward.1} parent=1 // pred_fallthru
      _
    // Predicated region
    $region50: #{bert_asc_forward.1} parent=1 // pred_check
      _
    $region51: #{bert_asc_forward.1} parent=1 // pred_check_branch
      %73 = sbr.rel (0) target = $region53
    $region52: #{bert_asc_forward.1} parent=1 // pred_region
      %s75 = ssub.s32 16384, 16384
      %76 = vsyncadd [#allocation6], %s75
      %s77 = sshll.u32 [#allocation7], 4
      %s78 = int_to_ptr.vmem [resolvable:$true] %s77
      %83 = dma.hbm_to_vmem [thread:$0]  %s12, 16384, %s78, [#allocation6], 128, 128, 8
    $region53: #{bert_asc_forward.1} parent=1 // pred_fallthru
      _
    // Predicated region
    $region54: #{bert_asc_forward.1} parent=1 // pred_check
      _
    $region55: #{bert_asc_forward.1} parent=1 // pred_check_branch
      %85 = sbr.rel (0) target = $region57
    $region56: #{bert_asc_forward.1} parent=1 // pred_region
      _
    $region57: #{bert_asc_forward.1} parent=1 // pred_fallthru
      _
    // Predicated region
    $region58: #{bert_asc_forward.1} parent=1 // pred_check
      _
    $region59: #{bert_asc_forward.1} parent=1 // pred_check_branch
      %87 = sbr.rel (0) target = $region61
    $region60: #{bert_asc_forward.1} parent=1 // pred_region
      _
    $region61: #{bert_asc_forward.1} parent=1 // pred_fallthru
      _
    // Predicated region
    $region62: #{bert_asc_forward.1} parent=1 // pred_check
      _
    $region63: #{bert_asc_forward.1} parent=1 // pred_check_branch
      %89 = sbr.rel (0) target = $region65
    $region64: #{bert_asc_forward.1} parent=1 // pred_region
      _
    $region65: #{bert_asc_forward.1} parent=1 // pred_fallthru
      _
    // Predicated region
    $region66: #{bert_asc_forward.1} parent=1 // pred_check
      _
    $region67: #{bert_asc_forward.1} parent=1 // pred_check_branch
      %91 = sbr.rel (0) target = $region69
    $region68: #{bert_asc_forward.1} parent=1 // pred_region
      _
    $region69: #{bert_asc_forward.1} parent=1 // pred_fallthru
      _
    // Predicated region
    $region70: #{bert_asc_forward.1} parent=1 // pred_check
      _
    $region71: #{bert_asc_forward.1} parent=1 // pred_check_branch
      %93 = sbr.rel (0) target = $region73
    $region72: #{bert_asc_forward.1} parent=1 // pred_region
      _
    $region73: #{bert_asc_forward.1} parent=1 // pred_fallthru
      _
    // Predicated region
    $region74: #{bert_asc_forward.1} parent=1 // pred_check
      _
    $region75: #{bert_asc_forward.1} parent=1 // pred_check_branch
      %95 = sbr.rel (0) target = $region77
    $region76: #{bert_asc_forward.1} parent=1 // pred_region
      _
    $region77: #{bert_asc_forward.1} parent=1 // pred_fallthru
      _
    // Predicated region
    $region78: #{bert_asc_forward.1} parent=1 // pred_check
      _
    $region79: #{bert_asc_forward.1} parent=1 // pred_check_branch
      %97 = sbr.rel (0) target = $region81
    $region80: #{bert_asc_forward.1} parent=1 // pred_region
      _
    $region81: #{bert_asc_forward.1} parent=1 // pred_fallthru
      _
    // Predicated region
    $region82: #{bert_asc_forward.1} parent=1 // pred_check
      _
    $region83: #{bert_asc_forward.1} parent=1 // pred_check_branch
      %99 = sbr.rel (0) target = $region85
    $region84: #{bert_asc_forward.1} parent=1 // pred_region
      %100 = dma.done [#allocation3], 12288
    $region85: #{bert_asc_forward.1} parent=1 // pred_fallthru
      _
    // Predicated region
    $region86: #{bert_asc_forward.1} parent=1 // pred_check
      _
    $region87: #{bert_asc_forward.1} parent=1 // pred_check_branch
      %102 = sbr.rel (0) target = $region89
    $region88: #{bert_asc_forward.1} parent=1 // pred_region
      %103 = dma.done [#allocation6], 16384
    $region89: #{bert_asc_forward.1} parent=1 // pred_fallthru
      _
    // Predicated region
    $region90: #{bert_asc_forward.1} parent=1 // pred_check
      _
    $region91: #{bert_asc_forward.1} parent=1 // pred_check_branch
      %105 = sbr.rel (0) target = $region93
    $region92: #{bert_asc_forward.1} parent=1 // pred_region
      %106 = dma.done [#allocation6], 16384
    $region93: #{bert_asc_forward.1} parent=1 // pred_fallthru
      _
    %v108 = vld [vmem:[%s0] sm:$0xff]
    %v109 = vld [vmem:[%s0 + $0x8] sm:$0xff]
    %v110 = vld [vmem:[%s2] sm:$0x1]
    %v111 = vld [vmem:[%s3] sm:$0x1]
    %112 = vadd.xlane.f32.xlu0 %v108
    %v113 = vpop.xlane.xlu0 %112
    %114 = vadd.xlane.f32.xlu0 %v109
    %v115 = vpop.xlane.xlu0 %114
    %v116 = vrcp.pop 128.0
    %v117 = vmul.f32 %v113, %v116
    %v118 = vmul.f32 %v115, %v116
    %v119 = vsub.f32 %v108, %v117
    %v120 = vsub.f32 %v109, %v118
    %v121 = vmul.f32 %v119, %v119
    %v122 = vmul.f32 %v120, %v120
    %123 = vadd.xlane.f32.xlu0 %v121
    %v124 = vpop.xlane.xlu0 %123
    %125 = vadd.xlane.f32.xlu0 %v122
    %v126 = vpop.xlane.xlu0 %125
    %v127 = vmul.f32 %v124, %v116
    %v128 = vmul.f32 %v126, %v116
    %v129 = vadd.f32 %v127, 1e-12
    %v130 = vadd.f32 %v128, 1e-12
    %v131 = vrsqrt.pop %v129
    %v132 = vrsqrt.pop %v130
    %v133 = vmul.f32 %v119, %v131
    %v134 = vmul.f32 %v120, %v132
    %v136 = vlaneseq
    %v137 = vshrl.u32 %v136, 7
    %v138 = vsub.s32 0, %v137
    %v139 = vrot.slane %v110, %v138
    %v141 = vmul.f32 %v133, %v139
    %v142 = vmul.f32 %v134, %v139
    %v144 = vlaneseq
    %v145 = vshrl.u32 %v144, 7
    %v146 = vsub.s32 0, %v145
    %v147 = vrot.slane %v111, %v146
    %v149 = vadd.f32 %v141, %v147
    %v150 = vadd.f32 %v142, %v147
    %v151 = vld [vmem:[%s1] sm:$0xff]
    %v152 = vld [vmem:[%s1 + $0x8] sm:$0xff]
    %v153 = vld [vmem:[%s1 + $0x10] sm:$0xff]
    %v154 = vld [vmem:[%s1 + $0x18] sm:$0xff]
    %v155 = vld [vmem:[#allocation2] sm:$0xff]
    %v156 = vld [vmem:[#allocation2 + $0x8] sm:$0xff]
    %v157 = vld [vmem:[#allocation2 + $0x10] sm:$0xff]
    %v158 = vld [vmem:[#allocation2 + $0x18] sm:$0xff]
    %v159 = vld [vmem:[#allocation2 + $0x20] sm:$0xff]
    %v160 = vld [vmem:[#allocation2 + $0x28] sm:$0xff]
    %v161 = vld [vmem:[#allocation2 + $0x30] sm:$0xff]
    %v162 = vld [vmem:[#allocation2 + $0x38] sm:$0xff]
    %v163 = vld [vmem:[#allocation2 + $0x40] sm:$0xff]
    %v164 = vld [vmem:[#allocation2 + $0x48] sm:$0xff]
    %v165 = vld [vmem:[#allocation2 + $0x50] sm:$0xff]
    %v166 = vld [vmem:[#allocation2 + $0x58] sm:$0xff]
    %v167 = vld [vmem:[#allocation2 + $0x60] sm:$0xff]
    %v168 = vld [vmem:[#allocation2 + $0x68] sm:$0xff]
    %v169 = vld [vmem:[#allocation2 + $0x70] sm:$0xff]
    %v170 = vld [vmem:[#allocation2 + $0x78] sm:$0xff]
    %v171 = vld [vmem:[#allocation2 + $0x80] sm:$0xff]
    %v172 = vld [vmem:[#allocation2 + $0x88] sm:$0xff]
    %v173 = vld [vmem:[#allocation2 + $0x90] sm:$0xff]
    %v174 = vld [vmem:[#allocation2 + $0x98] sm:$0xff]
    %v175 = vld [vmem:[#allocation2 + $0xa0] sm:$0xff]
    %v176 = vld [vmem:[#allocation2 + $0xa8] sm:$0xff]
    %v177 = vld [vmem:[#allocation2 + $0xb0] sm:$0xff]
    %v178 = vld [vmem:[#allocation2 + $0xb8] sm:$0xff]
    %v179 = vld [vmem:[#allocation2 + $0xc0] sm:$0xff]
    %v180 = vld [vmem:[#allocation2 + $0xc8] sm:$0xff]
    %v181 = vld [vmem:[#allocation2 + $0xd0] sm:$0xff]
    %v182 = vld [vmem:[#allocation2 + $0xd8] sm:$0xff]
    %v183 = vld [vmem:[#allocation2 + $0xe0] sm:$0xff]
    %v184 = vld [vmem:[#allocation2 + $0xe8] sm:$0xff]
    %v185 = vld [vmem:[#allocation2 + $0xf0] sm:$0xff]
    %v186 = vld [vmem:[#allocation2 + $0xf8] sm:$0xff]
    %v187 = vld [vmem:[#allocation2 + $0x100] sm:$0xff]
    %v188 = vld [vmem:[#allocation2 + $0x108] sm:$0xff]
    %v189 = vld [vmem:[#allocation2 + $0x110] sm:$0xff]
    %v190 = vld [vmem:[#allocation2 + $0x118] sm:$0xff]
    %v191 = vld [vmem:[#allocation2 + $0x120] sm:$0xff]
    %v192 = vld [vmem:[#allocation2 + $0x128] sm:$0xff]
    %v193 = vld [vmem:[#allocation2 + $0x130] sm:$0xff]
    %v194 = vld [vmem:[#allocation2 + $0x138] sm:$0xff]
    %v195 = vld [vmem:[#allocation2 + $0x140] sm:$0xff]
    %v196 = vld [vmem:[#allocation2 + $0x148] sm:$0xff]
    %v197 = vld [vmem:[#allocation2 + $0x150] sm:$0xff]
    %v198 = vld [vmem:[#allocation2 + $0x158] sm:$0xff]
    %v199 = vld [vmem:[#allocation2 + $0x160] sm:$0xff]
    %v200 = vld [vmem:[#allocation2 + $0x168] sm:$0xff]
    %v201 = vld [vmem:[#allocation2 + $0x170] sm:$0xff]
    %v202 = vld [vmem:[#allocation2 + $0x178] sm:$0xff]
    %v203 = vpack.c.bf16 %v150, %v149
    %v204 = vpack.c.bf16 %v158, %v155
    %v205 = vpack.c.bf16 %v159, %v156
    %v206 = vpack.c.bf16 %v160, %v157
    %v207 = vpack.c.bf16 %v164, %v161
    %v208 = vpack.c.bf16 %v165, %v162
    %v209 = vpack.c.bf16 %v166, %v163
    %v210 = vpack.c.bf16 %v170, %v167
    %v211 = vpack.c.bf16 %v171, %v168
    %v212 = vpack.c.bf16 %v172, %v169
    %v213 = vpack.c.bf16 %v176, %v173
    %v214 = vpack.c.bf16 %v177, %v174
    %v215 = vpack.c.bf16 %v178, %v175
    %v216 = vpack.c.bf16 %v182, %v179
    %v217 = vpack.c.bf16 %v183, %v180
    %v218 = vpack.c.bf16 %v184, %v181
    %v219 = vpack.c.bf16 %v188, %v185
    %v220 = vpack.c.bf16 %v189, %v186
    %v221 = vpack.c.bf16 %v190, %v187
    %v222 = vpack.c.bf16 %v194, %v191
    %v223 = vpack.c.bf16 %v195, %v192
    %v224 = vpack.c.bf16 %v196, %v193
    %v225 = vpack.c.bf16 %v200, %v197
    %v226 = vpack.c.bf16 %v201, %v198
    %v227 = vpack.c.bf16 %v202, %v199
    %v228 = vld [vmem:[%s5] sm:$0x7]
    %v230 = vlaneseq
    %v231 = vshrl.u32 %v230, 7
    %v232 = vsub.s32 0, %v231
    %v233 = vrot.slane %v228, %v232
    %v234 = vlaneseq
    %v235 = vshrl.u32 %v234, 7
    %v236 = vsub.s32 1, %v235
    %v237 = vrot.slane %v228, %v236
    %v238 = vlaneseq
    %v239 = vshrl.u32 %v238, 7
    %v240 = vsub.s32 2, %v239
    %v241 = vrot.slane %v228, %v240
    %245 = vmatprep.subr.bf16.mxu0 %v205
    %246 = vmatpush1.bf16.msra.mxu0 %v204
    %247 = vmatprep.subr.bf16.mxu0 %v208
    %248 = vmatpush1.bf16.msra.mxu0 %v207
    %249 = vmatprep.subr.bf16.mxu0 %v211
    %250 = vmatpush1.bf16.msra.mxu0 %v210
    %251 = vmatprep.subr.bf16.mxu0 %v214
    %252 = vmatpush1.bf16.msra.mxu0 %v213
    %253 = vmatprep.subr.bf16.mxu0 %v217
    %254 = vmatpush1.bf16.msra.mxu0 %v216
    %255 = vmatprep.subr.bf16.mxu0 %v220
    %256 = vmatpush1.bf16.msra.mxu0 %v219
    %257 = vmatprep.subr.bf16.mxu0 %v223
    %258 = vmatpush1.bf16.msra.mxu0 %v222
    %259 = vmatprep.subr.bf16.mxu0 %v226
    %260 = vmatpush1.bf16.msra.mxu0 %v225
    %261 = vmatprep.subr.bf16.mxu0 0
    %262 = vmatpush1.bf16.msra.mxu0 0
    %263 = vmatprep.subr.bf16.mxu0 0
    %264 = vmatpush1.bf16.msra.mxu0 0
    %265 = vmatprep.subr.bf16.mxu0 0
    %266 = vmatpush1.bf16.msra.mxu0 0
    %267 = vmatprep.subr.bf16.mxu0 0
    %268 = vmatpush1.bf16.msra.mxu0 0
    %269 = vmatprep.subr.bf16.mxu0 0
    %270 = vmatpush1.bf16.msra.mxu0 0
    %271 = vmatprep.subr.bf16.mxu0 0
    %272 = vmatpush1.bf16.msra.mxu0 0
    %273 = vmatprep.subr.bf16.mxu0 0
    %274 = vmatpush1.bf16.msra.mxu0 0
    %275 = vmatprep.subr.bf16.mxu0 0
    %276 = vmatpush1.bf16.msra.mxu0 0
    %277 = vmatprep.mubr.bf16.mxu0 0
    %278 = vmatmul.mubr.bf16.gmra.mrb[0].mxu0 %v203
    %v279 = vpop.f32.mrb[0].mxu0
    %v280 = vadd.f32 %v233, %v279
    %v281 = vpop.f32.mrb[0].mxu0
    %v282 = vadd.f32 %v237, %v281
    %v283 = vpop.f32.mrb[0].mxu0
    %v284 = vadd.f32 %v233, %v283
    %v285 = vpop.f32.mrb[0].mxu0
    %v286 = vadd.f32 %v237, %v285
    %287 = vdwg.mxu0
    %288 = vmatprep.subr.bf16.mxu0 0
    %289 = vmatpush1.bf16.msra.mxu0 %v206
    %290 = vmatprep.subr.bf16.mxu0 0
    %291 = vmatpush1.bf16.msra.mxu0 %v209
    %292 = vmatprep.subr.bf16.mxu0 0
    %293 = vmatpush1.bf16.msra.mxu0 %v212
    %294 = vmatprep.subr.bf16.mxu0 0
    %295 = vmatpush1.bf16.msra.mxu0 %v215
    %296 = vmatprep.subr.bf16.mxu0 0
    %297 = vmatpush1.bf16.msra.mxu0 %v218
    %298 = vmatprep.subr.bf16.mxu0 0
    %299 = vmatpush1.bf16.msra.mxu0 %v221
    %300 = vmatprep.subr.bf16.mxu0 0
    %301 = vmatpush1.bf16.msra.mxu0 %v224
    %302 = vmatprep.subr.bf16.mxu0 0
    %303 = vmatpush1.bf16.msra.mxu0 %v227
    %304 = vmatprep.subr.bf16.mxu0 0
    %305 = vmatpush1.bf16.msra.mxu0 0
    %306 = vmatprep.subr.bf16.mxu0 0
    %307 = vmatpush1.bf16.msra.mxu0 0
    %308 = vmatprep.subr.bf16.mxu0 0
    %309 = vmatpush1.bf16.msra.mxu0 0
    %310 = vmatprep.subr.bf16.mxu0 0
    %311 = vmatpush1.bf16.msra.mxu0 0
    %312 = vmatprep.subr.bf16.mxu0 0
    %313 = vmatpush1.bf16.msra.mxu0 0
    %314 = vmatprep.subr.bf16.mxu0 0
    %315 = vmatpush1.bf16.msra.mxu0 0
    %316 = vmatprep.subr.bf16.mxu0 0
    %317 = vmatpush1.bf16.msra.mxu0 0
    %318 = vmatprep.subr.bf16.mxu0 0
    %319 = vmatpush1.bf16.msra.mxu0 0
    %320 = vmatprep.mubr.bf16.mxu0 0
    %321 = vmatmul.mubr.bf16.gmra.mrb[0].mxu0 %v203
    %v322 = vpop.f32.mrb[0].mxu0
    %v323 = vadd.f32 %v241, %v322
    %v324 = vpop.f32.mrb[0].mxu0
    %v325 = vpop.f32.mrb[0].mxu0
    %v326 = vadd.f32 %v241, %v325
    %v327 = vpop.f32.mrb[0].mxu0
    %328 = vdwg.mxu0
    %330 = vrot.lane.b32.xlu0 %v280, 64
    %v331 = vpop.permute.xlu0 %330
    %334 = vrot.lane.b32.xlu0 %v284, 64
    %v335 = vpop.permute.xlu0 %334
    %338 = vrot.lane.b32.xlu0 %v282, 64
    %v339 = vpop.permute.xlu0 %338
    %342 = vrot.lane.b32.xlu0 %v286, 64
    %v343 = vpop.permute.xlu0 %342
    %346 = vrot.lane.b32.xlu0 %v323, 64
    %v347 = vpop.permute.xlu0 %346
    %350 = vrot.lane.b32.xlu0 %v326, 64
    %v351 = vpop.permute.xlu0 %350
    %v353 = vpack.c.bf16 %v331, %v280
    %v354 = vpack.c.bf16 %v335, %v284
    %v355 = vpack.c.bf16 %v339, %v282
    %v356 = vpack.c.bf16 %v343, %v286
    %vm357 = vcmask 523264
    %v359 = vsel %vm357, %v353, 0
    %v362 = vsel %vm357, %v354, 0
    %v365 = vsel %vm357, %v355, 0
    %v368 = vsel %vm357, %v356, 0
    %370 = vmatprep.subr.bf16.mxu0 0
    %371 = vmatpush1.bf16.xpose.msra.mxu0 %v365
    %372 = vmatprep.subr.bf16.mxu0 0
    %373 = vmatpush1.bf16.xpose.msra.mxu0 %v368
    %374 = vmatprep.subr.bf16.mxu0 0
    %375 = vmatpush1.bf16.xpose.msra.mxu0 0
    %376 = vmatprep.subr.bf16.mxu0 0
    %377 = vmatpush1.bf16.xpose.msra.mxu0 0
    %378 = vmatprep.subr.bf16.mxu0 0
    %379 = vmatpush1.bf16.xpose.msra.mxu0 0
    %380 = vmatprep.subr.bf16.mxu0 0
    %381 = vmatpush1.bf16.xpose.msra.mxu0 0
    %382 = vmatprep.subr.bf16.mxu0 0
    %383 = vmatpush1.bf16.xpose.msra.mxu0 0
    %384 = vmatprep.subr.bf16.mxu0 0
    %385 = vmatpush1.bf16.xpose.msra.mxu0 0
    %386 = vmatprep.subr.bf16.mxu0 0
    %387 = vmatpush1.bf16.xpose.msra.mxu0 0
    %388 = vmatprep.subr.bf16.mxu0 0
    %389 = vmatpush1.bf16.xpose.msra.mxu0 0
    %390 = vmatprep.subr.bf16.mxu0 0
    %391 = vmatpush1.bf16.xpose.msra.mxu0 0
    %392 = vmatprep.subr.bf16.mxu0 0
    %393 = vmatpush1.bf16.xpose.msra.mxu0 0
    %394 = vmatprep.subr.bf16.mxu0 0
    %395 = vmatpush1.bf16.xpose.msra.mxu0 0
    %396 = vmatprep.subr.bf16.mxu0 0
    %397 = vmatpush1.bf16.xpose.msra.mxu0 0
    %398 = vmatprep.subr.bf16.mxu0 0
    %399 = vmatpush1.bf16.xpose.msra.mxu0 0
    %400 = vmatprep.subr.bf16.mxu0 0
    %401 = vmatpush1.bf16.xpose.msra.mxu0 0
    %402 = vmatprep.mubr.bf16.mxu0 0
    %403 = vmatmul.mubr.bf16.gmra.mrb[0].mxu0 %v359
    %v404 = vpop.f32.mrb[0].mxu0
    %v405 = vadd.f32 0.0, %v404
    %v406 = vpop.f32.mrb[0].mxu0
    %v407 = vpop.f32.mrb[0].mxu0
    %v408 = vadd.f32 0.0, %v407
    %v409 = vpop.f32.mrb[0].mxu0
    %410 = vmatprep.mubr.bf16.mxu0 0
    %411 = vmatmul.mubr.bf16.gmra.mrb[0].mxu0 %v362
    %v412 = vpop.f32.mrb[0].mxu0
    %v413 = vadd.f32 0.0, %v412
    %v414 = vpop.f32.mrb[0].mxu0
    %v415 = vpop.f32.mrb[0].mxu0
    %v416 = vadd.f32 0.0, %v415
    %v417 = vpop.f32.mrb[0].mxu0
    %418 = vdwg.mxu0
    %v419 = vmul.f32 %v405, 0.125
    %v420 = vmul.f32 %v408, 0.125
    %v421 = vmul.f32 %v413, 0.125
    %v422 = vmul.f32 %v416, 0.125
    %v423 = vadd.f32 %v419, %v151
    %v424 = vadd.f32 %v420, %v152
    %v425 = vadd.f32 %v421, %v153
    %v426 = vadd.f32 %v422, %v154
    %vm427 = vcmask 261120
    %v428 = vsel %vm427, %v423, -inf
    %429 = vmax.xlane.f32.xlu0 %v428
    %v430 = vpop.xlane.xlu0 %429
    %v431 = vsel %vm427, %v424, -inf
    %432 = vmax.xlane.f32.xlu0 %v431
    %v433 = vpop.xlane.xlu0 %432
    %v434 = vsel %vm427, %v425, -inf
    %435 = vmax.xlane.f32.xlu0 %v434
    %v436 = vpop.xlane.xlu0 %435
    %v437 = vsel %vm427, %v426, -inf
    %438 = vmax.xlane.f32.xlu0 %v437
    %v439 = vpop.xlane.xlu0 %438
    %v440 = vsub.f32 %v423, %v430
    %v441 = vsub.f32 %v424, %v433
    %v442 = vsub.f32 %v425, %v436
    %v443 = vsub.f32 %v426, %v439
    %v444 = vmul.f32 %v440, 1.442695
    %v445 = vpow.pop %v444
    %v446 = vmul.f32 %v441, 1.442695
    %v447 = vpow.pop %v446
    %v448 = vmul.f32 %v442, 1.442695
    %v449 = vpow.pop %v448
    %v450 = vmul.f32 %v443, 1.442695
    %v451 = vpow.pop %v450
    %v452 = vsel %vm427, %v445, 0.0
    %453 = vadd.xlane.f32.xlu0 %v452
    %v454 = vpop.xlane.xlu0 %453
    %v455 = vsel %vm427, %v447, 0.0
    %456 = vadd.xlane.f32.xlu0 %v455
    %v457 = vpop.xlane.xlu0 %456
    %v458 = vsel %vm427, %v449, 0.0
    %459 = vadd.xlane.f32.xlu0 %v458
    %v460 = vpop.xlane.xlu0 %459
    %v461 = vsel %vm427, %v451, 0.0
    %462 = vadd.xlane.f32.xlu0 %v461
    %v463 = vpop.xlane.xlu0 %462
    %v464 = vrcp.pop %v454
    %v465 = vrcp.pop %v457
    %v466 = vrcp.pop %v460
    %v467 = vrcp.pop %v463
    %v468 = vmul.f32 %v445, %v464
    %v469 = vmul.f32 %v447, %v465
    %v470 = vmul.f32 %v449, %v466
    %v471 = vmul.f32 %v451, %v467
    %v472 = vpack.c.bf16 %v469, %v468
    %v473 = vpack.c.bf16 %v471, %v470
    %v474 = vpack.c.bf16 %v347, %v323
    %v475 = vpack.c.bf16 %v351, %v326
    %v477 = vsel %vm427, %v472, 0
    %v480 = vsel %vm427, %v473, 0
    %482 = vmatprep.subr.bf16.mxu0 0
    %483 = vmatpush1.bf16.msra.mxu0 %v474
    %484 = vmatprep.subr.bf16.mxu0 0
    %485 = vmatpush1.bf16.msra.mxu0 %v475
    %486 = vmatprep.subr.bf16.mxu0 0
    %487 = vmatpush1.bf16.msra.mxu0 0
    %488 = vmatprep.subr.bf16.mxu0 0
    %489 = vmatpush1.bf16.msra.mxu0 0
    %490 = vmatprep.subr.bf16.mxu0 0
    %491 = vmatpush1.bf16.msra.mxu0 0
    %492 = vmatprep.subr.bf16.mxu0 0
    %493 = vmatpush1.bf16.msra.mxu0 0
    %494 = vmatprep.subr.bf16.mxu0 0
    %495 = vmatpush1.bf16.msra.mxu0 0
    %496 = vmatprep.subr.bf16.mxu0 0
    %497 = vmatpush1.bf16.msra.mxu0 0
    %498 = vmatprep.subr.bf16.mxu0 0
    %499 = vmatpush1.bf16.msra.mxu0 0
    %500 = vmatprep.subr.bf16.mxu0 0
    %501 = vmatpush1.bf16.msra.mxu0 0
    %502 = vmatprep.subr.bf16.mxu0 0
    %503 = vmatpush1.bf16.msra.mxu0 0
    %504 = vmatprep.subr.bf16.mxu0 0
    %505 = vmatpush1.bf16.msra.mxu0 0
    %506 = vmatprep.subr.bf16.mxu0 0
    %507 = vmatpush1.bf16.msra.mxu0 0
    %508 = vmatprep.subr.bf16.mxu0 0
    %509 = vmatpush1.bf16.msra.mxu0 0
    %510 = vmatprep.subr.bf16.mxu0 0
    %511 = vmatpush1.bf16.msra.mxu0 0
    %512 = vmatprep.subr.bf16.mxu0 0
    %513 = vmatpush1.bf16.msra.mxu0 0
    %514 = vmatprep.mubr.bf16.mxu0 0
    %515 = vmatmul.mubr.bf16.gmra.mrb[0].mxu0 %v477
    %v516 = vpop.f32.mrb[0].mxu0
    %v517 = vadd.f32 0.0, %v516
    %v518 = vpop.f32.mrb[0].mxu0
    %v519 = vpop.f32.mrb[0].mxu0
    %v520 = vadd.f32 0.0, %v519
    %v521 = vpop.f32.mrb[0].mxu0
    %522 = vmatprep.mubr.bf16.mxu0 0
    %523 = vmatmul.mubr.bf16.gmra.mrb[0].mxu0 %v480
    %v524 = vpop.f32.mrb[0].mxu0
    %v525 = vadd.f32 0.0, %v524
    %v526 = vpop.f32.mrb[0].mxu0
    %v527 = vpop.f32.mrb[0].mxu0
    %v528 = vadd.f32 0.0, %v527
    %v529 = vpop.f32.mrb[0].mxu0
    %530 = vdwg.mxu0
    %532 = vrot.lane.b32.xlu0 %v520, 64
    %v533 = vpop.permute.xlu0 %532
    %v535 = vsel %vm357, %v517, %v533
    %537 = vrot.lane.b32.xlu0 %v528, 64
    %v538 = vpop.permute.xlu0 %537
    %v540 = vsel %vm357, %v525, %v538
    %v541 = vld [vmem:[%s6] sm:$0xff]
    %v542 = vld [vmem:[%s6 + $0x8] sm:$0xff]
    %v543 = vld [vmem:[%s6 + $0x10] sm:$0xff]
    %v544 = vld [vmem:[%s6 + $0x18] sm:$0xff]
    %v545 = vld [vmem:[%s6 + $0x20] sm:$0xff]
    %v546 = vld [vmem:[%s6 + $0x28] sm:$0xff]
    %v547 = vld [vmem:[%s6 + $0x30] sm:$0xff]
    %v548 = vld [vmem:[%s6 + $0x38] sm:$0xff]
    %v549 = vld [vmem:[%s6 + $0x40] sm:$0xff]
    %v550 = vld [vmem:[%s6 + $0x48] sm:$0xff]
    %v551 = vld [vmem:[%s6 + $0x50] sm:$0xff]
    %v552 = vld [vmem:[%s6 + $0x58] sm:$0xff]
    %v553 = vld [vmem:[%s6 + $0x60] sm:$0xff]
    %v554 = vld [vmem:[%s6 + $0x68] sm:$0xff]
    %v555 = vld [vmem:[%s6 + $0x70] sm:$0xff]
    %v556 = vld [vmem:[%s6 + $0x78] sm:$0xff]
    %v557 = vpack.c.bf16 %v540, %v535
    %v558 = vpack.c.bf16 %v542, %v541
    %v559 = vpack.c.bf16 %v544, %v543
    %v560 = vpack.c.bf16 %v546, %v545
    %v561 = vpack.c.bf16 %v548, %v547
    %v562 = vpack.c.bf16 %v550, %v549
    %v563 = vpack.c.bf16 %v552, %v551
    %v564 = vpack.c.bf16 %v554, %v553
    %v565 = vpack.c.bf16 %v556, %v555
    %v566 = vld [vmem:[%s7] sm:$0x1]
    %v568 = vlaneseq
    %v569 = vshrl.u32 %v568, 7
    %v570 = vsub.s32 0, %v569
    %v571 = vrot.slane %v566, %v570
    %573 = vmatprep.subr.bf16.mxu0 0
    %574 = vmatpush1.bf16.msra.mxu0 %v558
    %575 = vmatprep.subr.bf16.mxu0 0
    %576 = vmatpush1.bf16.msra.mxu0 %v559
    %577 = vmatprep.subr.bf16.mxu0 0
    %578 = vmatpush1.bf16.msra.mxu0 %v560
    %579 = vmatprep.subr.bf16.mxu0 0
    %580 = vmatpush1.bf16.msra.mxu0 %v561
    %581 = vmatprep.subr.bf16.mxu0 0
    %582 = vmatpush1.bf16.msra.mxu0 %v562
    %583 = vmatprep.subr.bf16.mxu0 0
    %584 = vmatpush1.bf16.msra.mxu0 %v563
    %585 = vmatprep.subr.bf16.mxu0 0
    %586 = vmatpush1.bf16.msra.mxu0 %v564
    %587 = vmatprep.subr.bf16.mxu0 0
    %588 = vmatpush1.bf16.msra.mxu0 %v565
    %589 = vmatprep.subr.bf16.mxu0 0
    %590 = vmatpush1.bf16.msra.mxu0 0
    %591 = vmatprep.subr.bf16.mxu0 0
    %592 = vmatpush1.bf16.msra.mxu0 0
    %593 = vmatprep.subr.bf16.mxu0 0
    %594 = vmatpush1.bf16.msra.mxu0 0
    %595 = vmatprep.subr.bf16.mxu0 0
    %596 = vmatpush1.bf16.msra.mxu0 0
    %597 = vmatprep.subr.bf16.mxu0 0
    %598 = vmatpush1.bf16.msra.mxu0 0
    %599 = vmatprep.subr.bf16.mxu0 0
    %600 = vmatpush1.bf16.msra.mxu0 0
    %601 = vmatprep.subr.bf16.mxu0 0
    %602 = vmatpush1.bf16.msra.mxu0 0
    %603 = vmatprep.subr.bf16.mxu0 0
    %604 = vmatpush1.bf16.msra.mxu0 0
    %605 = vmatprep.mubr.bf16.mxu0 0
    %606 = vmatmul.mubr.bf16.gmra.mrb[0].mxu0 %v557
    %v607 = vpop.f32.mrb[0].mxu0
    %v608 = vadd.f32 %v571, %v607
    %v609 = vpop.f32.mrb[0].mxu0
    %v610 = vpop.f32.mrb[0].mxu0
    %v611 = vadd.f32 %v571, %v610
    %v612 = vpop.f32.mrb[0].mxu0
    %613 = vdwg.mxu0
    %v614 = vadd.f32 %v608, %v149
    %v615 = vadd.f32 %v611, %v150
    %v616 = vld [vmem:[%s8] sm:$0x1]
    %v617 = vld [vmem:[%s9] sm:$0x1]
    %618 = vadd.xlane.f32.xlu0 %v614
    %v619 = vpop.xlane.xlu0 %618
    %620 = vadd.xlane.f32.xlu0 %v615
    %v621 = vpop.xlane.xlu0 %620
    %v622 = vmul.f32 %v619, %v116
    %v623 = vmul.f32 %v621, %v116
    %v624 = vsub.f32 %v614, %v622
    %v625 = vsub.f32 %v615, %v623
    %v626 = vmul.f32 %v624, %v624
    %v627 = vmul.f32 %v625, %v625
    %628 = vadd.xlane.f32.xlu0 %v626
    %v629 = vpop.xlane.xlu0 %628
    %630 = vadd.xlane.f32.xlu0 %v627
    %v631 = vpop.xlane.xlu0 %630
    %v632 = vmul.f32 %v629, %v116
    %v633 = vmul.f32 %v631, %v116
    %v634 = vadd.f32 %v632, 1e-12
    %v635 = vadd.f32 %v633, 1e-12
    %v636 = vrsqrt.pop %v634
    %v637 = vrsqrt.pop %v635
    %v638 = vmul.f32 %v624, %v636
    %v639 = vmul.f32 %v625, %v637
    %v641 = vlaneseq
    %v642 = vshrl.u32 %v641, 7
    %v643 = vsub.s32 0, %v642
    %v644 = vrot.slane %v616, %v643
    %v646 = vmul.f32 %v638, %v644
    %v647 = vmul.f32 %v639, %v644
    %v649 = vlaneseq
    %v650 = vshrl.u32 %v649, 7
    %v651 = vsub.s32 0, %v650
    %v652 = vrot.slane %v617, %v651
    %v654 = vadd.f32 %v646, %v652
    %v655 = vadd.f32 %v647, %v652
    %v656 = vld [vmem:[#allocation5] sm:$0xff]
    %v657 = vld [vmem:[#allocation5 + $0x8] sm:$0xff]
    %v658 = vld [vmem:[#allocation5 + $0x10] sm:$0xff]
    %v659 = vld [vmem:[#allocation5 + $0x18] sm:$0xff]
    %v660 = vld [vmem:[#allocation5 + $0x20] sm:$0xff]
    %v661 = vld [vmem:[#allocation5 + $0x28] sm:$0xff]
    %v662 = vld [vmem:[#allocation5 + $0x30] sm:$0xff]
    %v663 = vld [vmem:[#allocation5 + $0x38] sm:$0xff]
    %v664 = vld [vmem:[#allocation5 + $0x40] sm:$0xff]
    %v665 = vld [vmem:[#allocation5 + $0x48] sm:$0xff]
    %v666 = vld [vmem:[#allocation5 + $0x50] sm:$0xff]
    %v667 = vld [vmem:[#allocation5 + $0x58] sm:$0xff]
    %v668 = vld [vmem:[#allocation5 + $0x60] sm:$0xff]
    %v669 = vld [vmem:[#allocation5 + $0x68] sm:$0xff]
    %v670 = vld [vmem:[#allocation5 + $0x70] sm:$0xff]
    %v671 = vld [vmem:[#allocation5 + $0x78] sm:$0xff]
    %v672 = vld [vmem:[#allocation5 + $0x80] sm:$0xff]
    %v673 = vld [vmem:[#allocation5 + $0x88] sm:$0xff]
    %v674 = vld [vmem:[#allocation5 + $0x90] sm:$0xff]
    %v675 = vld [vmem:[#allocation5 + $0x98] sm:$0xff]
    %v676 = vld [vmem:[#allocation5 + $0xa0] sm:$0xff]
    %v677 = vld [vmem:[#allocation5 + $0xa8] sm:$0xff]
    %v678 = vld [vmem:[#allocation5 + $0xb0] sm:$0xff]
    %v679 = vld [vmem:[#allocation5 + $0xb8] sm:$0xff]
    %v680 = vld [vmem:[#allocation5 + $0xc0] sm:$0xff]
    %v681 = vld [vmem:[#allocation5 + $0xc8] sm:$0xff]
    %v682 = vld [vmem:[#allocation5 + $0xd0] sm:$0xff]
    %v683 = vld [vmem:[#allocation5 + $0xd8] sm:$0xff]
    %v684 = vld [vmem:[#allocation5 + $0xe0] sm:$0xff]
    %v685 = vld [vmem:[#allocation5 + $0xe8] sm:$0xff]
    %v686 = vld [vmem:[#allocation5 + $0xf0] sm:$0xff]
    %v687 = vld [vmem:[#allocation5 + $0xf8] sm:$0xff]
    %v688 = vld [vmem:[#allocation5 + $0x100] sm:$0xff]
    %v689 = vld [vmem:[#allocation5 + $0x108] sm:$0xff]
    %v690 = vld [vmem:[#allocation5 + $0x110] sm:$0xff]
    %v691 = vld [vmem:[#allocation5 + $0x118] sm:$0xff]
    %v692 = vld [vmem:[#allocation5 + $0x120] sm:$0xff]
    %v693 = vld [vmem:[#allocation5 + $0x128] sm:$0xff]
    %v694 = vld [vmem:[#allocation5 + $0x130] sm:$0xff]
    %v695 = vld [vmem:[#allocation5 + $0x138] sm:$0xff]
    %v696 = vld [vmem:[#allocation5 + $0x140] sm:$0xff]
    %v697 = vld [vmem:[#allocation5 + $0x148] sm:$0xff]
    %v698 = vld [vmem:[#allocation5 + $0x150] sm:$0xff]
    %v699 = vld [vmem:[#allocation5 + $0x158] sm:$0xff]
    %v700 = vld [vmem:[#allocation5 + $0x160] sm:$0xff]
    %v701 = vld [vmem:[#allocation5 + $0x168] sm:$0xff]
    %v702 = vld [vmem:[#allocation5 + $0x170] sm:$0xff]
    %v703 = vld [vmem:[#allocation5 + $0x178] sm:$0xff]
    %v704 = vld [vmem:[#allocation5 + $0x180] sm:$0xff]
    %v705 = vld [vmem:[#allocation5 + $0x188] sm:$0xff]
    %v706 = vld [vmem:[#allocation5 + $0x190] sm:$0xff]
    %v707 = vld [vmem:[#allocation5 + $0x198] sm:$0xff]
    %v708 = vld [vmem:[#allocation5 + $0x1a0] sm:$0xff]
    %v709 = vld [vmem:[#allocation5 + $0x1a8] sm:$0xff]
    %v710 = vld [vmem:[#allocation5 + $0x1b0] sm:$0xff]
    %v711 = vld [vmem:[#allocation5 + $0x1b8] sm:$0xff]
    %v712 = vld [vmem:[#allocation5 + $0x1c0] sm:$0xff]
    %v713 = vld [vmem:[#allocation5 + $0x1c8] sm:$0xff]
    %v714 = vld [vmem:[#allocation5 + $0x1d0] sm:$0xff]
    %v715 = vld [vmem:[#allocation5 + $0x1d8] sm:$0xff]
    %v716 = vld [vmem:[#allocation5 + $0x1e0] sm:$0xff]
    %v717 = vld [vmem:[#allocation5 + $0x1e8] sm:$0xff]
    %v718 = vld [vmem:[#allocation5 + $0x1f0] sm:$0xff]
    %v719 = vld [vmem:[#allocation5 + $0x1f8] sm:$0xff]
    %v720 = vpack.c.bf16 %v655, %v654
    %v721 = vpack.c.bf16 %v660, %v656
    %v722 = vpack.c.bf16 %v661, %v657
    %v723 = vpack.c.bf16 %v662, %v658
    %v724 = vpack.c.bf16 %v663, %v659
    %v725 = vpack.c.bf16 %v668, %v664
    %v726 = vpack.c.bf16 %v669, %v665
    %v727 = vpack.c.bf16 %v670, %v666
    %v728 = vpack.c.bf16 %v671, %v667
    %v729 = vpack.c.bf16 %v676, %v672
    %v730 = vpack.c.bf16 %v677, %v673
    %v731 = vpack.c.bf16 %v678, %v674
    %v732 = vpack.c.bf16 %v679, %v675
    %v733 = vpack.c.bf16 %v684, %v680
    %v734 = vpack.c.bf16 %v685, %v681
    %v735 = vpack.c.bf16 %v686, %v682
    %v736 = vpack.c.bf16 %v687, %v683
    %v737 = vpack.c.bf16 %v692, %v688
    %v738 = vpack.c.bf16 %v693, %v689
    %v739 = vpack.c.bf16 %v694, %v690
    %v740 = vpack.c.bf16 %v695, %v691
    %v741 = vpack.c.bf16 %v700, %v696
    %v742 = vpack.c.bf16 %v701, %v697
    %v743 = vpack.c.bf16 %v702, %v698
    %v744 = vpack.c.bf16 %v703, %v699
    %v745 = vpack.c.bf16 %v708, %v704
    %v746 = vpack.c.bf16 %v709, %v705
    %v747 = vpack.c.bf16 %v710, %v706
    %v748 = vpack.c.bf16 %v711, %v707
    %v749 = vpack.c.bf16 %v716, %v712
    %v750 = vpack.c.bf16 %v717, %v713
    %v751 = vpack.c.bf16 %v718, %v714
    %v752 = vpack.c.bf16 %v719, %v715
    %v753 = vld [vmem:[%s11] sm:$0xf]
    %v755 = vlaneseq
    %v756 = vshrl.u32 %v755, 7
    %v757 = vsub.s32 0, %v756
    %v758 = vrot.slane %v753, %v757
    %v759 = vlaneseq
    %v760 = vshrl.u32 %v759, 7
    %v761 = vsub.s32 1, %v760
    %v762 = vrot.slane %v753, %v761
    %v763 = vlaneseq
    %v764 = vshrl.u32 %v763, 7
    %v765 = vsub.s32 2, %v764
    %v766 = vrot.slane %v753, %v765
    %v767 = vlaneseq
    %v768 = vshrl.u32 %v767, 7
    %v769 = vsub.s32 3, %v768
    %v770 = vrot.slane %v753, %v769
    %775 = vmatprep.subr.bf16.mxu0 %v722
    %776 = vmatpush1.bf16.msra.mxu0 %v721
    %777 = vmatprep.subr.bf16.mxu0 %v726
    %778 = vmatpush1.bf16.msra.mxu0 %v725
    %779 = vmatprep.subr.bf16.mxu0 %v730
    %780 = vmatpush1.bf16.msra.mxu0 %v729
    %781 = vmatprep.subr.bf16.mxu0 %v734
    %782 = vmatpush1.bf16.msra.mxu0 %v733
    %783 = vmatprep.subr.bf16.mxu0 %v738
    %784 = vmatpush1.bf16.msra.mxu0 %v737
    %785 = vmatprep.subr.bf16.mxu0 %v742
    %786 = vmatpush1.bf16.msra.mxu0 %v741
    %787 = vmatprep.subr.bf16.mxu0 %v746
    %788 = vmatpush1.bf16.msra.mxu0 %v745
    %789 = vmatprep.subr.bf16.mxu0 %v750
    %790 = vmatpush1.bf16.msra.mxu0 %v749
    %791 = vmatprep.subr.bf16.mxu0 0
    %792 = vmatpush1.bf16.msra.mxu0 0
    %793 = vmatprep.subr.bf16.mxu0 0
    %794 = vmatpush1.bf16.msra.mxu0 0
    %795 = vmatprep.subr.bf16.mxu0 0
    %796 = vmatpush1.bf16.msra.mxu0 0
    %797 = vmatprep.subr.bf16.mxu0 0
    %798 = vmatpush1.bf16.msra.mxu0 0
    %799 = vmatprep.subr.bf16.mxu0 0
    %800 = vmatpush1.bf16.msra.mxu0 0
    %801 = vmatprep.subr.bf16.mxu0 0
    %802 = vmatpush1.bf16.msra.mxu0 0
    %803 = vmatprep.subr.bf16.mxu0 0
    %804 = vmatpush1.bf16.msra.mxu0 0
    %805 = vmatprep.subr.bf16.mxu0 0
    %806 = vmatpush1.bf16.msra.mxu0 0
    %807 = vmatprep.mubr.bf16.mxu0 0
    %808 = vmatmul.mubr.bf16.gmra.mrb[0].mxu0 %v720
    %v809 = vpop.f32.mrb[0].mxu0
    %v810 = vadd.f32 %v758, %v809
    %v811 = vpop.f32.mrb[0].mxu0
    %v812 = vadd.f32 %v762, %v811
    %v813 = vpop.f32.mrb[0].mxu0
    %v814 = vadd.f32 %v758, %v813
    %v815 = vpop.f32.mrb[0].mxu0
    %v816 = vadd.f32 %v762, %v815
    %817 = vdwg.mxu0
    %818 = vmatprep.subr.bf16.mxu0 %v724
    %819 = vmatpush1.bf16.msra.mxu0 %v723
    %820 = vmatprep.subr.bf16.mxu0 %v728
    %821 = vmatpush1.bf16.msra.mxu0 %v727
    %822 = vmatprep.subr.bf16.mxu0 %v732
    %823 = vmatpush1.bf16.msra.mxu0 %v731
    %824 = vmatprep.subr.bf16.mxu0 %v736
    %825 = vmatpush1.bf16.msra.mxu0 %v735
    %826 = vmatprep.subr.bf16.mxu0 %v740
    %827 = vmatpush1.bf16.msra.mxu0 %v739
    %828 = vmatprep.subr.bf16.mxu0 %v744
    %829 = vmatpush1.bf16.msra.mxu0 %v743
    %830 = vmatprep.subr.bf16.mxu0 %v748
    %831 = vmatpush1.bf16.msra.mxu0 %v747
    %832 = vmatprep.subr.bf16.mxu0 %v752
    %833 = vmatpush1.bf16.msra.mxu0 %v751
    %834 = vmatprep.subr.bf16.mxu0 0
    %835 = vmatpush1.bf16.msra.mxu0 0
    %836 = vmatprep.subr.bf16.mxu0 0
    %837 = vmatpush1.bf16.msra.mxu0 0
    %838 = vmatprep.subr.bf16.mxu0 0
    %839 = vmatpush1.bf16.msra.mxu0 0
    %840 = vmatprep.subr.bf16.mxu0 0
    %841 = vmatpush1.bf16.msra.mxu0 0
    %842 = vmatprep.subr.bf16.mxu0 0
    %843 = vmatpush1.bf16.msra.mxu0 0
    %844 = vmatprep.subr.bf16.mxu0 0
    %845 = vmatpush1.bf16.msra.mxu0 0
    %846 = vmatprep.subr.bf16.mxu0 0
    %847 = vmatpush1.bf16.msra.mxu0 0
    %848 = vmatprep.subr.bf16.mxu0 0
    %849 = vmatpush1.bf16.msra.mxu0 0
    %850 = vmatprep.mubr.bf16.mxu0 0
    %851 = vmatmul.mubr.bf16.gmra.mrb[0].mxu0 %v720
    %v852 = vpop.f32.mrb[0].mxu0
    %v853 = vadd.f32 %v766, %v852
    %v854 = vpop.f32.mrb[0].mxu0
    %v855 = vadd.f32 %v770, %v854
    %v856 = vpop.f32.mrb[0].mxu0
    %v857 = vadd.f32 %v766, %v856
    %v858 = vpop.f32.mrb[0].mxu0
    %v859 = vadd.f32 %v770, %v858
    %860 = vdwg.mxu0
    %v861 = vmul.f32 %v810, 0.5
    %v862 = vmul.f32 %v812, 0.5
    %v863 = vmul.f32 %v853, 0.5
    %v864 = vmul.f32 %v855, 0.5
    %v865 = vmul.f32 %v814, 0.5
    %v866 = vmul.f32 %v816, 0.5
    %v867 = vmul.f32 %v857, 0.5
    %v868 = vmul.f32 %v859, 0.5
    %v869 = vmul.f32 %v810, 0.044715
    %v870 = vmul.f32 %v812, 0.044715
    %v871 = vmul.f32 %v853, 0.044715
    %v872 = vmul.f32 %v855, 0.044715
    %v873 = vmul.f32 %v814, 0.044715
    %v874 = vmul.f32 %v816, 0.044715
    %v875 = vmul.f32 %v857, 0.044715
    %v876 = vmul.f32 %v859, 0.044715
    %v877 = vmul.f32 %v869, %v810
    %v878 = vmul.f32 %v870, %v812
    %v879 = vmul.f32 %v871, %v853
    %v880 = vmul.f32 %v872, %v855
    %v881 = vmul.f32 %v873, %v814
    %v882 = vmul.f32 %v874, %v816
    %v883 = vmul.f32 %v875, %v857
    %v884 = vmul.f32 %v876, %v859
    %v885 = vmul.f32 %v877, %v810
    %v886 = vmul.f32 %v878, %v812
    %v887 = vmul.f32 %v879, %v853
    %v888 = vmul.f32 %v880, %v855
    %v889 = vmul.f32 %v881, %v814
    %v890 = vmul.f32 %v882, %v816
    %v891 = vmul.f32 %v883, %v857
    %v892 = vmul.f32 %v884, %v859
    %v893 = vadd.f32 %v810, %v885
    %v894 = vadd.f32 %v812, %v886
    %v895 = vadd.f32 %v853, %v887
    %v896 = vadd.f32 %v855, %v888
    %v897 = vadd.f32 %v814, %v889
    %v898 = vadd.f32 %v816, %v890
    %v899 = vadd.f32 %v857, %v891
    %v900 = vadd.f32 %v859, %v892
    %v901 = vmul.f32 %v893, 0.7978846
    %v902 = vmul.f32 %v894, 0.7978846
    %v903 = vmul.f32 %v895, 0.7978846
    %v904 = vmul.f32 %v896, 0.7978846
    %v905 = vmul.f32 %v897, 0.7978846
    %v906 = vmul.f32 %v898, 0.7978846
    %v907 = vmul.f32 %v899, 0.7978846
    %v908 = vmul.f32 %v900, 0.7978846
    %v909 = vtanh.pop %v901
    %v910 = vtanh.pop %v902
    %v911 = vtanh.pop %v903
    %v912 = vtanh.pop %v904
    %v913 = vtanh.pop %v905
    %v914 = vtanh.pop %v906
    %v915 = vtanh.pop %v907
    %v916 = vtanh.pop %v908
    %v917 = vadd.f32 %v909, 1.0
    %v918 = vadd.f32 %v910, 1.0
    %v919 = vadd.f32 %v911, 1.0
    %v920 = vadd.f32 %v912, 1.0
    %v921 = vadd.f32 %v913, 1.0
    %v922 = vadd.f32 %v914, 1.0
    %v923 = vadd.f32 %v915, 1.0
    %v924 = vadd.f32 %v916, 1.0
    %v925 = vmul.f32 %v861, %v917
    %v926 = vmul.f32 %v862, %v918
    %v927 = vmul.f32 %v863, %v919
    %v928 = vmul.f32 %v864, %v920
    %v929 = vmul.f32 %v865, %v921
    %v930 = vmul.f32 %v866, %v922
    %v931 = vmul.f32 %v867, %v923
    %v932 = vmul.f32 %v868, %v924
    %v933 = vld [vmem:[#allocation7] sm:$0xff]
    %v934 = vld [vmem:[#allocation7 + $0x8] sm:$0xff]
    %v935 = vld [vmem:[#allocation7 + $0x10] sm:$0xff]
    %v936 = vld [vmem:[#allocation7 + $0x18] sm:$0xff]
    %v937 = vld [vmem:[#allocation7 + $0x20] sm:$0xff]
    %v938 = vld [vmem:[#allocation7 + $0x28] sm:$0xff]
    %v939 = vld [vmem:[#allocation7 + $0x30] sm:$0xff]
    %v940 = vld [vmem:[#allocation7 + $0x38] sm:$0xff]
    %v941 = vld [vmem:[#allocation7 + $0x40] sm:$0xff]
    %v942 = vld [vmem:[#allocation7 + $0x48] sm:$0xff]
    %v943 = vld [vmem:[#allocation7 + $0x50] sm:$0xff]
    %v944 = vld [vmem:[#allocation7 + $0x58] sm:$0xff]
    %v945 = vld [vmem:[#allocation7 + $0x60] sm:$0xff]
    %v946 = vld [vmem:[#allocation7 + $0x68] sm:$0xff]
    %v947 = vld [vmem:[#allocation7 + $0x70] sm:$0xff]
    %v948 = vld [vmem:[#allocation7 + $0x78] sm:$0xff]
    %v949 = vld [vmem:[#allocation7 + $0x80] sm:$0xff]
    %v950 = vld [vmem:[#allocation7 + $0x88] sm:$0xff]
    %v951 = vld [vmem:[#allocation7 + $0x90] sm:$0xff]
    %v952 = vld [vmem:[#allocation7 + $0x98] sm:$0xff]
    %v953 = vld [vmem:[#allocation7 + $0xa0] sm:$0xff]
    %v954 = vld [vmem:[#allocation7 + $0xa8] sm:$0xff]
    %v955 = vld [vmem:[#allocation7 + $0xb0] sm:$0xff]
    %v956 = vld [vmem:[#allocation7 + $0xb8] sm:$0xff]
    %v957 = vld [vmem:[#allocation7 + $0xc0] sm:$0xff]
    %v958 = vld [vmem:[#allocation7 + $0xc8] sm:$0xff]
    %v959 = vld [vmem:[#allocation7 + $0xd0] sm:$0xff]
    %v960 = vld [vmem:[#allocation7 + $0xd8] sm:$0xff]
    %v961 = vld [vmem:[#allocation7 + $0xe0] sm:$0xff]
    %v962 = vld [vmem:[#allocation7 + $0xe8] sm:$0xff]
    %v963 = vld [vmem:[#allocation7 + $0xf0] sm:$0xff]
    %v964 = vld [vmem:[#allocation7 + $0xf8] sm:$0xff]
    %v965 = vld [vmem:[#allocation7 + $0x100] sm:$0xff]
    %v966 = vld [vmem:[#allocation7 + $0x108] sm:$0xff]
    %v967 = vld [vmem:[#allocation7 + $0x110] sm:$0xff]
    %v968 = vld [vmem:[#allocation7 + $0x118] sm:$0xff]
    %v969 = vld [vmem:[#allocation7 + $0x120] sm:$0xff]
    %v970 = vld [vmem:[#allocation7 + $0x128] sm:$0xff]
    %v971 = vld [vmem:[#allocation7 + $0x130] sm:$0xff]
    %v972 = vld [vmem:[#allocation7 + $0x138] sm:$0xff]
    %v973 = vld [vmem:[#allocation7 + $0x140] sm:$0xff]
    %v974 = vld [vmem:[#allocation7 + $0x148] sm:$0xff]
    %v975 = vld [vmem:[#allocation7 + $0x150] sm:$0xff]
    %v976 = vld [vmem:[#allocation7 + $0x158] sm:$0xff]
    %v977 = vld [vmem:[#allocation7 + $0x160] sm:$0xff]
    %v978 = vld [vmem:[#allocation7 + $0x168] sm:$0xff]
    %v979 = vld [vmem:[#allocation7 + $0x170] sm:$0xff]
    %v980 = vld [vmem:[#allocation7 + $0x178] sm:$0xff]
    %v981 = vld [vmem:[#allocation7 + $0x180] sm:$0xff]
    %v982 = vld [vmem:[#allocation7 + $0x188] sm:$0xff]
    %v983 = vld [vmem:[#allocation7 + $0x190] sm:$0xff]
    %v984 = vld [vmem:[#allocation7 + $0x198] sm:$0xff]
    %v985 = vld [vmem:[#allocation7 + $0x1a0] sm:$0xff]
    %v986 = vld [vmem:[#allocation7 + $0x1a8] sm:$0xff]
    %v987 = vld [vmem:[#allocation7 + $0x1b0] sm:$0xff]
    %v988 = vld [vmem:[#allocation7 + $0x1b8] sm:$0xff]
    %v989 = vld [vmem:[#allocation7 + $0x1c0] sm:$0xff]
    %v990 = vld [vmem:[#allocation7 + $0x1c8] sm:$0xff]
    %v991 = vld [vmem:[#allocation7 + $0x1d0] sm:$0xff]
    %v992 = vld [vmem:[#allocation7 + $0x1d8] sm:$0xff]
    %v993 = vld [vmem:[#allocation7 + $0x1e0] sm:$0xff]
    %v994 = vld [vmem:[#allocation7 + $0x1e8] sm:$0xff]
    %v995 = vld [vmem:[#allocation7 + $0x1f0] sm:$0xff]
    %v996 = vld [vmem:[#allocation7 + $0x1f8] sm:$0xff]
    %v997 = vpack.c.bf16 %v929, %v925
    %v998 = vpack.c.bf16 %v930, %v926
    %v999 = vpack.c.bf16 %v931, %v927
    %v1000 = vpack.c.bf16 %v932, %v928
    %v1001 = vpack.c.bf16 %v934, %v933
    %v1002 = vpack.c.bf16 %v936, %v935
    %v1003 = vpack.c.bf16 %v938, %v937
    %v1004 = vpack.c.bf16 %v940, %v939
    %v1005 = vpack.c.bf16 %v942, %v941
    %v1006 = vpack.c.bf16 %v944, %v943
    %v1007 = vpack.c.bf16 %v946, %v945
    %v1008 = vpack.c.bf16 %v948, %v947
    %v1009 = vpack.c.bf16 %v950, %v949
    %v1010 = vpack.c.bf16 %v952, %v951
    %v1011 = vpack.c.bf16 %v954, %v953
    %v1012 = vpack.c.bf16 %v956, %v955
    %v1013 = vpack.c.bf16 %v958, %v957
    %v1014 = vpack.c.bf16 %v960, %v959
    %v1015 = vpack.c.bf16 %v962, %v961
    %v1016 = vpack.c.bf16 %v964, %v963
    %v1017 = vpack.c.bf16 %v966, %v965
    %v1018 = vpack.c.bf16 %v968, %v967
    %v1019 = vpack.c.bf16 %v970, %v969
    %v1020 = vpack.c.bf16 %v972, %v971
    %v1021 = vpack.c.bf16 %v974, %v973
    %v1022 = vpack.c.bf16 %v976, %v975
    %v1023 = vpack.c.bf16 %v978, %v977
    %v1024 = vpack.c.bf16 %v980, %v979
    %v1025 = vpack.c.bf16 %v982, %v981
    %v1026 = vpack.c.bf16 %v984, %v983
    %v1027 = vpack.c.bf16 %v986, %v985
    %v1028 = vpack.c.bf16 %v988, %v987
    %v1029 = vpack.c.bf16 %v990, %v989
    %v1030 = vpack.c.bf16 %v992, %v991
    %v1031 = vpack.c.bf16 %v994, %v993
    %v1032 = vpack.c.bf16 %v996, %v995
    %v1033 = vld [vmem:[%s13] sm:$0x1]
    %v1035 = vlaneseq
    %v1036 = vshrl.u32 %v1035, 7
    %v1037 = vsub.s32 0, %v1036
    %v1038 = vrot.slane %v1033, %v1037
    %1040 = vmatprep.subr.bf16.mxu0 0
    %1041 = vmatpush1.bf16.msra.mxu0 %v1001
    %1042 = vmatprep.subr.bf16.mxu0 0
    %1043 = vmatpush1.bf16.msra.mxu0 %v1002
    %1044 = vmatprep.subr.bf16.mxu0 0
    %1045 = vmatpush1.bf16.msra.mxu0 %v1003
    %1046 = vmatprep.subr.bf16.mxu0 0
    %1047 = vmatpush1.bf16.msra.mxu0 %v1004
    %1048 = vmatprep.subr.bf16.mxu0 0
    %1049 = vmatpush1.bf16.msra.mxu0 %v1005
    %1050 = vmatprep.subr.bf16.mxu0 0
    %1051 = vmatpush1.bf16.msra.mxu0 %v1006
    %1052 = vmatprep.subr.bf16.mxu0 0
    %1053 = vmatpush1.bf16.msra.mxu0 %v1007
    %1054 = vmatprep.subr.bf16.mxu0 0
    %1055 = vmatpush1.bf16.msra.mxu0 %v1008
    %1056 = vmatprep.subr.bf16.mxu0 0
    %1057 = vmatpush1.bf16.msra.mxu0 %v1009
    %1058 = vmatprep.subr.bf16.mxu0 0
    %1059 = vmatpush1.bf16.msra.mxu0 %v1010
    %1060 = vmatprep.subr.bf16.mxu0 0
    %1061 = vmatpush1.bf16.msra.mxu0 %v1011
    %1062 = vmatprep.subr.bf16.mxu0 0
    %1063 = vmatpush1.bf16.msra.mxu0 %v1012
    %1064 = vmatprep.subr.bf16.mxu0 0
    %1065 = vmatpush1.bf16.msra.mxu0 %v1013
    %1066 = vmatprep.subr.bf16.mxu0 0
    %1067 = vmatpush1.bf16.msra.mxu0 %v1014
    %1068 = vmatprep.subr.bf16.mxu0 0
    %1069 = vmatpush1.bf16.msra.mxu0 %v1015
    %1070 = vmatprep.subr.bf16.mxu0 0
    %1071 = vmatpush1.bf16.msra.mxu0 %v1016
    %1072 = vmatprep.mubr.bf16.mxu0 %v998
    %1073 = vmatmul.mubr.bf16.gmra.mrb[0].mxu0 %v997
    %v1074 = vpop.f32.mrb[0].mxu0
    %v1075 = vadd.f32 %v1038, %v1074
    %v1076 = vpop.f32.mrb[0].mxu0
    %v1077 = vpop.f32.mrb[0].mxu0
    %v1078 = vadd.f32 %v1038, %v1077
    %v1079 = vpop.f32.mrb[0].mxu0
    %1080 = vdwg.mxu0
    %1081 = vmatprep.subr.bf16.mxu0 0
    %1082 = vmatpush1.bf16.msra.mxu0 %v1017
    %1083 = vmatprep.subr.bf16.mxu0 0
    %1084 = vmatpush1.bf16.msra.mxu0 %v1018
    %1085 = vmatprep.subr.bf16.mxu0 0
    %1086 = vmatpush1.bf16.msra.mxu0 %v1019
    %1087 = vmatprep.subr.bf16.mxu0 0
    %1088 = vmatpush1.bf16.msra.mxu0 %v1020
    %1089 = vmatprep.subr.bf16.mxu0 0
    %1090 = vmatpush1.bf16.msra.mxu0 %v1021
    %1091 = vmatprep.subr.bf16.mxu0 0
    %1092 = vmatpush1.bf16.msra.mxu0 %v1022
    %1093 = vmatprep.subr.bf16.mxu0 0
    %1094 = vmatpush1.bf16.msra.mxu0 %v1023
    %1095 = vmatprep.subr.bf16.mxu0 0
    %1096 = vmatpush1.bf16.msra.mxu0 %v1024
    %1097 = vmatprep.subr.bf16.mxu0 0
    %1098 = vmatpush1.bf16.msra.mxu0 %v1025
    %1099 = vmatprep.subr.bf16.mxu0 0
    %1100 = vmatpush1.bf16.msra.mxu0 %v1026
    %1101 = vmatprep.subr.bf16.mxu0 0
    %1102 = vmatpush1.bf16.msra.mxu0 %v1027
    %1103 = vmatprep.subr.bf16.mxu0 0
    %1104 = vmatpush1.bf16.msra.mxu0 %v1028
    %1105 = vmatprep.subr.bf16.mxu0 0
    %1106 = vmatpush1.bf16.msra.mxu0 %v1029
    %1107 = vmatprep.subr.bf16.mxu0 0
    %1108 = vmatpush1.bf16.msra.mxu0 %v1030
    %1109 = vmatprep.subr.bf16.mxu0 0
    %1110 = vmatpush1.bf16.msra.mxu0 %v1031
    %1111 = vmatprep.subr.bf16.mxu0 0
    %1112 = vmatpush1.bf16.msra.mxu0 %v1032
    %1113 = vmatprep.mubr.bf16.mxu0 %v1000
    %1114 = vmatmul.mubr.bf16.gmra.mrb[0].mxu0 %v999
    %v1115 = vpop.f32.mrb[0].mxu0
    %v1116 = vadd.f32 %v1075, %v1115
    %v1117 = vpop.f32.mrb[0].mxu0
    %v1118 = vpop.f32.mrb[0].mxu0
    %v1119 = vadd.f32 %v1078, %v1118
    %v1120 = vpop.f32.mrb[0].mxu0
    %1121 = vdwg.mxu0
    %v1122 = vadd.f32 %v1116, %v654
    %v1123 = vadd.f32 %v1119, %v655
    %v1124 = vld [vmem:[%s14] sm:$0x1]
    %v1125 = vld [vmem:[%s15] sm:$0x1]
    %1126 = vadd.xlane.f32.xlu0 %v1122
    %v1127 = vpop.xlane.xlu0 %1126
    %1128 = vadd.xlane.f32.xlu0 %v1123
    %v1129 = vpop.xlane.xlu0 %1128
    %v1130 = vmul.f32 %v1127, %v116
    %v1131 = vmul.f32 %v1129, %v116
    %v1132 = vsub.f32 %v1122, %v1130
    %v1133 = vsub.f32 %v1123, %v1131
    %v1134 = vmul.f32 %v1132, %v1132
    %v1135 = vmul.f32 %v1133, %v1133
    %1136 = vadd.xlane.f32.xlu0 %v1134
    %v1137 = vpop.xlane.xlu0 %1136
    %1138 = vadd.xlane.f32.xlu0 %v1135
    %v1139 = vpop.xlane.xlu0 %1138
    %v1140 = vmul.f32 %v1137, %v116
    %v1141 = vmul.f32 %v1139, %v116
    %v1142 = vadd.f32 %v1140, 1e-12
    %v1143 = vadd.f32 %v1141, 1e-12
    %v1144 = vrsqrt.pop %v1142
    %v1145 = vrsqrt.pop %v1143
    %v1146 = vmul.f32 %v1132, %v1144
    %v1147 = vmul.f32 %v1133, %v1145
    %v1149 = vlaneseq
    %v1150 = vshrl.u32 %v1149, 7
    %v1151 = vsub.s32 0, %v1150
    %v1152 = vrot.slane %v1124, %v1151
    %v1154 = vmul.f32 %v1146, %v1152
    %v1155 = vmul.f32 %v1147, %v1152
    %v1157 = vlaneseq
    %v1158 = vshrl.u32 %v1157, 7
    %v1159 = vsub.s32 0, %v1158
    %v1160 = vrot.slane %v1125, %v1159
    %v1162 = vadd.f32 %v1154, %v1160
    %v1163 = vadd.f32 %v1155, %v1160
    %s1164 = scalar_lea.vmem [#allocation2], 384
    %v1165 = vld [vmem:[%s1164] sm:$0xff]
    %v1166 = vld [vmem:[%s1164 + $0x8] sm:$0xff]
    %v1167 = vld [vmem:[%s1164 + $0x10] sm:$0xff]
    %v1168 = vld [vmem:[%s1164 + $0x18] sm:$0xff]
    %v1169 = vld [vmem:[%s1164 + $0x20] sm:$0xff]
    %v1170 = vld [vmem:[%s1164 + $0x28] sm:$0xff]
    %v1171 = vld [vmem:[%s1164 + $0x30] sm:$0xff]
    %v1172 = vld [vmem:[%s1164 + $0x38] sm:$0xff]
    %v1173 = vld [vmem:[%s1164 + $0x40] sm:$0xff]
    %v1174 = vld [vmem:[%s1164 + $0x48] sm:$0xff]
    %v1175 = vld [vmem:[%s1164 + $0x50] sm:$0xff]
    %v1176 = vld [vmem:[%s1164 + $0x58] sm:$0xff]
    %v1177 = vld [vmem:[%s1164 + $0x60] sm:$0xff]
    %v1178 = vld [vmem:[%s1164 + $0x68] sm:$0xff]
    %v1179 = vld [vmem:[%s1164 + $0x70] sm:$0xff]
    %v1180 = vld [vmem:[%s1164 + $0x78] sm:$0xff]
    %v1181 = vld [vmem:[%s1164 + $0x80] sm:$0xff]
    %v1182 = vld [vmem:[%s1164 + $0x88] sm:$0xff]
    %v1183 = vld [vmem:[%s1164 + $0x90] sm:$0xff]
    %v1184 = vld [vmem:[%s1164 + $0x98] sm:$0xff]
    %v1185 = vld [vmem:[%s1164 + $0xa0] sm:$0xff]
    %v1186 = vld [vmem:[%s1164 + $0xa8] sm:$0xff]
    %v1187 = vld [vmem:[%s1164 + $0xb0] sm:$0xff]
    %v1188 = vld [vmem:[%s1164 + $0xb8] sm:$0xff]
    %v1189 = vld [vmem:[%s1164 + $0xc0] sm:$0xff]
    %v1190 = vld [vmem:[%s1164 + $0xc8] sm:$0xff]
    %v1191 = vld [vmem:[%s1164 + $0xd0] sm:$0xff]
    %v1192 = vld [vmem:[%s1164 + $0xd8] sm:$0xff]
    %v1193 = vld [vmem:[%s1164 + $0xe0] sm:$0xff]
    %v1194 = vld [vmem:[%s1164 + $0xe8] sm:$0xff]
    %v1195 = vld [vmem:[%s1164 + $0xf0] sm:$0xff]
    %v1196 = vld [vmem:[%s1164 + $0xf8] sm:$0xff]
    %v1197 = vld [vmem:[%s1164 + $0x100] sm:$0xff]
    %v1198 = vld [vmem:[%s1164 + $0x108] sm:$0xff]
    %v1199 = vld [vmem:[%s1164 + $0x110] sm:$0xff]
    %v1200 = vld [vmem:[%s1164 + $0x118] sm:$0xff]
    %v1201 = vld [vmem:[%s1164 + $0x120] sm:$0xff]
    %v1202 = vld [vmem:[%s1164 + $0x128] sm:$0xff]
    %v1203 = vld [vmem:[%s1164 + $0x130] sm:$0xff]
    %v1204 = vld [vmem:[%s1164 + $0x138] sm:$0xff]
    %v1205 = vld [vmem:[%s1164 + $0x140] sm:$0xff]
    %v1206 = vld [vmem:[%s1164 + $0x148] sm:$0xff]
    %v1207 = vld [vmem:[%s1164 + $0x150] sm:$0xff]
    %v1208 = vld [vmem:[%s1164 + $0x158] sm:$0xff]
    %v1209 = vld [vmem:[%s1164 + $0x160] sm:$0xff]
    %v1210 = vld [vmem:[%s1164 + $0x168] sm:$0xff]
    %v1211 = vld [vmem:[%s1164 + $0x170] sm:$0xff]
    %v1212 = vld [vmem:[%s1164 + $0x178] sm:$0xff]
    %v1213 = vpack.c.bf16 %v1163, %v1162
    %v1214 = vpack.c.bf16 %v1168, %v1165
    %v1215 = vpack.c.bf16 %v1169, %v1166
    %v1216 = vpack.c.bf16 %v1170, %v1167
    %v1217 = vpack.c.bf16 %v1174, %v1171
    %v1218 = vpack.c.bf16 %v1175, %v1172
    %v1219 = vpack.c.bf16 %v1176, %v1173
    %v1220 = vpack.c.bf16 %v1180, %v1177
    %v1221 = vpack.c.bf16 %v1181, %v1178
    %v1222 = vpack.c.bf16 %v1182, %v1179
    %v1223 = vpack.c.bf16 %v1186, %v1183
    %v1224 = vpack.c.bf16 %v1187, %v1184
    %v1225 = vpack.c.bf16 %v1188, %v1185
    %v1226 = vpack.c.bf16 %v1192, %v1189
    %v1227 = vpack.c.bf16 %v1193, %v1190
    %v1228 = vpack.c.bf16 %v1194, %v1191
    %v1229 = vpack.c.bf16 %v1198, %v1195
    %v1230 = vpack.c.bf16 %v1199, %v1196
    %v1231 = vpack.c.bf16 %v1200, %v1197
    %v1232 = vpack.c.bf16 %v1204, %v1201
    %v1233 = vpack.c.bf16 %v1205, %v1202
    %v1234 = vpack.c.bf16 %v1206, %v1203
    %v1235 = vpack.c.bf16 %v1210, %v1207
    %v1236 = vpack.c.bf16 %v1211, %v1208
    %v1237 = vpack.c.bf16 %v1212, %v1209
    %s1238 = scalar_lea.vmem %s5, 3
    %v1239 = vld [vmem:[%s1238] sm:$0x7]
    %v1241 = vlaneseq
    %v1242 = vshrl.u32 %v1241, 7
    %v1243 = vsub.s32 0, %v1242
    %v1244 = vrot.slane %v1239, %v1243
    %v1245 = vlaneseq
    %v1246 = vshrl.u32 %v1245, 7
    %v1247 = vsub.s32 1, %v1246
    %v1248 = vrot.slane %v1239, %v1247
    %v1249 = vlaneseq
    %v1250 = vshrl.u32 %v1249, 7
    %v1251 = vsub.s32 2, %v1250
    %v1252 = vrot.slane %v1239, %v1251
    %1256 = vmatprep.subr.bf16.mxu0 %v1215
    %1257 = vmatpush1.bf16.msra.mxu0 %v1214
    %1258 = vmatprep.subr.bf16.mxu0 %v1218
    %1259 = vmatpush1.bf16.msra.mxu0 %v1217
    %1260 = vmatprep.subr.bf16.mxu0 %v1221
    %1261 = vmatpush1.bf16.msra.mxu0 %v1220
    %1262 = vmatprep.subr.bf16.mxu0 %v1224
    %1263 = vmatpush1.bf16.msra.mxu0 %v1223
    %1264 = vmatprep.subr.bf16.mxu0 %v1227
    %1265 = vmatpush1.bf16.msra.mxu0 %v1226
    %1266 = vmatprep.subr.bf16.mxu0 %v1230
    %1267 = vmatpush1.bf16.msra.mxu0 %v1229
    %1268 = vmatprep.subr.bf16.mxu0 %v1233
    %1269 = vmatpush1.bf16.msra.mxu0 %v1232
    %1270 = vmatprep.subr.bf16.mxu0 %v1236
    %1271 = vmatpush1.bf16.msra.mxu0 %v1235
    %1272 = vmatprep.subr.bf16.mxu0 0
    %1273 = vmatpush1.bf16.msra.mxu0 0
    %1274 = vmatprep.subr.bf16.mxu0 0
    %1275 = vmatpush1.bf16.msra.mxu0 0
    %1276 = vmatprep.subr.bf16.mxu0 0
    %1277 = vmatpush1.bf16.msra.mxu0 0
    %1278 = vmatprep.subr.bf16.mxu0 0
    %1279 = vmatpush1.bf16.msra.mxu0 0
    %1280 = vmatprep.subr.bf16.mxu0 0
    %1281 = vmatpush1.bf16.msra.mxu0 0
    %1282 = vmatprep.subr.bf16.mxu0 0
    %1283 = vmatpush1.bf16.msra.mxu0 0
    %1284 = vmatprep.subr.bf16.mxu0 0
    %1285 = vmatpush1.bf16.msra.mxu0 0
    %1286 = vmatprep.subr.bf16.mxu0 0
    %1287 = vmatpush1.bf16.msra.mxu0 0
    %1288 = vmatprep.mubr.bf16.mxu0 0
    %1289 = vmatmul.mubr.bf16.gmra.mrb[0].mxu0 %v1213
    %v1290 = vpop.f32.mrb[0].mxu0
    %v1291 = vadd.f32 %v1244, %v1290
    %v1292 = vpop.f32.mrb[0].mxu0
    %v1293 = vadd.f32 %v1248, %v1292
    %v1294 = vpop.f32.mrb[0].mxu0
    %v1295 = vadd.f32 %v1244, %v1294
    %v1296 = vpop.f32.mrb[0].mxu0
    %v1297 = vadd.f32 %v1248, %v1296
    %1298 = vdwg.mxu0
    %1299 = vmatprep.subr.bf16.mxu0 0
    %1300 = vmatpush1.bf16.msra.mxu0 %v1216
    %1301 = vmatprep.subr.bf16.mxu0 0
    %1302 = vmatpush1.bf16.msra.mxu0 %v1219
    %1303 = vmatprep.subr.bf16.mxu0 0
    %1304 = vmatpush1.bf16.msra.mxu0 %v1222
    %1305 = vmatprep.subr.bf16.mxu0 0
    %1306 = vmatpush1.bf16.msra.mxu0 %v1225
    %1307 = vmatprep.subr.bf16.mxu0 0
    %1308 = vmatpush1.bf16.msra.mxu0 %v1228
    %1309 = vmatprep.subr.bf16.mxu0 0
    %1310 = vmatpush1.bf16.msra.mxu0 %v1231
    %1311 = vmatprep.subr.bf16.mxu0 0
    %1312 = vmatpush1.bf16.msra.mxu0 %v1234
    %1313 = vmatprep.subr.bf16.mxu0 0
    %1314 = vmatpush1.bf16.msra.mxu0 %v1237
    %1315 = vmatprep.subr.bf16.mxu0 0
    %1316 = vmatpush1.bf16.msra.mxu0 0
    %1317 = vmatprep.subr.bf16.mxu0 0
    %1318 = vmatpush1.bf16.msra.mxu0 0
    %1319 = vmatprep.subr.bf16.mxu0 0
    %1320 = vmatpush1.bf16.msra.mxu0 0
    %1321 = vmatprep.subr.bf16.mxu0 0
    %1322 = vmatpush1.bf16.msra.mxu0 0
    %1323 = vmatprep.subr.bf16.mxu0 0
    %1324 = vmatpush1.bf16.msra.mxu0 0
    %1325 = vmatprep.subr.bf16.mxu0 0
    %1326 = vmatpush1.bf16.msra.mxu0 0
    %1327 = vmatprep.subr.bf16.mxu0 0
    %1328 = vmatpush1.bf16.msra.mxu0 0
    %1329 = vmatprep.subr.bf16.mxu0 0
    %1330 = vmatpush1.bf16.msra.mxu0 0
    %1331 = vmatprep.mubr.bf16.mxu0 0
    %1332 = vmatmul.mubr.bf16.gmra.mrb[0].mxu0 %v1213
    %v1333 = vpop.f32.mrb[0].mxu0
    %v1334 = vadd.f32 %v1252, %v1333
    %v1335 = vpop.f32.mrb[0].mxu0
    %v1336 = vpop.f32.mrb[0].mxu0
    %v1337 = vadd.f32 %v1252, %v1336
    %v1338 = vpop.f32.mrb[0].mxu0
    %1339 = vdwg.mxu0
    %1341 = vrot.lane.b32.xlu0 %v1291, 64
    %v1342 = vpop.permute.xlu0 %1341
    %1345 = vrot.lane.b32.xlu0 %v1295, 64
    %v1346 = vpop.permute.xlu0 %1345
    %1349 = vrot.lane.b32.xlu0 %v1293, 64
    %v1350 = vpop.permute.xlu0 %1349
    %1353 = vrot.lane.b32.xlu0 %v1297, 64
    %v1354 = vpop.permute.xlu0 %1353
    %1357 = vrot.lane.b32.xlu0 %v1334, 64
    %v1358 = vpop.permute.xlu0 %1357
    %1361 = vrot.lane.b32.xlu0 %v1337, 64
    %v1362 = vpop.permute.xlu0 %1361
    %v1364 = vpack.c.bf16 %v1342, %v1291
    %v1365 = vpack.c.bf16 %v1346, %v1295
    %v1366 = vpack.c.bf16 %v1350, %v1293
    %v1367 = vpack.c.bf16 %v1354, %v1297
    %v1369 = vsel %vm357, %v1364, 0
    %v1372 = vsel %vm357, %v1365, 0
    %v1375 = vsel %vm357, %v1366, 0
    %v1378 = vsel %vm357, %v1367, 0
    %1380 = vmatprep.subr.bf16.mxu0 0
    %1381 = vmatpush1.bf16.xpose.msra.mxu0 %v1375
    %1382 = vmatprep.subr.bf16.mxu0 0
    %1383 = vmatpush1.bf16.xpose.msra.mxu0 %v1378
    %1384 = vmatprep.subr.bf16.mxu0 0
    %1385 = vmatpush1.bf16.xpose.msra.mxu0 0
    %1386 = vmatprep.subr.bf16.mxu0 0
    %1387 = vmatpush1.bf16.xpose.msra.mxu0 0
    %1388 = vmatprep.subr.bf16.mxu0 0
    %1389 = vmatpush1.bf16.xpose.msra.mxu0 0
    %1390 = vmatprep.subr.bf16.mxu0 0
    %1391 = vmatpush1.bf16.xpose.msra.mxu0 0
    %1392 = vmatprep.subr.bf16.mxu0 0
    %1393 = vmatpush1.bf16.xpose.msra.mxu0 0
    %1394 = vmatprep.subr.bf16.mxu0 0
    %1395 = vmatpush1.bf16.xpose.msra.mxu0 0
    %1396 = vmatprep.subr.bf16.mxu0 0
    %1397 = vmatpush1.bf16.xpose.msra.mxu0 0
    %1398 = vmatprep.subr.bf16.mxu0 0
    %1399 = vmatpush1.bf16.xpose.msra.mxu0 0
    %1400 = vmatprep.subr.bf16.mxu0 0
    %1401 = vmatpush1.bf16.xpose.msra.mxu0 0
    %1402 = vmatprep.subr.bf16.mxu0 0
    %1403 = vmatpush1.bf16.xpose.msra.mxu0 0
    %1404 = vmatprep.subr.bf16.mxu0 0
    %1405 = vmatpush1.bf16.xpose.msra.mxu0 0
    %1406 = vmatprep.subr.bf16.mxu0 0
    %1407 = vmatpush1.bf16.xpose.msra.mxu0 0
    %1408 = vmatprep.subr.bf16.mxu0 0
    %1409 = vmatpush1.bf16.xpose.msra.mxu0 0
    %1410 = vmatprep.subr.bf16.mxu0 0
    %1411 = vmatpush1.bf16.xpose.msra.mxu0 0
    %1412 = vmatprep.mubr.bf16.mxu0 0
    %1413 = vmatmul.mubr.bf16.gmra.mrb[0].mxu0 %v1369
    %v1414 = vpop.f32.mrb[0].mxu0
    %v1415 = vadd.f32 0.0, %v1414
    %v1416 = vpop.f32.mrb[0].mxu0
    %v1417 = vpop.f32.mrb[0].mxu0
    %v1418 = vadd.f32 0.0, %v1417
    %v1419 = vpop.f32.mrb[0].mxu0
    %1420 = vmatprep.mubr.bf16.mxu0 0
    %1421 = vmatmul.mubr.bf16.gmra.mrb[0].mxu0 %v1372
    %v1422 = vpop.f32.mrb[0].mxu0
    %v1423 = vadd.f32 0.0, %v1422
    %v1424 = vpop.f32.mrb[0].mxu0
    %v1425 = vpop.f32.mrb[0].mxu0
    %v1426 = vadd.f32 0.0, %v1425
    %v1427 = vpop.f32.mrb[0].mxu0
    %1428 = vdwg.mxu0
    %v1429 = vmul.f32 %v1415, 0.125
    %v1430 = vmul.f32 %v1418, 0.125
    %v1431 = vmul.f32 %v1423, 0.125
    %v1432 = vmul.f32 %v1426, 0.125
    %v1433 = vadd.f32 %v1429, %v151
    %v1434 = vadd.f32 %v1430, %v152
    %v1435 = vadd.f32 %v1431, %v153
    %v1436 = vadd.f32 %v1432, %v154
    %v1437 = vsel %vm427, %v1433, -inf
    %1438 = vmax.xlane.f32.xlu0 %v1437
    %v1439 = vpop.xlane.xlu0 %1438
    %v1440 = vsel %vm427, %v1434, -inf
    %1441 = vmax.xlane.f32.xlu0 %v1440
    %v1442 = vpop.xlane.xlu0 %1441
    %v1443 = vsel %vm427, %v1435, -inf
    %1444 = vmax.xlane.f32.xlu0 %v1443
    %v1445 = vpop.xlane.xlu0 %1444
    %v1446 = vsel %vm427, %v1436, -inf
    %1447 = vmax.xlane.f32.xlu0 %v1446
    %v1448 = vpop.xlane.xlu0 %1447
    %v1449 = vsub.f32 %v1433, %v1439
    %v1450 = vsub.f32 %v1434, %v1442
    %v1451 = vsub.f32 %v1435, %v1445
    %v1452 = vsub.f32 %v1436, %v1448
    %v1453 = vmul.f32 %v1449, 1.442695
    %v1454 = vpow.pop %v1453
    %v1455 = vmul.f32 %v1450, 1.442695
    %v1456 = vpow.pop %v1455
    %v1457 = vmul.f32 %v1451, 1.442695
    %v1458 = vpow.pop %v1457
    %v1459 = vmul.f32 %v1452, 1.442695
    %v1460 = vpow.pop %v1459
    %v1461 = vsel %vm427, %v1454, 0.0
    %1462 = vadd.xlane.f32.xlu0 %v1461
    %v1463 = vpop.xlane.xlu0 %1462
    %v1464 = vsel %vm427, %v1456, 0.0
    %1465 = vadd.xlane.f32.xlu0 %v1464
    %v1466 = vpop.xlane.xlu0 %1465
    %v1467 = vsel %vm427, %v1458, 0.0
    %1468 = vadd.xlane.f32.xlu0 %v1467
    %v1469 = vpop.xlane.xlu0 %1468
    %v1470 = vsel %vm427, %v1460, 0.0
    %1471 = vadd.xlane.f32.xlu0 %v1470
    %v1472 = vpop.xlane.xlu0 %1471
    %v1473 = vrcp.pop %v1463
    %v1474 = vrcp.pop %v1466
    %v1475 = vrcp.pop %v1469
    %v1476 = vrcp.pop %v1472
    %v1477 = vmul.f32 %v1454, %v1473
    %v1478 = vmul.f32 %v1456, %v1474
    %v1479 = vmul.f32 %v1458, %v1475
    %v1480 = vmul.f32 %v1460, %v1476
    %v1481 = vpack.c.bf16 %v1478, %v1477
    %v1482 = vpack.c.bf16 %v1480, %v1479
    %v1483 = vpack.c.bf16 %v1358, %v1334
    %v1484 = vpack.c.bf16 %v1362, %v1337
    %v1486 = vsel %vm427, %v1481, 0
    %v1489 = vsel %vm427, %v1482, 0
    %1491 = vmatprep.subr.bf16.mxu0 0
    %1492 = vmatpush1.bf16.msra.mxu0 %v1483
    %1493 = vmatprep.subr.bf16.mxu0 0
    %1494 = vmatpush1.bf16.msra.mxu0 %v1484
    %1495 = vmatprep.subr.bf16.mxu0 0
    %1496 = vmatpush1.bf16.msra.mxu0 0
    %1497 = vmatprep.subr.bf16.mxu0 0
    %1498 = vmatpush1.bf16.msra.mxu0 0
    %1499 = vmatprep.subr.bf16.mxu0 0
    %1500 = vmatpush1.bf16.msra.mxu0 0
    %1501 = vmatprep.subr.bf16.mxu0 0
    %1502 = vmatpush1.bf16.msra.mxu0 0
    %1503 = vmatprep.subr.bf16.mxu0 0
    %1504 = vmatpush1.bf16.msra.mxu0 0
    %1505 = vmatprep.subr.bf16.mxu0 0
    %1506 = vmatpush1.bf16.msra.mxu0 0
    %1507 = vmatprep.subr.bf16.mxu0 0
    %1508 = vmatpush1.bf16.msra.mxu0 0
    %1509 = vmatprep.subr.bf16.mxu0 0
    %1510 = vmatpush1.bf16.msra.mxu0 0
    %1511 = vmatprep.subr.bf16.mxu0 0
    %1512 = vmatpush1.bf16.msra.mxu0 0
    %1513 = vmatprep.subr.bf16.mxu0 0
    %1514 = vmatpush1.bf16.msra.mxu0 0
    %1515 = vmatprep.subr.bf16.mxu0 0
    %1516 = vmatpush1.bf16.msra.mxu0 0
    %1517 = vmatprep.subr.bf16.mxu0 0
    %1518 = vmatpush1.bf16.msra.mxu0 0
    %1519 = vmatprep.subr.bf16.mxu0 0
    %1520 = vmatpush1.bf16.msra.mxu0 0
    %1521 = vmatprep.subr.bf16.mxu0 0
    %1522 = vmatpush1.bf16.msra.mxu0 0
    %1523 = vmatprep.mubr.bf16.mxu0 0
    %1524 = vmatmul.mubr.bf16.gmra.mrb[0].mxu0 %v1486
    %v1525 = vpop.f32.mrb[0].mxu0
    %v1526 = vadd.f32 0.0, %v1525
    %v1527 = vpop.f32.mrb[0].mxu0
    %v1528 = vpop.f32.mrb[0].mxu0
    %v1529 = vadd.f32 0.0, %v1528
    %v1530 = vpop.f32.mrb[0].mxu0
    %1531 = vmatprep.mubr.bf16.mxu0 0
    %1532 = vmatmul.mubr.bf16.gmra.mrb[0].mxu0 %v1489
    %v1533 = vpop.f32.mrb[0].mxu0
    %v1534 = vadd.f32 0.0, %v1533
    %v1535 = vpop.f32.mrb[0].mxu0
    %v1536 = vpop.f32.mrb[0].mxu0
    %v1537 = vadd.f32 0.0, %v1536
    %v1538 = vpop.f32.mrb[0].mxu0
    %1539 = vdwg.mxu0
    %1541 = vrot.lane.b32.xlu0 %v1529, 64
    %v1542 = vpop.permute.xlu0 %1541
    %v1544 = vsel %vm357, %v1526, %v1542
    %1546 = vrot.lane.b32.xlu0 %v1537, 64
    %v1547 = vpop.permute.xlu0 %1546
    %v1549 = vsel %vm357, %v1534, %v1547
    %s1550 = scalar_lea.vmem %s6, 128
    %v1551 = vld [vmem:[%s1550] sm:$0xff]
    %v1552 = vld [vmem:[%s1550 + $0x8] sm:$0xff]
    %v1553 = vld [vmem:[%s1550 + $0x10] sm:$0xff]
    %v1554 = vld [vmem:[%s1550 + $0x18] sm:$0xff]
    %v1555 = vld [vmem:[%s1550 + $0x20] sm:$0xff]
    %v1556 = vld [vmem:[%s1550 + $0x28] sm:$0xff]
    %v1557 = vld [vmem:[%s1550 + $0x30] sm:$0xff]
    %v1558 = vld [vmem:[%s1550 + $0x38] sm:$0xff]
    %v1559 = vld [vmem:[%s1550 + $0x40] sm:$0xff]
    %v1560 = vld [vmem:[%s1550 + $0x48] sm:$0xff]
    %v1561 = vld [vmem:[%s1550 + $0x50] sm:$0xff]
    %v1562 = vld [vmem:[%s1550 + $0x58] sm:$0xff]
    %v1563 = vld [vmem:[%s1550 + $0x60] sm:$0xff]
    %v1564 = vld [vmem:[%s1550 + $0x68] sm:$0xff]
    %v1565 = vld [vmem:[%s1550 + $0x70] sm:$0xff]
    %v1566 = vld [vmem:[%s1550 + $0x78] sm:$0xff]
    %v1567 = vpack.c.bf16 %v1549, %v1544
    %v1568 = vpack.c.bf16 %v1552, %v1551
    %v1569 = vpack.c.bf16 %v1554, %v1553
    %v1570 = vpack.c.bf16 %v1556, %v1555
    %v1571 = vpack.c.bf16 %v1558, %v1557
    %v1572 = vpack.c.bf16 %v1560, %v1559
    %v1573 = vpack.c.bf16 %v1562, %v1561
    %v1574 = vpack.c.bf16 %v1564, %v1563
    %v1575 = vpack.c.bf16 %v1566, %v1565
    %s1576 = scalar_lea.vmem %s7, 1
    %v1577 = vld [vmem:[%s1576] sm:$0x1]
    %v1579 = vlaneseq
    %v1580 = vshrl.u32 %v1579, 7
    %v1581 = vsub.s32 0, %v1580
    %v1582 = vrot.slane %v1577, %v1581
    %1584 = vmatprep.subr.bf16.mxu0 0
    %1585 = vmatpush1.bf16.msra.mxu0 %v1568
    %1586 = vmatprep.subr.bf16.mxu0 0
    %1587 = vmatpush1.bf16.msra.mxu0 %v1569
    %1588 = vmatprep.subr.bf16.mxu0 0
    %1589 = vmatpush1.bf16.msra.mxu0 %v1570
    %1590 = vmatprep.subr.bf16.mxu0 0
    %1591 = vmatpush1.bf16.msra.mxu0 %v1571
    %1592 = vmatprep.subr.bf16.mxu0 0
    %1593 = vmatpush1.bf16.msra.mxu0 %v1572
    %1594 = vmatprep.subr.bf16.mxu0 0
    %1595 = vmatpush1.bf16.msra.mxu0 %v1573
    %1596 = vmatprep.subr.bf16.mxu0 0
    %1597 = vmatpush1.bf16.msra.mxu0 %v1574
    %1598 = vmatprep.subr.bf16.mxu0 0
    %1599 = vmatpush1.bf16.msra.mxu0 %v1575
    %1600 = vmatprep.subr.bf16.mxu0 0
    %1601 = vmatpush1.bf16.msra.mxu0 0
    %1602 = vmatprep.subr.bf16.mxu0 0
    %1603 = vmatpush1.bf16.msra.mxu0 0
    %1604 = vmatprep.subr.bf16.mxu0 0
    %1605 = vmatpush1.bf16.msra.mxu0 0
    %1606 = vmatprep.subr.bf16.mxu0 0
    %1607 = vmatpush1.bf16.msra.mxu0 0
    %1608 = vmatprep.subr.bf16.mxu0 0
    %1609 = vmatpush1.bf16.msra.mxu0 0
    %1610 = vmatprep.subr.bf16.mxu0 0
    %1611 = vmatpush1.bf16.msra.mxu0 0
    %1612 = vmatprep.subr.bf16.mxu0 0
    %1613 = vmatpush1.bf16.msra.mxu0 0
    %1614 = vmatprep.subr.bf16.mxu0 0
    %1615 = vmatpush1.bf16.msra.mxu0 0
    %1616 = vmatprep.mubr.bf16.mxu0 0
    %1617 = vmatmul.mubr.bf16.gmra.mrb[0].mxu0 %v1567
    %v1618 = vpop.f32.mrb[0].mxu0
    %v1619 = vadd.f32 %v1582, %v1618
    %v1620 = vpop.f32.mrb[0].mxu0
    %v1621 = vpop.f32.mrb[0].mxu0
    %v1622 = vadd.f32 %v1582, %v1621
    %v1623 = vpop.f32.mrb[0].mxu0
    %1624 = vdwg.mxu0
    %v1625 = vadd.f32 %v1619, %v1162
    %v1626 = vadd.f32 %v1622, %v1163
    %s1627 = scalar_lea.vmem %s8, 1
    %v1628 = vld [vmem:[%s1627] sm:$0x1]
    %s1629 = scalar_lea.vmem %s9, 1
    %v1630 = vld [vmem:[%s1629] sm:$0x1]
    %1631 = vadd.xlane.f32.xlu0 %v1625
    %v1632 = vpop.xlane.xlu0 %1631
    %1633 = vadd.xlane.f32.xlu0 %v1626
    %v1634 = vpop.xlane.xlu0 %1633
    %v1635 = vmul.f32 %v1632, %v116
    %v1636 = vmul.f32 %v1634, %v116
    %v1637 = vsub.f32 %v1625, %v1635
    %v1638 = vsub.f32 %v1626, %v1636
    %v1639 = vmul.f32 %v1637, %v1637
    %v1640 = vmul.f32 %v1638, %v1638
    %1641 = vadd.xlane.f32.xlu0 %v1639
    %v1642 = vpop.xlane.xlu0 %1641
    %1643 = vadd.xlane.f32.xlu0 %v1640
    %v1644 = vpop.xlane.xlu0 %1643
    %v1645 = vmul.f32 %v1642, %v116
    %v1646 = vmul.f32 %v1644, %v116
    %v1647 = vadd.f32 %v1645, 1e-12
    %v1648 = vadd.f32 %v1646, 1e-12
    %v1649 = vrsqrt.pop %v1647
    %v1650 = vrsqrt.pop %v1648
    %v1651 = vmul.f32 %v1637, %v1649
    %v1652 = vmul.f32 %v1638, %v1650
    %v1654 = vlaneseq
    %v1655 = vshrl.u32 %v1654, 7
    %v1656 = vsub.s32 0, %v1655
    %v1657 = vrot.slane %v1628, %v1656
    %v1659 = vmul.f32 %v1651, %v1657
    %v1660 = vmul.f32 %v1652, %v1657
    %v1662 = vlaneseq
    %v1663 = vshrl.u32 %v1662, 7
    %v1664 = vsub.s32 0, %v1663
    %v1665 = vrot.slane %v1630, %v1664
    %v1667 = vadd.f32 %v1659, %v1665
    %v1668 = vadd.f32 %v1660, %v1665
    %s1669 = scalar_lea.vmem [#allocation5], 512
    %v1670 = vld [vmem:[%s1669] sm:$0xff]
    %v1671 = vld [vmem:[%s1669 + $0x8] sm:$0xff]
    %v1672 = vld [vmem:[%s1669 + $0x10] sm:$0xff]
    %v1673 = vld [vmem:[%s1669 + $0x18] sm:$0xff]
    %v1674 = vld [vmem:[%s1669 + $0x20] sm:$0xff]
    %v1675 = vld [vmem:[%s1669 + $0x28] sm:$0xff]
    %v1676 = vld [vmem:[%s1669 + $0x30] sm:$0xff]
    %v1677 = vld [vmem:[%s1669 + $0x38] sm:$0xff]
    %v1678 = vld [vmem:[%s1669 + $0x40] sm:$0xff]
    %v1679 = vld [vmem:[%s1669 + $0x48] sm:$0xff]
    %v1680 = vld [vmem:[%s1669 + $0x50] sm:$0xff]
    %v1681 = vld [vmem:[%s1669 + $0x58] sm:$0xff]
    %v1682 = vld [vmem:[%s1669 + $0x60] sm:$0xff]
    %v1683 = vld [vmem:[%s1669 + $0x68] sm:$0xff]
    %v1684 = vld [vmem:[%s1669 + $0x70] sm:$0xff]
    %v1685 = vld [vmem:[%s1669 + $0x78] sm:$0xff]
    %v1686 = vld [vmem:[%s1669 + $0x80] sm:$0xff]
    %v1687 = vld [vmem:[%s1669 + $0x88] sm:$0xff]
    %v1688 = vld [vmem:[%s1669 + $0x90] sm:$0xff]
    %v1689 = vld [vmem:[%s1669 + $0x98] sm:$0xff]
    %v1690 = vld [vmem:[%s1669 + $0xa0] sm:$0xff]
    %v1691 = vld [vmem:[%s1669 + $0xa8] sm:$0xff]
    %v1692 = vld [vmem:[%s1669 + $0xb0] sm:$0xff]
    %v1693 = vld [vmem:[%s1669 + $0xb8] sm:$0xff]
    %v1694 = vld [vmem:[%s1669 + $0xc0] sm:$0xff]
    %v1695 = vld [vmem:[%s1669 + $0xc8] sm:$0xff]
    %v1696 = vld [vmem:[%s1669 + $0xd0] sm:$0xff]
    %v1697 = vld [vmem:[%s1669 + $0xd8] sm:$0xff]
    %v1698 = vld [vmem:[%s1669 + $0xe0] sm:$0xff]
    %v1699 = vld [vmem:[%s1669 + $0xe8] sm:$0xff]
    %v1700 = vld [vmem:[%s1669 + $0xf0] sm:$0xff]
    %v1701 = vld [vmem:[%s1669 + $0xf8] sm:$0xff]
    %v1702 = vld [vmem:[%s1669 + $0x100] sm:$0xff]
    %v1703 = vld [vmem:[%s1669 + $0x108] sm:$0xff]
    %v1704 = vld [vmem:[%s1669 + $0x110] sm:$0xff]
    %v1705 = vld [vmem:[%s1669 + $0x118] sm:$0xff]
    %v1706 = vld [vmem:[%s1669 + $0x120] sm:$0xff]
    %v1707 = vld [vmem:[%s1669 + $0x128] sm:$0xff]
    %v1708 = vld [vmem:[%s1669 + $0x130] sm:$0xff]
    %v1709 = vld [vmem:[%s1669 + $0x138] sm:$0xff]
    %v1710 = vld [vmem:[%s1669 + $0x140] sm:$0xff]
    %v1711 = vld [vmem:[%s1669 + $0x148] sm:$0xff]
    %v1712 = vld [vmem:[%s1669 + $0x150] sm:$0xff]
    %v1713 = vld [vmem:[%s1669 + $0x158] sm:$0xff]
    %v1714 = vld [vmem:[%s1669 + $0x160] sm:$0xff]
    %v1715 = vld [vmem:[%s1669 + $0x168] sm:$0xff]
    %v1716 = vld [vmem:[%s1669 + $0x170] sm:$0xff]
    %v1717 = vld [vmem:[%s1669 + $0x178] sm:$0xff]
    %v1718 = vld [vmem:[%s1669 + $0x180] sm:$0xff]
    %v1719 = vld [vmem:[%s1669 + $0x188] sm:$0xff]
    %v1720 = vld [vmem:[%s1669 + $0x190] sm:$0xff]
    %v1721 = vld [vmem:[%s1669 + $0x198] sm:$0xff]
    %v1722 = vld [vmem:[%s1669 + $0x1a0] sm:$0xff]
    %v1723 = vld [vmem:[%s1669 + $0x1a8] sm:$0xff]
    %v1724 = vld [vmem:[%s1669 + $0x1b0] sm:$0xff]
    %v1725 = vld [vmem:[%s1669 + $0x1b8] sm:$0xff]
    %v1726 = vld [vmem:[%s1669 + $0x1c0] sm:$0xff]
    %v1727 = vld [vmem:[%s1669 + $0x1c8] sm:$0xff]
    %v1728 = vld [vmem:[%s1669 + $0x1d0] sm:$0xff]
    %v1729 = vld [vmem:[%s1669 + $0x1d8] sm:$0xff]
    %v1730 = vld [vmem:[%s1669 + $0x1e0] sm:$0xff]
    %v1731 = vld [vmem:[%s1669 + $0x1e8] sm:$0xff]
    %v1732 = vld [vmem:[%s1669 + $0x1f0] sm:$0xff]
    %v1733 = vld [vmem:[%s1669 + $0x1f8] sm:$0xff]
    %v1734 = vpack.c.bf16 %v1668, %v1667
    %v1735 = vpack.c.bf16 %v1674, %v1670
    %v1736 = vpack.c.bf16 %v1675, %v1671
    %v1737 = vpack.c.bf16 %v1676, %v1672
    %v1738 = vpack.c.bf16 %v1677, %v1673
    %v1739 = vpack.c.bf16 %v1682, %v1678
    %v1740 = vpack.c.bf16 %v1683, %v1679
    %v1741 = vpack.c.bf16 %v1684, %v1680
    %v1742 = vpack.c.bf16 %v1685, %v1681
    %v1743 = vpack.c.bf16 %v1690, %v1686
    %v1744 = vpack.c.bf16 %v1691, %v1687
    %v1745 = vpack.c.bf16 %v1692, %v1688
    %v1746 = vpack.c.bf16 %v1693, %v1689
    %v1747 = vpack.c.bf16 %v1698, %v1694
    %v1748 = vpack.c.bf16 %v1699, %v1695
    %v1749 = vpack.c.bf16 %v1700, %v1696
    %v1750 = vpack.c.bf16 %v1701, %v1697
    %v1751 = vpack.c.bf16 %v1706, %v1702
    %v1752 = vpack.c.bf16 %v1707, %v1703
    %v1753 = vpack.c.bf16 %v1708, %v1704
    %v1754 = vpack.c.bf16 %v1709, %v1705
    %v1755 = vpack.c.bf16 %v1714, %v1710
    %v1756 = vpack.c.bf16 %v1715, %v1711
    %v1757 = vpack.c.bf16 %v1716, %v1712
    %v1758 = vpack.c.bf16 %v1717, %v1713
    %v1759 = vpack.c.bf16 %v1722, %v1718
    %v1760 = vpack.c.bf16 %v1723, %v1719
    %v1761 = vpack.c.bf16 %v1724, %v1720
    %v1762 = vpack.c.bf16 %v1725, %v1721
    %v1763 = vpack.c.bf16 %v1730, %v1726
    %v1764 = vpack.c.bf16 %v1731, %v1727
    %v1765 = vpack.c.bf16 %v1732, %v1728
    %v1766 = vpack.c.bf16 %v1733, %v1729
    %s1767 = scalar_lea.vmem %s11, 4
    %v1768 = vld [vmem:[%s1767] sm:$0xf]
    %v1770 = vlaneseq
    %v1771 = vshrl.u32 %v1770, 7
    %v1772 = vsub.s32 0, %v1771
    %v1773 = vrot.slane %v1768, %v1772
    %v1774 = vlaneseq
    %v1775 = vshrl.u32 %v1774, 7
    %v1776 = vsub.s32 1, %v1775
    %v1777 = vrot.slane %v1768, %v1776
    %v1778 = vlaneseq
    %v1779 = vshrl.u32 %v1778, 7
    %v1780 = vsub.s32 2, %v1779
    %v1781 = vrot.slane %v1768, %v1780
    %v1782 = vlaneseq
    %v1783 = vshrl.u32 %v1782, 7
    %v1784 = vsub.s32 3, %v1783
    %v1785 = vrot.slane %v1768, %v1784
    %1790 = vmatprep.subr.bf16.mxu0 %v1736
    %1791 = vmatpush1.bf16.msra.mxu0 %v1735
    %1792 = vmatprep.subr.bf16.mxu0 %v1740
    %1793 = vmatpush1.bf16.msra.mxu0 %v1739
    %1794 = vmatprep.subr.bf16.mxu0 %v1744
    %1795 = vmatpush1.bf16.msra.mxu0 %v1743
    %1796 = vmatprep.subr.bf16.mxu0 %v1748
    %1797 = vmatpush1.bf16.msra.mxu0 %v1747
    %1798 = vmatprep.subr.bf16.mxu0 %v1752
    %1799 = vmatpush1.bf16.msra.mxu0 %v1751
    %1800 = vmatprep.subr.bf16.mxu0 %v1756
    %1801 = vmatpush1.bf16.msra.mxu0 %v1755
    %1802 = vmatprep.subr.bf16.mxu0 %v1760
    %1803 = vmatpush1.bf16.msra.mxu0 %v1759
    %1804 = vmatprep.subr.bf16.mxu0 %v1764
    %1805 = vmatpush1.bf16.msra.mxu0 %v1763
    %1806 = vmatprep.subr.bf16.mxu0 0
    %1807 = vmatpush1.bf16.msra.mxu0 0
    %1808 = vmatprep.subr.bf16.mxu0 0
    %1809 = vmatpush1.bf16.msra.mxu0 0
    %1810 = vmatprep.subr.bf16.mxu0 0
    %1811 = vmatpush1.bf16.msra.mxu0 0
    %1812 = vmatprep.subr.bf16.mxu0 0
    %1813 = vmatpush1.bf16.msra.mxu0 0
    %1814 = vmatprep.subr.bf16.mxu0 0
    %1815 = vmatpush1.bf16.msra.mxu0 0
    %1816 = vmatprep.subr.bf16.mxu0 0
    %1817 = vmatpush1.bf16.msra.mxu0 0
    %1818 = vmatprep.subr.bf16.mxu0 0
    %1819 = vmatpush1.bf16.msra.mxu0 0
    %1820 = vmatprep.subr.bf16.mxu0 0
    %1821 = vmatpush1.bf16.msra.mxu0 0
    %1822 = vmatprep.mubr.bf16.mxu0 0
    %1823 = vmatmul.mubr.bf16.gmra.mrb[0].mxu0 %v1734
    %v1824 = vpop.f32.mrb[0].mxu0
    %v1825 = vadd.f32 %v1773, %v1824
    %v1826 = vpop.f32.mrb[0].mxu0
    %v1827 = vadd.f32 %v1777, %v1826
    %v1828 = vpop.f32.mrb[0].mxu0
    %v1829 = vadd.f32 %v1773, %v1828
    %v1830 = vpop.f32.mrb[0].mxu0
    %v1831 = vadd.f32 %v1777, %v1830
    %1832 = vdwg.mxu0
    %1833 = vmatprep.subr.bf16.mxu0 %v1738
    %1834 = vmatpush1.bf16.msra.mxu0 %v1737
    %1835 = vmatprep.subr.bf16.mxu0 %v1742
    %1836 = vmatpush1.bf16.msra.mxu0 %v1741
    %1837 = vmatprep.subr.bf16.mxu0 %v1746
    %1838 = vmatpush1.bf16.msra.mxu0 %v1745
    %1839 = vmatprep.subr.bf16.mxu0 %v1750
    %1840 = vmatpush1.bf16.msra.mxu0 %v1749
    %1841 = vmatprep.subr.bf16.mxu0 %v1754
    %1842 = vmatpush1.bf16.msra.mxu0 %v1753
    %1843 = vmatprep.subr.bf16.mxu0 %v1758
    %1844 = vmatpush1.bf16.msra.mxu0 %v1757
    %1845 = vmatprep.subr.bf16.mxu0 %v1762
    %1846 = vmatpush1.bf16.msra.mxu0 %v1761
    %1847 = vmatprep.subr.bf16.mxu0 %v1766
    %1848 = vmatpush1.bf16.msra.mxu0 %v1765
    %1849 = vmatprep.subr.bf16.mxu0 0
    %1850 = vmatpush1.bf16.msra.mxu0 0
    %1851 = vmatprep.subr.bf16.mxu0 0
    %1852 = vmatpush1.bf16.msra.mxu0 0
    %1853 = vmatprep.subr.bf16.mxu0 0
    %1854 = vmatpush1.bf16.msra.mxu0 0
    %1855 = vmatprep.subr.bf16.mxu0 0
    %1856 = vmatpush1.bf16.msra.mxu0 0
    %1857 = vmatprep.subr.bf16.mxu0 0
    %1858 = vmatpush1.bf16.msra.mxu0 0
    %1859 = vmatprep.subr.bf16.mxu0 0
    %1860 = vmatpush1.bf16.msra.mxu0 0
    %1861 = vmatprep.subr.bf16.mxu0 0
    %1862 = vmatpush1.bf16.msra.mxu0 0
    %1863 = vmatprep.subr.bf16.mxu0 0
    %1864 = vmatpush1.bf16.msra.mxu0 0
    %1865 = vmatprep.mubr.bf16.mxu0 0
    %1866 = vmatmul.mubr.bf16.gmra.mrb[0].mxu0 %v1734
    %v1867 = vpop.f32.mrb[0].mxu0
    %v1868 = vadd.f32 %v1781, %v1867
    %v1869 = vpop.f32.mrb[0].mxu0
    %v1870 = vadd.f32 %v1785, %v1869
    %v1871 = vpop.f32.mrb[0].mxu0
    %v1872 = vadd.f32 %v1781, %v1871
    %v1873 = vpop.f32.mrb[0].mxu0
    %v1874 = vadd.f32 %v1785, %v1873
    %1875 = vdwg.mxu0
    %v1876 = vmul.f32 %v1825, 0.5
    %v1877 = vmul.f32 %v1827, 0.5
    %v1878 = vmul.f32 %v1868, 0.5
    %v1879 = vmul.f32 %v1870, 0.5
    %v1880 = vmul.f32 %v1829, 0.5
    %v1881 = vmul.f32 %v1831, 0.5
    %v1882 = vmul.f32 %v1872, 0.5
    %v1883 = vmul.f32 %v1874, 0.5
    %v1884 = vmul.f32 %v1825, 0.044715
    %v1885 = vmul.f32 %v1827, 0.044715
    %v1886 = vmul.f32 %v1868, 0.044715
    %v1887 = vmul.f32 %v1870, 0.044715
    %v1888 = vmul.f32 %v1829, 0.044715
    %v1889 = vmul.f32 %v1831, 0.044715
    %v1890 = vmul.f32 %v1872, 0.044715
    %v1891 = vmul.f32 %v1874, 0.044715
    %v1892 = vmul.f32 %v1884, %v1825
    %v1893 = vmul.f32 %v1885, %v1827
    %v1894 = vmul.f32 %v1886, %v1868
    %v1895 = vmul.f32 %v1887, %v1870
    %v1896 = vmul.f32 %v1888, %v1829
    %v1897 = vmul.f32 %v1889, %v1831
    %v1898 = vmul.f32 %v1890, %v1872
    %v1899 = vmul.f32 %v1891, %v1874
    %v1900 = vmul.f32 %v1892, %v1825
    %v1901 = vmul.f32 %v1893, %v1827
    %v1902 = vmul.f32 %v1894, %v1868
    %v1903 = vmul.f32 %v1895, %v1870
    %v1904 = vmul.f32 %v1896, %v1829
    %v1905 = vmul.f32 %v1897, %v1831
    %v1906 = vmul.f32 %v1898, %v1872
    %v1907 = vmul.f32 %v1899, %v1874
    %v1908 = vadd.f32 %v1825, %v1900
    %v1909 = vadd.f32 %v1827, %v1901
    %v1910 = vadd.f32 %v1868, %v1902
    %v1911 = vadd.f32 %v1870, %v1903
    %v1912 = vadd.f32 %v1829, %v1904
    %v1913 = vadd.f32 %v1831, %v1905
    %v1914 = vadd.f32 %v1872, %v1906
    %v1915 = vadd.f32 %v1874, %v1907
    %v1916 = vmul.f32 %v1908, 0.7978846
    %v1917 = vmul.f32 %v1909, 0.7978846
    %v1918 = vmul.f32 %v1910, 0.7978846
    %v1919 = vmul.f32 %v1911, 0.7978846
    %v1920 = vmul.f32 %v1912, 0.7978846
    %v1921 = vmul.f32 %v1913, 0.7978846
    %v1922 = vmul.f32 %v1914, 0.7978846
    %v1923 = vmul.f32 %v1915, 0.7978846
    %v1924 = vtanh.pop %v1916
    %v1925 = vtanh.pop %v1917
    %v1926 = vtanh.pop %v1918
    %v1927 = vtanh.pop %v1919
    %v1928 = vtanh.pop %v1920
    %v1929 = vtanh.pop %v1921
    %v1930 = vtanh.pop %v1922
    %v1931 = vtanh.pop %v1923
    %v1932 = vadd.f32 %v1924, 1.0
    %v1933 = vadd.f32 %v1925, 1.0
    %v1934 = vadd.f32 %v1926, 1.0
    %v1935 = vadd.f32 %v1927, 1.0
    %v1936 = vadd.f32 %v1928, 1.0
    %v1937 = vadd.f32 %v1929, 1.0
    %v1938 = vadd.f32 %v1930, 1.0
    %v1939 = vadd.f32 %v1931, 1.0
    %v1940 = vmul.f32 %v1876, %v1932
    %v1941 = vmul.f32 %v1877, %v1933
    %v1942 = vmul.f32 %v1878, %v1934
    %v1943 = vmul.f32 %v1879, %v1935
    %v1944 = vmul.f32 %v1880, %v1936
    %v1945 = vmul.f32 %v1881, %v1937
    %v1946 = vmul.f32 %v1882, %v1938
    %v1947 = vmul.f32 %v1883, %v1939
    %s1948 = scalar_lea.vmem [#allocation7], 512
    %v1949 = vld [vmem:[%s1948] sm:$0xff]
    %v1950 = vld [vmem:[%s1948 + $0x8] sm:$0xff]
    %v1951 = vld [vmem:[%s1948 + $0x10] sm:$0xff]
    %v1952 = vld [vmem:[%s1948 + $0x18] sm:$0xff]
    %v1953 = vld [vmem:[%s1948 + $0x20] sm:$0xff]
    %v1954 = vld [vmem:[%s1948 + $0x28] sm:$0xff]
    %v1955 = vld [vmem:[%s1948 + $0x30] sm:$0xff]
    %v1956 = vld [vmem:[%s1948 + $0x38] sm:$0xff]
    %v1957 = vld [vmem:[%s1948 + $0x40] sm:$0xff]
    %v1958 = vld [vmem:[%s1948 + $0x48] sm:$0xff]
    %v1959 = vld [vmem:[%s1948 + $0x50] sm:$0xff]
    %v1960 = vld [vmem:[%s1948 + $0x58] sm:$0xff]
    %v1961 = vld [vmem:[%s1948 + $0x60] sm:$0xff]
    %v1962 = vld [vmem:[%s1948 + $0x68] sm:$0xff]
    %v1963 = vld [vmem:[%s1948 + $0x70] sm:$0xff]
    %v1964 = vld [vmem:[%s1948 + $0x78] sm:$0xff]
    %v1965 = vld [vmem:[%s1948 + $0x80] sm:$0xff]
    %v1966 = vld [vmem:[%s1948 + $0x88] sm:$0xff]
    %v1967 = vld [vmem:[%s1948 + $0x90] sm:$0xff]
    %v1968 = vld [vmem:[%s1948 + $0x98] sm:$0xff]
    %v1969 = vld [vmem:[%s1948 + $0xa0] sm:$0xff]
    %v1970 = vld [vmem:[%s1948 + $0xa8] sm:$0xff]
    %v1971 = vld [vmem:[%s1948 + $0xb0] sm:$0xff]
    %v1972 = vld [vmem:[%s1948 + $0xb8] sm:$0xff]
    %v1973 = vld [vmem:[%s1948 + $0xc0] sm:$0xff]
    %v1974 = vld [vmem:[%s1948 + $0xc8] sm:$0xff]
    %v1975 = vld [vmem:[%s1948 + $0xd0] sm:$0xff]
    %v1976 = vld [vmem:[%s1948 + $0xd8] sm:$0xff]
    %v1977 = vld [vmem:[%s1948 + $0xe0] sm:$0xff]
    %v1978 = vld [vmem:[%s1948 + $0xe8] sm:$0xff]
    %v1979 = vld [vmem:[%s1948 + $0xf0] sm:$0xff]
    %v1980 = vld [vmem:[%s1948 + $0xf8] sm:$0xff]
    %v1981 = vld [vmem:[%s1948 + $0x100] sm:$0xff]
    %v1982 = vld [vmem:[%s1948 + $0x108] sm:$0xff]
    %v1983 = vld [vmem:[%s1948 + $0x110] sm:$0xff]
    %v1984 = vld [vmem:[%s1948 + $0x118] sm:$0xff]
    %v1985 = vld [vmem:[%s1948 + $0x120] sm:$0xff]
    %v1986 = vld [vmem:[%s1948 + $0x128] sm:$0xff]
    %v1987 = vld [vmem:[%s1948 + $0x130] sm:$0xff]
    %v1988 = vld [vmem:[%s1948 + $0x138] sm:$0xff]
    %v1989 = vld [vmem:[%s1948 + $0x140] sm:$0xff]
    %v1990 = vld [vmem:[%s1948 + $0x148] sm:$0xff]
    %v1991 = vld [vmem:[%s1948 + $0x150] sm:$0xff]
    %v1992 = vld [vmem:[%s1948 + $0x158] sm:$0xff]
    %v1993 = vld [vmem:[%s1948 + $0x160] sm:$0xff]
    %v1994 = vld [vmem:[%s1948 + $0x168] sm:$0xff]
    %v1995 = vld [vmem:[%s1948 + $0x170] sm:$0xff]
    %v1996 = vld [vmem:[%s1948 + $0x178] sm:$0xff]
    %v1997 = vld [vmem:[%s1948 + $0x180] sm:$0xff]
    %v1998 = vld [vmem:[%s1948 + $0x188] sm:$0xff]
    %v1999 = vld [vmem:[%s1948 + $0x190] sm:$0xff]
    %v2000 = vld [vmem:[%s1948 + $0x198] sm:$0xff]
    %v2001 = vld [vmem:[%s1948 + $0x1a0] sm:$0xff]
    %v2002 = vld [vmem:[%s1948 + $0x1a8] sm:$0xff]
    %v2003 = vld [vmem:[%s1948 + $0x1b0] sm:$0xff]
    %v2004 = vld [vmem:[%s1948 + $0x1b8] sm:$0xff]
    %v2005 = vld [vmem:[%s1948 + $0x1c0] sm:$0xff]
    %v2006 = vld [vmem:[%s1948 + $0x1c8] sm:$0xff]
    %v2007 = vld [vmem:[%s1948 + $0x1d0] sm:$0xff]
    %v2008 = vld [vmem:[%s1948 + $0x1d8] sm:$0xff]
    %v2009 = vld [vmem:[%s1948 + $0x1e0] sm:$0xff]
    %v2010 = vld [vmem:[%s1948 + $0x1e8] sm:$0xff]
    %v2011 = vld [vmem:[%s1948 + $0x1f0] sm:$0xff]
    %v2012 = vld [vmem:[%s1948 + $0x1f8] sm:$0xff]
    %v2013 = vpack.c.bf16 %v1944, %v1940
    %v2014 = vpack.c.bf16 %v1945, %v1941
    %v2015 = vpack.c.bf16 %v1946, %v1942
    %v2016 = vpack.c.bf16 %v1947, %v1943
    %v2017 = vpack.c.bf16 %v1950, %v1949
    %v2018 = vpack.c.bf16 %v1952, %v1951
    %v2019 = vpack.c.bf16 %v1954, %v1953
    %v2020 = vpack.c.bf16 %v1956, %v1955
    %v2021 = vpack.c.bf16 %v1958, %v1957
    %v2022 = vpack.c.bf16 %v1960, %v1959
    %v2023 = vpack.c.bf16 %v1962, %v1961
    %v2024 = vpack.c.bf16 %v1964, %v1963
    %v2025 = vpack.c.bf16 %v1966, %v1965
    %v2026 = vpack.c.bf16 %v1968, %v1967
    %v2027 = vpack.c.bf16 %v1970, %v1969
    %v2028 = vpack.c.bf16 %v1972, %v1971
    %v2029 = vpack.c.bf16 %v1974, %v1973
    %v2030 = vpack.c.bf16 %v1976, %v1975
    %v2031 = vpack.c.bf16 %v1978, %v1977
    %v2032 = vpack.c.bf16 %v1980, %v1979
    %v2033 = vpack.c.bf16 %v1982, %v1981
    %v2034 = vpack.c.bf16 %v1984, %v1983
    %v2035 = vpack.c.bf16 %v1986, %v1985
    %v2036 = vpack.c.bf16 %v1988, %v1987
    %v2037 = vpack.c.bf16 %v1990, %v1989
    %v2038 = vpack.c.bf16 %v1992, %v1991
    %v2039 = vpack.c.bf16 %v1994, %v1993
    %v2040 = vpack.c.bf16 %v1996, %v1995
    %v2041 = vpack.c.bf16 %v1998, %v1997
    %v2042 = vpack.c.bf16 %v2000, %v1999
    %v2043 = vpack.c.bf16 %v2002, %v2001
    %v2044 = vpack.c.bf16 %v2004, %v2003
    %v2045 = vpack.c.bf16 %v2006, %v2005
    %v2046 = vpack.c.bf16 %v2008, %v2007
    %v2047 = vpack.c.bf16 %v2010, %v2009
    %v2048 = vpack.c.bf16 %v2012, %v2011
    %s2049 = scalar_lea.vmem %s13, 1
    %v2050 = vld [vmem:[%s2049] sm:$0x1]
    %v2052 = vlaneseq
    %v2053 = vshrl.u32 %v2052, 7
    %v2054 = vsub.s32 0, %v2053
    %v2055 = vrot.slane %v2050, %v2054
    %2057 = vmatprep.subr.bf16.mxu0 0
    %2058 = vmatpush1.bf16.msra.mxu0 %v2017
    %2059 = vmatprep.subr.bf16.mxu0 0
    %2060 = vmatpush1.bf16.msra.mxu0 %v2018
    %2061 = vmatprep.subr.bf16.mxu0 0
    %2062 = vmatpush1.bf16.msra.mxu0 %v2019
    %2063 = vmatprep.subr.bf16.mxu0 0
    %2064 = vmatpush1.bf16.msra.mxu0 %v2020
    %2065 = vmatprep.subr.bf16.mxu0 0
    %2066 = vmatpush1.bf16.msra.mxu0 %v2021
    %2067 = vmatprep.subr.bf16.mxu0 0
    %2068 = vmatpush1.bf16.msra.mxu0 %v2022
    %2069 = vmatprep.subr.bf16.mxu0 0
    %2070 = vmatpush1.bf16.msra.mxu0 %v2023
    %2071 = vmatprep.subr.bf16.mxu0 0
    %2072 = vmatpush1.bf16.msra.mxu0 %v2024
    %2073 = vmatprep.subr.bf16.mxu0 0
    %2074 = vmatpush1.bf16.msra.mxu0 %v2025
    %2075 = vmatprep.subr.bf16.mxu0 0
    %2076 = vmatpush1.bf16.msra.mxu0 %v2026
    %2077 = vmatprep.subr.bf16.mxu0 0
    %2078 = vmatpush1.bf16.msra.mxu0 %v2027
    %2079 = vmatprep.subr.bf16.mxu0 0
    %2080 = vmatpush1.bf16.msra.mxu0 %v2028
    %2081 = vmatprep.subr.bf16.mxu0 0
    %2082 = vmatpush1.bf16.msra.mxu0 %v2029
    %2083 = vmatprep.subr.bf16.mxu0 0
    %2084 = vmatpush1.bf16.msra.mxu0 %v2030
    %2085 = vmatprep.subr.bf16.mxu0 0
    %2086 = vmatpush1.bf16.msra.mxu0 %v2031
    %2087 = vmatprep.subr.bf16.mxu0 0
    %2088 = vmatpush1.bf16.msra.mxu0 %v2032
    %2089 = vmatprep.mubr.bf16.mxu0 %v2014
    %2090 = vmatmul.mubr.bf16.gmra.mrb[0].mxu0 %v2013
    %v2091 = vpop.f32.mrb[0].mxu0
    %v2092 = vadd.f32 %v2055, %v2091
    %v2093 = vpop.f32.mrb[0].mxu0
    %v2094 = vpop.f32.mrb[0].mxu0
    %v2095 = vadd.f32 %v2055, %v2094
    %v2096 = vpop.f32.mrb[0].mxu0
    %2097 = vdwg.mxu0
    %2098 = vmatprep.subr.bf16.mxu0 0
    %2099 = vmatpush1.bf16.msra.mxu0 %v2033
    %2100 = vmatprep.subr.bf16.mxu0 0
    %2101 = vmatpush1.bf16.msra.mxu0 %v2034
    %2102 = vmatprep.subr.bf16.mxu0 0
    %2103 = vmatpush1.bf16.msra.mxu0 %v2035
    %2104 = vmatprep.subr.bf16.mxu0 0
    %2105 = vmatpush1.bf16.msra.mxu0 %v2036
    %2106 = vmatprep.subr.bf16.mxu0 0
    %2107 = vmatpush1.bf16.msra.mxu0 %v2037
    %2108 = vmatprep.subr.bf16.mxu0 0
    %2109 = vmatpush1.bf16.msra.mxu0 %v2038
    %2110 = vmatprep.subr.bf16.mxu0 0
    %2111 = vmatpush1.bf16.msra.mxu0 %v2039
    %2112 = vmatprep.subr.bf16.mxu0 0
    %2113 = vmatpush1.bf16.msra.mxu0 %v2040
    %2114 = vmatprep.subr.bf16.mxu0 0
    %2115 = vmatpush1.bf16.msra.mxu0 %v2041
    %2116 = vmatprep.subr.bf16.mxu0 0
    %2117 = vmatpush1.bf16.msra.mxu0 %v2042
    %2118 = vmatprep.subr.bf16.mxu0 0
    %2119 = vmatpush1.bf16.msra.mxu0 %v2043
    %2120 = vmatprep.subr.bf16.mxu0 0
    %2121 = vmatpush1.bf16.msra.mxu0 %v2044
    %2122 = vmatprep.subr.bf16.mxu0 0
    %2123 = vmatpush1.bf16.msra.mxu0 %v2045
    %2124 = vmatprep.subr.bf16.mxu0 0
    %2125 = vmatpush1.bf16.msra.mxu0 %v2046
    %2126 = vmatprep.subr.bf16.mxu0 0
    %2127 = vmatpush1.bf16.msra.mxu0 %v2047
    %2128 = vmatprep.subr.bf16.mxu0 0
    %2129 = vmatpush1.bf16.msra.mxu0 %v2048
    %2130 = vmatprep.mubr.bf16.mxu0 %v2016
    %2131 = vmatmul.mubr.bf16.gmra.mrb[0].mxu0 %v2015
    %v2132 = vpop.f32.mrb[0].mxu0
    %v2133 = vadd.f32 %v2092, %v2132
    %v2134 = vpop.f32.mrb[0].mxu0
    %v2135 = vpop.f32.mrb[0].mxu0
    %v2136 = vadd.f32 %v2095, %v2135
    %v2137 = vpop.f32.mrb[0].mxu0
    %2138 = vdwg.mxu0
    %v2139 = vadd.f32 %v2133, %v1667
    %v2140 = vadd.f32 %v2136, %v1668
    %s2141 = scalar_lea.vmem %s14, 1
    %v2142 = vld [vmem:[%s2141] sm:$0x1]
    %s2143 = scalar_lea.vmem %s15, 1
    %v2144 = vld [vmem:[%s2143] sm:$0x1]
    %2145 = vadd.xlane.f32.xlu0 %v2139
    %v2146 = vpop.xlane.xlu0 %2145
    %2147 = vadd.xlane.f32.xlu0 %v2140
    %v2148 = vpop.xlane.xlu0 %2147
    %v2149 = vmul.f32 %v2146, %v116
    %v2150 = vmul.f32 %v2148, %v116
    %v2151 = vsub.f32 %v2139, %v2149
    %v2152 = vsub.f32 %v2140, %v2150
    %v2153 = vmul.f32 %v2151, %v2151
    %v2154 = vmul.f32 %v2152, %v2152
    %2155 = vadd.xlane.f32.xlu0 %v2153
    %v2156 = vpop.xlane.xlu0 %2155
    %2157 = vadd.xlane.f32.xlu0 %v2154
    %v2158 = vpop.xlane.xlu0 %2157
    %v2159 = vmul.f32 %v2156, %v116
    %v2160 = vmul.f32 %v2158, %v116
    %v2161 = vadd.f32 %v2159, 1e-12
    %v2162 = vadd.f32 %v2160, 1e-12
    %v2163 = vrsqrt.pop %v2161
    %v2164 = vrsqrt.pop %v2162
    %v2165 = vmul.f32 %v2151, %v2163
    %v2166 = vmul.f32 %v2152, %v2164
    %v2168 = vlaneseq
    %v2169 = vshrl.u32 %v2168, 7
    %v2170 = vsub.s32 0, %v2169
    %v2171 = vrot.slane %v2142, %v2170
    %v2173 = vmul.f32 %v2165, %v2171
    %v2174 = vmul.f32 %v2166, %v2171
    %v2176 = vlaneseq
    %v2177 = vshrl.u32 %v2176, 7
    %v2178 = vsub.s32 0, %v2177
    %v2179 = vrot.slane %v2144, %v2178
    %v2181 = vadd.f32 %v2173, %v2179
    %v2182 = vadd.f32 %v2174, %v2179
    %v2184 = vrot.slane %v2182, 7
    %vm2186 = vcmask 1040384
    %v2187 = vsel %vm2186, %v2181, %v2184
    %v2188 = vld [vmem:[%s16] sm:$0xff]
    %v2189 = vld [vmem:[%s16 + $0x8] sm:$0xff]
    %v2190 = vld [vmem:[%s16 + $0x10] sm:$0xff]
    %v2191 = vld [vmem:[%s16 + $0x18] sm:$0xff]
    %v2192 = vld [vmem:[%s16 + $0x20] sm:$0xff]
    %v2193 = vld [vmem:[%s16 + $0x28] sm:$0xff]
    %v2194 = vld [vmem:[%s16 + $0x30] sm:$0xff]
    %v2195 = vld [vmem:[%s16 + $0x38] sm:$0xff]
    %v2196 = vld [vmem:[%s16 + $0x40] sm:$0xff]
    %v2197 = vld [vmem:[%s16 + $0x48] sm:$0xff]
    %v2198 = vld [vmem:[%s16 + $0x50] sm:$0xff]
    %v2199 = vld [vmem:[%s16 + $0x58] sm:$0xff]
    %v2200 = vld [vmem:[%s16 + $0x60] sm:$0xff]
    %v2201 = vld [vmem:[%s16 + $0x68] sm:$0xff]
    %v2202 = vld [vmem:[%s16 + $0x70] sm:$0xff]
    %v2203 = vld [vmem:[%s16 + $0x78] sm:$0xff]
    %v2204 = vpack.c.bf16 %v2187, %v2187
    %v2205 = vpack.c.bf16 %v2189, %v2188
    %v2206 = vpack.c.bf16 %v2191, %v2190
    %v2207 = vpack.c.bf16 %v2193, %v2192
    %v2208 = vpack.c.bf16 %v2195, %v2194
    %v2209 = vpack.c.bf16 %v2197, %v2196
    %v2210 = vpack.c.bf16 %v2199, %v2198
    %v2211 = vpack.c.bf16 %v2201, %v2200
    %v2212 = vpack.c.bf16 %v2203, %v2202
    %v2213 = vld [vmem:[%s17] sm:$0x1]
    %v2215 = vlaneseq
    %v2216 = vshrl.u32 %v2215, 7
    %v2217 = vsub.s32 0, %v2216
    %v2218 = vrot.slane %v2213, %v2217
    %2220 = vmatprep.subr.bf16.mxu0 0
    %2221 = vmatpush1.bf16.msra.mxu0 %v2205
    %2222 = vmatprep.subr.bf16.mxu0 0
    %2223 = vmatpush1.bf16.msra.mxu0 %v2206
    %2224 = vmatprep.subr.bf16.mxu0 0
    %2225 = vmatpush1.bf16.msra.mxu0 %v2207
    %2226 = vmatprep.subr.bf16.mxu0 0
    %2227 = vmatpush1.bf16.msra.mxu0 %v2208
    %2228 = vmatprep.subr.bf16.mxu0 0
    %2229 = vmatpush1.bf16.msra.mxu0 %v2209
    %2230 = vmatprep.subr.bf16.mxu0 0
    %2231 = vmatpush1.bf16.msra.mxu0 %v2210
    %2232 = vmatprep.subr.bf16.mxu0 0
    %2233 = vmatpush1.bf16.msra.mxu0 %v2211
    %2234 = vmatprep.subr.bf16.mxu0 0
    %2235 = vmatpush1.bf16.msra.mxu0 %v2212
    %2236 = vmatprep.subr.bf16.mxu0 0
    %2237 = vmatpush1.bf16.msra.mxu0 0
    %2238 = vmatprep.subr.bf16.mxu0 0
    %2239 = vmatpush1.bf16.msra.mxu0 0
    %2240 = vmatprep.subr.bf16.mxu0 0
    %2241 = vmatpush1.bf16.msra.mxu0 0
    %2242 = vmatprep.subr.bf16.mxu0 0
    %2243 = vmatpush1.bf16.msra.mxu0 0
    %2244 = vmatprep.subr.bf16.mxu0 0
    %2245 = vmatpush1.bf16.msra.mxu0 0
    %2246 = vmatprep.subr.bf16.mxu0 0
    %2247 = vmatpush1.bf16.msra.mxu0 0
    %2248 = vmatprep.subr.bf16.mxu0 0
    %2249 = vmatpush1.bf16.msra.mxu0 0
    %2250 = vmatprep.subr.bf16.mxu0 0
    %2251 = vmatpush1.bf16.msra.mxu0 0
    %2252 = vmatprep.mubr.bf16.mxu0 0
    %2253 = vmatmul.mubr.bf16.gmra.mrb[0].mxu0 %v2204
    %v2254 = vpop.f32.mrb[0].mxu0
    %v2255 = vadd.f32 %v2218, %v2254
    %v2256 = vpop.f32.mrb[0].mxu0
    %v2257 = vpop.f32.mrb[0].mxu0
    %v2258 = vpop.f32.mrb[0].mxu0
    %2259 = vdwg.mxu0
    %v2260 = vtanh.pop %v2255
    %v2261 = vld [vmem:[%s18] sm:$0xff]
    %v2262 = vld [vmem:[%s18 + $0x8] sm:$0xff]
    %v2263 = vld [vmem:[%s18 + $0x10] sm:$0xff]
    %v2264 = vld [vmem:[%s18 + $0x18] sm:$0xff]
    %v2265 = vld [vmem:[%s18 + $0x20] sm:$0xff]
    %v2266 = vld [vmem:[%s18 + $0x28] sm:$0xff]
    %v2267 = vld [vmem:[%s18 + $0x30] sm:$0xff]
    %v2268 = vld [vmem:[%s18 + $0x38] sm:$0xff]
    %v2269 = vld [vmem:[%s18 + $0x40] sm:$0xff]
    %v2270 = vld [vmem:[%s18 + $0x48] sm:$0xff]
    %v2271 = vld [vmem:[%s18 + $0x50] sm:$0xff]
    %v2272 = vld [vmem:[%s18 + $0x58] sm:$0xff]
    %v2273 = vld [vmem:[%s18 + $0x60] sm:$0xff]
    %v2274 = vld [vmem:[%s18 + $0x68] sm:$0xff]
    %v2275 = vld [vmem:[%s18 + $0x70] sm:$0xff]
    %v2276 = vld [vmem:[%s18 + $0x78] sm:$0xff]
    %v2277 = vpack.c.bf16 %v2260, %v2260
    %v2278 = vpack.c.bf16 %v2262, %v2261
    %v2279 = vpack.c.bf16 %v2264, %v2263
    %v2280 = vpack.c.bf16 %v2266, %v2265
    %v2281 = vpack.c.bf16 %v2268, %v2267
    %v2282 = vpack.c.bf16 %v2270, %v2269
    %v2283 = vpack.c.bf16 %v2272, %v2271
    %v2284 = vpack.c.bf16 %v2274, %v2273
    %v2285 = vpack.c.bf16 %v2276, %v2275
    %v2286 = vld [vmem:[%s19] sm:$0x1]
    %v2288 = vlaneseq
    %v2289 = vshrl.u32 %v2288, 7
    %v2290 = vsub.s32 0, %v2289
    %v2291 = vrot.slane %v2286, %v2290
    %2293 = vmatprep.subr.bf16.mxu0 0
    %2294 = vmatpush1.bf16.msra.mxu0 %v2278
    %2295 = vmatprep.subr.bf16.mxu0 0
    %2296 = vmatpush1.bf16.msra.mxu0 %v2279
    %2297 = vmatprep.subr.bf16.mxu0 0
    %2298 = vmatpush1.bf16.msra.mxu0 %v2280
    %2299 = vmatprep.subr.bf16.mxu0 0
    %2300 = vmatpush1.bf16.msra.mxu0 %v2281
    %2301 = vmatprep.subr.bf16.mxu0 0
    %2302 = vmatpush1.bf16.msra.mxu0 %v2282
    %2303 = vmatprep.subr.bf16.mxu0 0
    %2304 = vmatpush1.bf16.msra.mxu0 %v2283
    %2305 = vmatprep.subr.bf16.mxu0 0
    %2306 = vmatpush1.bf16.msra.mxu0 %v2284
    %2307 = vmatprep.subr.bf16.mxu0 0
    %2308 = vmatpush1.bf16.msra.mxu0 %v2285
    %2309 = vmatprep.subr.bf16.mxu0 0
    %2310 = vmatpush1.bf16.msra.mxu0 0
    %2311 = vmatprep.subr.bf16.mxu0 0
    %2312 = vmatpush1.bf16.msra.mxu0 0
    %2313 = vmatprep.subr.bf16.mxu0 0
    %2314 = vmatpush1.bf16.msra.mxu0 0
    %2315 = vmatprep.subr.bf16.mxu0 0
    %2316 = vmatpush1.bf16.msra.mxu0 0
    %2317 = vmatprep.subr.bf16.mxu0 0
    %2318 = vmatpush1.bf16.msra.mxu0 0
    %2319 = vmatprep.subr.bf16.mxu0 0
    %2320 = vmatpush1.bf16.msra.mxu0 0
    %2321 = vmatprep.subr.bf16.mxu0 0
    %2322 = vmatpush1.bf16.msra.mxu0 0
    %2323 = vmatprep.subr.bf16.mxu0 0
    %2324 = vmatpush1.bf16.msra.mxu0 0
    %2325 = vmatprep.mubr.bf16.mxu0 0
    %2326 = vmatmul.mubr.bf16.gmra.mrb[0].mxu0 %v2277
    %v2327 = vpop.f32.mrb[0].mxu0
    %v2328 = vadd.f32 %v2291, %v2327
    %v2329 = vpop.f32.mrb[0].mxu0
    %v2330 = vpop.f32.mrb[0].mxu0
    %v2331 = vpop.f32.mrb[0].mxu0
    %2332 = vdwg.mxu0
    %vm2333 = vcmask 17408
    %2334 = vst.msk [vmem:[#allocation8] sm:$0x3] %vm2333, %v2328
    // Predicated region
    $region94: #{bert_asc_forward.1} parent=1 // pred_check
      _
    $region95: #{bert_asc_forward.1} parent=1 // pred_check_branch
      %2336 = sbr.rel (0) target = $region97
    $region96: #{bert_asc_forward.1} parent=1 // pred_region
      %s2338 = ssub.s32 32, 32
      %2339 = vsyncadd [#allocation4], %s2338
      %s2341 = sshll.u32 [#allocation8], 4
      %s2342 = int_to_ptr.vmem [resolvable:$true] %s2341
      %2344 = dma.vmem_to_hbm [thread:$0]  %s2342, 32, %s20, [#allocation4]
    $region97: #{bert_asc_forward.1} parent=1 // pred_fallthru
      _
    // Predicated region
    $region98: #{bert_asc_forward.1} parent=1 // pred_check
      _
    $region99: #{bert_asc_forward.1} parent=1 // pred_check_branch
      %2346 = sbr.rel (0) target = $region101
    $region100: #{bert_asc_forward.1} parent=1 // pred_region
      %2347 = dma.done [#allocation4], 32
    $region101: #{bert_asc_forward.1} parent=1 // pred_fallthru
      _
    %2348 = vsyncpa [#allocation3], 1
    %2349 = vsyncpa [#allocation6], 1
    %2350 = vsyncpa [#allocation4], 1

</llo_original>
